<compile_context>
chip_gen: v7x
topology: tpu7x:2x2x1
jax: 0.10.0
libtpu: 0.0.40
codegen_flags: <defaults>
</compile_context>

<pallas_src>
import math
import numpy as np
import jax
import jax.numpy as jnp
from jax.experimental import pallas as pl
from jax.experimental.pallas import tpu as pltpu

# ----------------------------- config ---------------------------------------
STATE_DIM = 16
ACTION_DIM = 8
BATCH = 8
T_DIM = 16          # SinusoidalPosEmb dim used by the MLP time head
HIDDEN = 256
N_TIMESTEPS = 6
MAX_ACTION = 1.0


# -------------------------- diffusion schedule ------------------------------
def vp_beta_schedule(timesteps):
    t = np.arange(1, timesteps + 1, dtype=np.float64)
    T = timesteps
    b_max, b_min = 10.0, 0.1
    alpha = np.exp(-b_min / T - 0.5 * (b_max - b_min) * (2 * t - 1) / T ** 2)
    return (1.0 - alpha).astype(np.float64)


def make_diffusion_consts(n_timesteps):
    betas = vp_beta_schedule(n_timesteps)
    alphas = 1.0 - betas
    ac = np.cumprod(alphas)
    ac_prev = np.concatenate([[1.0], ac[:-1]])
    sqrt_recip_ac = np.sqrt(1.0 / ac)
    sqrt_recipm1_ac = np.sqrt(1.0 / ac - 1.0)
    post_var = betas * (1.0 - ac_prev) / (1.0 - ac)
    post_logvar = np.log(np.clip(post_var, 1e-20, None))
    post_c1 = betas * np.sqrt(ac_prev) / (1.0 - ac)
    post_c2 = (1.0 - ac_prev) * np.sqrt(alphas) / (1.0 - ac)
    return dict(sqrt_recip_ac=sqrt_recip_ac, sqrt_recipm1_ac=sqrt_recipm1_ac,
                post_c1=post_c1, post_c2=post_c2, post_logvar=post_logvar)


def sinusoidal_emb_row(t_scalar, dim):
    half = dim // 2
    scale = math.log(10000.0) / (half - 1)
    freqs = jnp.exp(jnp.arange(half, dtype=jnp.float32) * (-scale))
    arg = jnp.float32(t_scalar) * freqs
    return jnp.concatenate([jnp.sin(arg), jnp.cos(arg)], axis=-1)


# ------------------------------ parameters ----------------------------------
def make_params(key, state_dim, action_dim, t_dim, hidden):
    def lin(key, fan_in, fan_out):
        kw, kb = jax.random.split(key)
        lim = 1.0 / math.sqrt(fan_in)
        w = jax.random.uniform(kw, (fan_in, fan_out), jnp.float32, -lim, lim)
        b = jax.random.uniform(kb, (1, fan_out), jnp.float32, -lim, lim)
        return w, b

    keys = jax.random.split(key, 6)
    tw1, tb1 = lin(keys[0], t_dim, 2 * t_dim)
    tw2, tb2 = lin(keys[1], 2 * t_dim, t_dim)
    # first mid layer acts on concat([x, t_emb, state]); split its weight so
    # the step-invariant parts (t, state) can be handled separately.
    in_dim = action_dim + t_dim + state_dim
    w1, b1 = lin(keys[2], in_dim, hidden)
    w1x, w1t, w1s = (w1[:action_dim], w1[action_dim:action_dim + t_dim],
                     w1[action_dim + t_dim:])
    w2, b2 = lin(keys[3], hidden, hidden)
    w3, b3 = lin(keys[4], hidden, hidden)
    wf, bf = lin(keys[5], hidden, action_dim)
    return dict(tw1=tw1, tb1=tb1, tw2=tw2, tb2=tb2,
                w1x=w1x, w1t=w1t, w1s=w1s, b1=b1,
                w2=w2, b2=b2, w3=w3, b3=b3, wf=wf, bf=bf)


# --------------------- host-side static per-step tables ----------------------
def build_coef_rows(consts, n_timesteps):
    """Per-sampling-step scalars in sampling (reverse-t) order, as Python
    floats so they become compile-time constants in the kernel."""
    rows = []
    for i in reversed(range(n_timesteps)):
        std = 0.0 if i == 0 else float(np.exp(0.5 * consts['post_logvar'][i]))
        rows.append((float(consts['sqrt_recip_ac'][i]),
                     float(consts['sqrt_recipm1_ac'][i]),
                     float(consts['post_c1'][i]),
                     float(consts['post_c2'][i]),
                     std))
    return rows


def build_time_bias(params, n_timesteps, t_dim):
    """time_mlp(SinPosEmb(t)) @ W1t  for every sampling step -> (T, 1, H)."""
    hi = jax.lax.Precision.HIGHEST

    def mish(z):
        return z * jnp.tanh(jnp.log1p(jnp.exp(z)))

    embs = jnp.stack([sinusoidal_emb_row(float(i), t_dim)
                      for i in reversed(range(n_timesteps))])    # (T, t_dim)
    t = mish(jnp.dot(embs, params['tw1'], precision=hi) + params['tb1'])
    t = jnp.dot(t, params['tw2'], precision=hi) + params['tb2']
    b1t = jnp.dot(t, params['w1t'], precision=hi)                # (T, H)
    return b1t.reshape(n_timesteps, 1, -1)


# ------------------------------ Pallas kernel --------------------------------
def build_kernel(coef_rows, n_timesteps, action_dim, max_action):
    def kernel(state_ref, x0_ref, noise_ref, b1t_ref,
               w1x_ref, w1s_ref, b1_ref,
               w2_ref, b2_ref, w3_ref, b3_ref, wf_ref, bf_ref,
               out_ref):
        def mish(z):
            # z * tanh(softplus(z)) == z * (1 - 2 / ((1 + e^z)^2 + 1))
            e = jnp.exp(z)
            u = (1.0 + e) * (1.0 + e)
            return z * (1.0 - 2.0 * pl.reciprocal(u + 1.0, approx=True))

        # step-invariant: state @ W1s + b1, computed once inside the kernel.
        base = (jnp.dot(state_ref[...].astype(jnp.bfloat16), w1s_ref[...],
                        preferred_element_type=jnp.float32) + b1_ref[...])

        # hoist w1x rows once (used by the VPU MACs every step)
        w1x = w1x_ref[...]                                        # (A, H) f32
        w1x_rows = [w1x[k:k + 1, :] for k in range(action_dim)]   # (1, H) each

        x = x0_ref[...]                                           # (B, A) f32
        for step in range(n_timesteps):        # fully unrolled static loop
            c_recip, c_recipm1, c1, c2, std = coef_rows[step]

            # first layer: base + time-head bias + x @ W1x, where the tiny
            # (8,8)@(8,256) dot is replaced by 8 VPU broadcast multiply-adds.
            h = base + b1t_ref[step]                              # (B, H)
            for k in range(action_dim):
                h = h + x[:, k:k + 1] * w1x_rows[k]
            h = mish(h)
            h = mish(jnp.dot(h.astype(jnp.bfloat16), w2_ref[...],
                             preferred_element_type=jnp.float32) + b2_ref[...])
            h = mish(jnp.dot(h.astype(jnp.bfloat16), w3_ref[...],
                             preferred_element_type=jnp.float32) + b3_ref[...])
            eps = (jnp.dot(h.astype(jnp.bfloat16), wf_ref[...],
                           preferred_element_type=jnp.float32) + bf_ref[...])

            # DDPM reverse step with compile-time scalar coefficients
            x_recon = jnp.clip(c_recip * x - c_recipm1 * eps,
                               -max_action, max_action)
            x = c1 * x_recon + c2 * x
            if std != 0.0:                    # last step (t==0) adds no noise
                x = x + std * noise_ref[step]

        out_ref[...] = jnp.clip(x, -max_action, max_action)

    return kernel


def diffusion_sample_pallas(state, x_init, noises, b1t,
                            w1x, w1s_bf, b1, w2_bf, b2, w3_bf, b3, wf_bf, bfb,
                            coef_rows, max_action):
    B, A = x_init.shape
    T = noises.shape[0]
    kernel = build_kernel(coef_rows, T, A, max_action)
    vmem = pl.BlockSpec(memory_space=pltpu.MemorySpace.VMEM)   # whole array, resident
    return pl.pallas_call(
        kernel,
        out_shape=jax.ShapeDtypeStruct((B, A), jnp.float32),
        in_specs=[vmem] * 13,
        out_specs=vmem,
    )(state, x_init, noises, b1t, w1x, w1s_bf, b1,
      w2_bf, b2, w3_bf, b3, wf_bf, bfb)


# ------------------- reference 1: matched-precision JAX ----------------------
def diffusion_sample_ref_matched(state, x_init, noises, b1t,
                                 w1x, w1s_bf, b1, w2_bf, b2, w3_bf, b3,
                                 wf_bf, bfb, coef_rows, max_action):
    """Same folded tables / bf16 weights as the kernel, exact tanh Mish."""
    hi = jax.lax.Precision.HIGHEST

    def mish(z):
        return z * jnp.tanh(jnp.log1p(jnp.exp(z)))

    base = (jnp.dot(state.astype(jnp.bfloat16), w1s_bf,
                    preferred_element_type=jnp.float32) + b1)
    x = x_init
    for step, (c_recip, c_recipm1, c1, c2, std) in enumerate(coef_rows):
        h = base + b1t[step] + jnp.dot(x, w1x, precision=hi)
        h = mish(h)
        h = mish(jnp.dot(h.astype(jnp.bfloat16), w2_bf,
                         preferred_element_type=jnp.float32) + b2)
        h = mish(jnp.dot(h.astype(jnp.bfloat16), w3_bf,
                         preferred_element_type=jnp.float32) + b3)
        eps = (jnp.dot(h.astype(jnp.bfloat16), wf_bf,
                       preferred_element_type=jnp.float32) + bfb)
        x_recon = jnp.clip(c_recip * x - c_recipm1 * eps, -max_action, max_action)
        x = c1 * x_recon + c2 * x + std * noises[step]
    return jnp.clip(x, -max_action, max_action)


# --------------- reference 2: exact f32 DiffusionPolicy forward --------------
def diffusion_policy_ref_exact(params, consts, state, x_init, noises,
                               n_timesteps, t_dim, max_action):
    """Full-precision f32 reference mirroring the original PyTorch module:
    per-step time MLP, concat([x, t, state]) first layer, exact Mish."""
    hi = jax.lax.Precision.HIGHEST

    def mish(z):
        return z * jnp.tanh(jnp.log1p(jnp.exp(z)))

    w1_full = jnp.concatenate([params['w1x'], params['w1t'], params['w1s']],
                              axis=0)
    B = x_init.shape[0]
    x = x_init
    for j, i in enumerate(reversed(range(n_timesteps))):
        emb = sinusoidal_emb_row(float(i), t_dim)[None, :]       # (1, t_dim)
        t = mish(jnp.dot(emb, params['tw1'], precision=hi) + params['tb1'])
        t = jnp.dot(t, params['tw2'], precision=hi) + params['tb2']
        t = jnp.broadcast_to(t, (B, t_dim))
        inp = jnp.concatenate([x, t, state], axis=-1)
        h = mish(jnp.dot(inp, w1_full, precision=hi) + params['b1'])
        h = mish(jnp.dot(h, params['w2'], precision=hi) + params['b2'])
        h = mish(jnp.dot(h, params['w3'], precision=hi) + params['b3'])
        eps = jnp.dot(h, params['wf'], precision=hi) + params['bf']
        x_recon = jnp.clip(float(consts['sqrt_recip_ac'][i]) * x
                           - float(consts['sqrt_recipm1_ac'][i]) * eps,
                           -max_action, max_action)
        mean = (float(consts['post_c1'][i]) * x_recon
                + float(consts['post_c2'][i]) * x)
        nz = 0.0 if i == 0 else 1.0
        x = mean + nz * float(np.exp(0.5 * consts['post_logvar'][i])) * noises[j]
    return jnp.clip(x, -max_action, max_action)


# --------------------------------- main ---------------------------------------
if __name__ == "__main__":
    root = jax.random.PRNGKey(0)
    k_param, k_state, k_x0, k_noise = jax.random.split(root, 4)

    params = make_params(k_param, STATE_DIM, ACTION_DIM, T_DIM, HIDDEN)
    consts = make_diffusion_consts(N_TIMESTEPS)

    state = jax.random.normal(k_state, (BATCH, STATE_DIM), jnp.float32)
    x_init = jax.random.normal(k_x0, (BATCH, ACTION_DIM), jnp.float32)
    noises = jax.random.normal(k_noise, (N_TIMESTEPS, BATCH, ACTION_DIM),
                               jnp.float32)        # sampling order

    # static, parameter-only precomputes (once per policy, not per call)
    coef_rows = build_coef_rows(consts, N_TIMESTEPS)
    b1t = build_time_bias(params, N_TIMESTEPS, T_DIM)          # (T, 1, H)

    # bf16 weights, f32 accumulation on the MXU (w1x stays f32: VPU path)
    w1s_bf = params['w1s'].astype(jnp.bfloat16)
    w2_bf = params['w2'].astype(jnp.bfloat16)
    w3_bf = params['w3'].astype(jnp.bfloat16)
    wf_bf = params['wf'].astype(jnp.bfloat16)

    action = diffusion_sample_pallas(
        state, x_init, noises, b1t,
        params['w1x'], w1s_bf, params['b1'],
        w2_bf, params['b2'], w3_bf, params['b3'], wf_bf, params['bf'],
        coef_rows, MAX_ACTION)
    action = jax.block_until_ready(action)

    # (1) tight mechanical check: same folded tables / bf16 weights, exact Mish
    ref_m = diffusion_sample_ref_matched(
        state, x_init, noises, b1t,
        params['w1x'], w1s_bf, params['b1'],
        w2_bf, params['b2'], w3_bf, params['b3'], wf_bf, params['bf'],
        coef_rows, MAX_ACTION)
    np.testing.assert_allclose(np.asarray(action), np.asarray(ref_m),
                               rtol=1e-2, atol=1e-2)

    # (2) semantic check vs a full-precision f32 reference of the ORIGINAL
    #     DiffusionPolicy forward.  Looser tolerance: bf16 hidden weights and
    #     the approx-reciprocal Mish accumulate error over 3 layers x 6 steps.
    ref_e = diffusion_policy_ref_exact(params, consts, state, x_init, noises,
                                       N_TIMESTEPS, T_DIM, MAX_ACTION)
    np.testing.assert_allclose(np.asarray(action), np.asarray(ref_e),
                               rtol=5e-2, atol=5e-2)

    print("KERNEL_OK")
</pallas_src>

<mosaic_0001>
module attributes {stable_mosaic.version = 11 : i64} {
  func.func @kernel(%arg0: memref<8x16xf32, #tpu.memory_space<vmem>>, %arg1: memref<8x8xf32, #tpu.memory_space<vmem>>, %arg2: memref<6x8x8xf32, #tpu.memory_space<vmem>>, %arg3: memref<6x1x256xf32, #tpu.memory_space<vmem>>, %arg4: memref<8x256xf32, #tpu.memory_space<vmem>>, %arg5: memref<16x256xbf16, #tpu.memory_space<vmem>>, %arg6: memref<1x256xf32, #tpu.memory_space<vmem>>, %arg7: memref<256x256xbf16, #tpu.memory_space<vmem>>, %arg8: memref<1x256xf32, #tpu.memory_space<vmem>>, %arg9: memref<256x256xbf16, #tpu.memory_space<vmem>>, %arg10: memref<1x256xf32, #tpu.memory_space<vmem>>, %arg11: memref<256x8xbf16, #tpu.memory_space<vmem>>, %arg12: memref<1x8xf32, #tpu.memory_space<vmem>>, %arg13: memref<8x8xf32, #tpu.memory_space<vmem>>) attributes {dimension_semantics = [], scalar_prefetch = 0 : i64, scratch_operands = 0 : i64, tpu.core_type = #tpu.core_type<tc>} {
    %c0 = arith.constant 0 : index
    %c0_0 = arith.constant 0 : index
    %0 = vector.load %arg0[%c0, %c0_0] : memref<8x16xf32, #tpu.memory_space<vmem>>, vector<8x16xf32>
    %1 = arith.truncf %0 : vector<8x16xf32> to vector<8x16xbf16>
    %c0_1 = arith.constant 0 : index
    %c0_2 = arith.constant 0 : index
    %2 = vector.load %arg5[%c0_1, %c0_2] : memref<16x256xbf16, #tpu.memory_space<vmem>>, vector<16x256xbf16>
    %cst = arith.constant dense<0.000000e+00> : vector<8x256xf32>
    %3 = tpu.matmul %1, %2, %cst {dimension_numbers = #tpu.dot_dimension_numbers<[1], [0], [0], [1], [0, 0, 1, 1], [], []>} : vector<8x16xbf16>, vector<16x256xbf16>, vector<8x256xf32> -> vector<8x256xf32>
    %c0_3 = arith.constant 0 : index
    %c0_4 = arith.constant 0 : index
    %4 = vector.load %arg6[%c0_3, %c0_4] : memref<1x256xf32, #tpu.memory_space<vmem>>, vector<1x256xf32>
    %5 = vector.broadcast %4 : vector<1x256xf32> to vector<8x256xf32>
    %6 = arith.addf %3, %5 : vector<8x256xf32>
    %c0_5 = arith.constant 0 : index
    %c0_6 = arith.constant 0 : index
    %7 = vector.load %arg4[%c0_5, %c0_6] : memref<8x256xf32, #tpu.memory_space<vmem>>, vector<8x256xf32>
    %8 = vector.extract_strided_slice %7 {offsets = [0, 0], sizes = [1, 256], strides = [1, 1]} : vector<8x256xf32> to vector<1x256xf32>
    %9 = vector.extract_strided_slice %7 {offsets = [1, 0], sizes = [1, 256], strides = [1, 1]} : vector<8x256xf32> to vector<1x256xf32>
    %10 = vector.extract_strided_slice %7 {offsets = [2, 0], sizes = [1, 256], strides = [1, 1]} : vector<8x256xf32> to vector<1x256xf32>
    %11 = vector.extract_strided_slice %7 {offsets = [3, 0], sizes = [1, 256], strides = [1, 1]} : vector<8x256xf32> to vector<1x256xf32>
    %12 = vector.extract_strided_slice %7 {offsets = [4, 0], sizes = [1, 256], strides = [1, 1]} : vector<8x256xf32> to vector<1x256xf32>
    %13 = vector.extract_strided_slice %7 {offsets = [5, 0], sizes = [1, 256], strides = [1, 1]} : vector<8x256xf32> to vector<1x256xf32>
    %14 = vector.extract_strided_slice %7 {offsets = [6, 0], sizes = [1, 256], strides = [1, 1]} : vector<8x256xf32> to vector<1x256xf32>
    %15 = vector.extract_strided_slice %7 {offsets = [7, 0], sizes = [1, 256], strides = [1, 1]} : vector<8x256xf32> to vector<1x256xf32>
    %c0_7 = arith.constant 0 : index
    %c0_8 = arith.constant 0 : index
    %16 = vector.load %arg1[%c0_7, %c0_8] : memref<8x8xf32, #tpu.memory_space<vmem>>, vector<8x8xf32>
    %c0_9 = arith.constant 0 : index
    %c0_10 = arith.constant 0 : index
    %c0_11 = arith.constant 0 : index
    %17 = vector.load %arg3[%c0_9, %c0_10, %c0_11] : memref<6x1x256xf32, #tpu.memory_space<vmem>>, vector<1x1x256xf32>
    %18 = vector.shape_cast %17 : vector<1x1x256xf32> to vector<1x256xf32>
    %19 = vector.broadcast %18 : vector<1x256xf32> to vector<8x256xf32>
    %20 = arith.addf %6, %19 : vector<8x256xf32>
    %21 = vector.extract_strided_slice %16 {offsets = [0, 0], sizes = [8, 1], strides = [1, 1]} : vector<8x8xf32> to vector<8x1xf32>
    %22 = vector.broadcast %21 : vector<8x1xf32> to vector<8x256xf32>
    %23 = vector.broadcast %8 : vector<1x256xf32> to vector<8x256xf32>
    %24 = arith.mulf %22, %23 : vector<8x256xf32>
    %25 = arith.addf %20, %24 : vector<8x256xf32>
    %26 = vector.extract_strided_slice %16 {offsets = [0, 1], sizes = [8, 1], strides = [1, 1]} : vector<8x8xf32> to vector<8x1xf32>
    %27 = vector.broadcast %26 : vector<8x1xf32> to vector<8x256xf32>
    %28 = vector.broadcast %9 : vector<1x256xf32> to vector<8x256xf32>
    %29 = arith.mulf %27, %28 : vector<8x256xf32>
    %30 = arith.addf %25, %29 : vector<8x256xf32>
    %31 = vector.extract_strided_slice %16 {offsets = [0, 2], sizes = [8, 1], strides = [1, 1]} : vector<8x8xf32> to vector<8x1xf32>
    %32 = vector.broadcast %31 : vector<8x1xf32> to vector<8x256xf32>
    %33 = vector.broadcast %10 : vector<1x256xf32> to vector<8x256xf32>
    %34 = arith.mulf %32, %33 : vector<8x256xf32>
    %35 = arith.addf %30, %34 : vector<8x256xf32>
    %36 = vector.extract_strided_slice %16 {offsets = [0, 3], sizes = [8, 1], strides = [1, 1]} : vector<8x8xf32> to vector<8x1xf32>
    %37 = vector.broadcast %36 : vector<8x1xf32> to vector<8x256xf32>
    %38 = vector.broadcast %11 : vector<1x256xf32> to vector<8x256xf32>
    %39 = arith.mulf %37, %38 : vector<8x256xf32>
    %40 = arith.addf %35, %39 : vector<8x256xf32>
    %41 = vector.extract_strided_slice %16 {offsets = [0, 4], sizes = [8, 1], strides = [1, 1]} : vector<8x8xf32> to vector<8x1xf32>
    %42 = vector.broadcast %41 : vector<8x1xf32> to vector<8x256xf32>
    %43 = vector.broadcast %12 : vector<1x256xf32> to vector<8x256xf32>
    %44 = arith.mulf %42, %43 : vector<8x256xf32>
    %45 = arith.addf %40, %44 : vector<8x256xf32>
    %46 = vector.extract_strided_slice %16 {offsets = [0, 5], sizes = [8, 1], strides = [1, 1]} : vector<8x8xf32> to vector<8x1xf32>
    %47 = vector.broadcast %46 : vector<8x1xf32> to vector<8x256xf32>
    %48 = vector.broadcast %13 : vector<1x256xf32> to vector<8x256xf32>
    %49 = arith.mulf %47, %48 : vector<8x256xf32>
    %50 = arith.addf %45, %49 : vector<8x256xf32>
    %51 = vector.extract_strided_slice %16 {offsets = [0, 6], sizes = [8, 1], strides = [1, 1]} : vector<8x8xf32> to vector<8x1xf32>
    %52 = vector.broadcast %51 : vector<8x1xf32> to vector<8x256xf32>
    %53 = vector.broadcast %14 : vector<1x256xf32> to vector<8x256xf32>
    %54 = arith.mulf %52, %53 : vector<8x256xf32>
    %55 = arith.addf %50, %54 : vector<8x256xf32>
    %56 = vector.extract_strided_slice %16 {offsets = [0, 7], sizes = [8, 1], strides = [1, 1]} : vector<8x8xf32> to vector<8x1xf32>
    %57 = vector.broadcast %56 : vector<8x1xf32> to vector<8x256xf32>
    %58 = vector.broadcast %15 : vector<1x256xf32> to vector<8x256xf32>
    %59 = arith.mulf %57, %58 : vector<8x256xf32>
    %60 = arith.addf %55, %59 : vector<8x256xf32>
    %61 = math.exp %60 : vector<8x256xf32>
    %cst_12 = arith.constant 1.000000e+00 : f32
    %62 = vector.broadcast %cst_12 : f32 to vector<8x256xf32>
    %63 = arith.addf %62, %61 : vector<8x256xf32>
    %cst_13 = arith.constant 1.000000e+00 : f32
    %64 = vector.broadcast %cst_13 : f32 to vector<8x256xf32>
    %65 = arith.addf %64, %61 : vector<8x256xf32>
    %66 = arith.mulf %63, %65 : vector<8x256xf32>
    %cst_14 = arith.constant 1.000000e+00 : f32
    %67 = vector.broadcast %cst_14 : f32 to vector<8x256xf32>
    %68 = arith.addf %66, %67 : vector<8x256xf32>
    %69 = tpu.reciprocal %68 {approx = true} : vector<8x256xf32> -> vector<8x256xf32>
    %cst_15 = arith.constant 2.000000e+00 : f32
    %70 = vector.broadcast %cst_15 : f32 to vector<8x256xf32>
    %71 = arith.mulf %70, %69 : vector<8x256xf32>
    %cst_16 = arith.constant 1.000000e+00 : f32
    %72 = vector.broadcast %cst_16 : f32 to vector<8x256xf32>
    %73 = arith.subf %72, %71 : vector<8x256xf32>
    %74 = arith.mulf %60, %73 : vector<8x256xf32>
    %75 = arith.truncf %74 : vector<8x256xf32> to vector<8x256xbf16>
    %c0_17 = arith.constant 0 : index
    %c0_18 = arith.constant 0 : index
    %76 = vector.load %arg7[%c0_17, %c0_18] : memref<256x256xbf16, #tpu.memory_space<vmem>>, vector<256x256xbf16>
    %cst_19 = arith.constant dense<0.000000e+00> : vector<8x256xf32>
    %77 = tpu.matmul %75, %76, %cst_19 {dimension_numbers = #tpu.dot_dimension_numbers<[1], [0], [0], [1], [0, 0, 1, 1], [], []>} : vector<8x256xbf16>, vector<256x256xbf16>, vector<8x256xf32> -> vector<8x256xf32>
    %c0_20 = arith.constant 0 : index
    %c0_21 = arith.constant 0 : index
    %78 = vector.load %arg8[%c0_20, %c0_21] : memref<1x256xf32, #tpu.memory_space<vmem>>, vector<1x256xf32>
    %79 = vector.broadcast %78 : vector<1x256xf32> to vector<8x256xf32>
    %80 = arith.addf %77, %79 : vector<8x256xf32>
    %81 = math.exp %80 : vector<8x256xf32>
    %cst_22 = arith.constant 1.000000e+00 : f32
    %82 = vector.broadcast %cst_22 : f32 to vector<8x256xf32>
    %83 = arith.addf %82, %81 : vector<8x256xf32>
    %cst_23 = arith.constant 1.000000e+00 : f32
    %84 = vector.broadcast %cst_23 : f32 to vector<8x256xf32>
    %85 = arith.addf %84, %81 : vector<8x256xf32>
    %86 = arith.mulf %83, %85 : vector<8x256xf32>
    %cst_24 = arith.constant 1.000000e+00 : f32
    %87 = vector.broadcast %cst_24 : f32 to vector<8x256xf32>
    %88 = arith.addf %86, %87 : vector<8x256xf32>
    %89 = tpu.reciprocal %88 {approx = true} : vector<8x256xf32> -> vector<8x256xf32>
    %cst_25 = arith.constant 2.000000e+00 : f32
    %90 = vector.broadcast %cst_25 : f32 to vector<8x256xf32>
    %91 = arith.mulf %90, %89 : vector<8x256xf32>
    %cst_26 = arith.constant 1.000000e+00 : f32
    %92 = vector.broadcast %cst_26 : f32 to vector<8x256xf32>
    %93 = arith.subf %92, %91 : vector<8x256xf32>
    %94 = arith.mulf %80, %93 : vector<8x256xf32>
    %95 = arith.truncf %94 : vector<8x256xf32> to vector<8x256xbf16>
    %c0_27 = arith.constant 0 : index
    %c0_28 = arith.constant 0 : index
    %96 = vector.load %arg9[%c0_27, %c0_28] : memref<256x256xbf16, #tpu.memory_space<vmem>>, vector<256x256xbf16>
    %cst_29 = arith.constant dense<0.000000e+00> : vector<8x256xf32>
    %97 = tpu.matmul %95, %96, %cst_29 {dimension_numbers = #tpu.dot_dimension_numbers<[1], [0], [0], [1], [0, 0, 1, 1], [], []>} : vector<8x256xbf16>, vector<256x256xbf16>, vector<8x256xf32> -> vector<8x256xf32>
    %c0_30 = arith.constant 0 : index
    %c0_31 = arith.constant 0 : index
    %98 = vector.load %arg10[%c0_30, %c0_31] : memref<1x256xf32, #tpu.memory_space<vmem>>, vector<1x256xf32>
    %99 = vector.broadcast %98 : vector<1x256xf32> to vector<8x256xf32>
    %100 = arith.addf %97, %99 : vector<8x256xf32>
    %101 = math.exp %100 : vector<8x256xf32>
    %cst_32 = arith.constant 1.000000e+00 : f32
    %102 = vector.broadcast %cst_32 : f32 to vector<8x256xf32>
    %103 = arith.addf %102, %101 : vector<8x256xf32>
    %cst_33 = arith.constant 1.000000e+00 : f32
    %104 = vector.broadcast %cst_33 : f32 to vector<8x256xf32>
    %105 = arith.addf %104, %101 : vector<8x256xf32>
    %106 = arith.mulf %103, %105 : vector<8x256xf32>
    %cst_34 = arith.constant 1.000000e+00 : f32
    %107 = vector.broadcast %cst_34 : f32 to vector<8x256xf32>
    %108 = arith.addf %106, %107 : vector<8x256xf32>
    %109 = tpu.reciprocal %108 {approx = true} : vector<8x256xf32> -> vector<8x256xf32>
    %cst_35 = arith.constant 2.000000e+00 : f32
    %110 = vector.broadcast %cst_35 : f32 to vector<8x256xf32>
    %111 = arith.mulf %110, %109 : vector<8x256xf32>
    %cst_36 = arith.constant 1.000000e+00 : f32
    %112 = vector.broadcast %cst_36 : f32 to vector<8x256xf32>
    %113 = arith.subf %112, %111 : vector<8x256xf32>
    %114 = arith.mulf %100, %113 : vector<8x256xf32>
    %115 = arith.truncf %114 : vector<8x256xf32> to vector<8x256xbf16>
    %c0_37 = arith.constant 0 : index
    %c0_38 = arith.constant 0 : index
    %116 = vector.load %arg11[%c0_37, %c0_38] : memref<256x8xbf16, #tpu.memory_space<vmem>>, vector<256x8xbf16>
    %cst_39 = arith.constant dense<0.000000e+00> : vector<8x8xf32>
    %117 = tpu.matmul %115, %116, %cst_39 {dimension_numbers = #tpu.dot_dimension_numbers<[1], [0], [0], [1], [0, 0, 1, 1], [], []>} : vector<8x256xbf16>, vector<256x8xbf16>, vector<8x8xf32> -> vector<8x8xf32>
    %c0_40 = arith.constant 0 : index
    %c0_41 = arith.constant 0 : index
    %118 = vector.load %arg12[%c0_40, %c0_41] : memref<1x8xf32, #tpu.memory_space<vmem>>, vector<1x8xf32>
    %119 = vector.broadcast %118 : vector<1x8xf32> to vector<8x8xf32>
    %120 = arith.addf %117, %119 : vector<8x8xf32>
    %cst_42 = arith.constant 12.4908953 : f32
    %121 = vector.broadcast %cst_42 : f32 to vector<8x8xf32>
    %122 = arith.mulf %121, %16 : vector<8x8xf32>
    %cst_43 = arith.constant 12.4508018 : f32
    %123 = vector.broadcast %cst_43 : f32 to vector<8x8xf32>
    %124 = arith.mulf %123, %120 : vector<8x8xf32>
    %125 = arith.subf %122, %124 : vector<8x8xf32>
    %cst_44 = arith.constant -1.000000e+00 : f32
    %cst_45 = arith.constant 1.000000e+00 : f32
    %126 = vector.broadcast %cst_44 : f32 to vector<8x8xf32>
    %127 = arith.maximumf %126, %125 : vector<8x8xf32>
    %128 = vector.broadcast %cst_45 : f32 to vector<8x8xf32>
    %129 = arith.minimumf %128, %127 : vector<8x8xf32>
    %cst_46 = arith.constant 0.135572746 : f32
    %130 = vector.broadcast %cst_46 : f32 to vector<8x8xf32>
    %131 = arith.mulf %130, %129 : vector<8x8xf32>
    %cst_47 = arith.constant 0.454674125 : f32
    %132 = vector.broadcast %cst_47 : f32 to vector<8x8xf32>
    %133 = arith.mulf %132, %16 : vector<8x8xf32>
    %134 = arith.addf %131, %133 : vector<8x8xf32>
    %c0_48 = arith.constant 0 : index
    %c0_49 = arith.constant 0 : index
    %c0_50 = arith.constant 0 : index
    %135 = vector.load %arg2[%c0_48, %c0_49, %c0_50] : memref<6x8x8xf32, #tpu.memory_space<vmem>>, vector<1x8x8xf32>
    %136 = vector.shape_cast %135 : vector<1x8x8xf32> to vector<8x8xf32>
    %cst_51 = arith.constant 0.874655127 : f32
    %137 = vector.broadcast %cst_51 : f32 to vector<8x8xf32>
    %138 = arith.mulf %137, %136 : vector<8x8xf32>
    %139 = arith.addf %134, %138 : vector<8x8xf32>
    %c1 = arith.constant 1 : index
    %c0_52 = arith.constant 0 : index
    %c0_53 = arith.constant 0 : index
    %140 = vector.load %arg3[%c1, %c0_52, %c0_53] : memref<6x1x256xf32, #tpu.memory_space<vmem>>, vector<1x1x256xf32>
    %141 = vector.shape_cast %140 : vector<1x1x256xf32> to vector<1x256xf32>
    %142 = vector.broadcast %141 : vector<1x256xf32> to vector<8x256xf32>
    %143 = arith.addf %6, %142 : vector<8x256xf32>
    %144 = vector.extract_strided_slice %139 {offsets = [0, 0], sizes = [8, 1], strides = [1, 1]} : vector<8x8xf32> to vector<8x1xf32>
    %145 = vector.broadcast %144 : vector<8x1xf32> to vector<8x256xf32>
    %146 = vector.broadcast %8 : vector<1x256xf32> to vector<8x256xf32>
    %147 = arith.mulf %145, %146 : vector<8x256xf32>
    %148 = arith.addf %143, %147 : vector<8x256xf32>
    %149 = vector.extract_strided_slice %139 {offsets = [0, 1], sizes = [8, 1], strides = [1, 1]} : vector<8x8xf32> to vector<8x1xf32>
    %150 = vector.broadcast %149 : vector<8x1xf32> to vector<8x256xf32>
    %151 = vector.broadcast %9 : vector<1x256xf32> to vector<8x256xf32>
    %152 = arith.mulf %150, %151 : vector<8x256xf32>
    %153 = arith.addf %148, %152 : vector<8x256xf32>
    %154 = vector.extract_strided_slice %139 {offsets = [0, 2], sizes = [8, 1], strides = [1, 1]} : vector<8x8xf32> to vector<8x1xf32>
    %155 = vector.broadcast %154 : vector<8x1xf32> to vector<8x256xf32>
    %156 = vector.broadcast %10 : vector<1x256xf32> to vector<8x256xf32>
    %157 = arith.mulf %155, %156 : vector<8x256xf32>
    %158 = arith.addf %153, %157 : vector<8x256xf32>
    %159 = vector.extract_strided_slice %139 {offsets = [0, 3], sizes = [8, 1], strides = [1, 1]} : vector<8x8xf32> to vector<8x1xf32>
    %160 = vector.broadcast %159 : vector<8x1xf32> to vector<8x256xf32>
    %161 = vector.broadcast %11 : vector<1x256xf32> to vector<8x256xf32>
    %162 = arith.mulf %160, %161 : vector<8x256xf32>
    %163 = arith.addf %158, %162 : vector<8x256xf32>
    %164 = vector.extract_strided_slice %139 {offsets = [0, 4], sizes = [8, 1], strides = [1, 1]} : vector<8x8xf32> to vector<8x1xf32>
    %165 = vector.broadcast %164 : vector<8x1xf32> to vector<8x256xf32>
    %166 = vector.broadcast %12 : vector<1x256xf32> to vector<8x256xf32>
    %167 = arith.mulf %165, %166 : vector<8x256xf32>
    %168 = arith.addf %163, %167 : vector<8x256xf32>
    %169 = vector.extract_strided_slice %139 {offsets = [0, 5], sizes = [8, 1], strides = [1, 1]} : vector<8x8xf32> to vector<8x1xf32>
    %170 = vector.broadcast %169 : vector<8x1xf32> to vector<8x256xf32>
    %171 = vector.broadcast %13 : vector<1x256xf32> to vector<8x256xf32>
    %172 = arith.mulf %170, %171 : vector<8x256xf32>
    %173 = arith.addf %168, %172 : vector<8x256xf32>
    %174 = vector.extract_strided_slice %139 {offsets = [0, 6], sizes = [8, 1], strides = [1, 1]} : vector<8x8xf32> to vector<8x1xf32>
    %175 = vector.broadcast %174 : vector<8x1xf32> to vector<8x256xf32>
    %176 = vector.broadcast %14 : vector<1x256xf32> to vector<8x256xf32>
    %177 = arith.mulf %175, %176 : vector<8x256xf32>
    %178 = arith.addf %173, %177 : vector<8x256xf32>
    %179 = vector.extract_strided_slice %139 {offsets = [0, 7], sizes = [8, 1], strides = [1, 1]} : vector<8x8xf32> to vector<8x1xf32>
    %180 = vector.broadcast %179 : vector<8x1xf32> to vector<8x256xf32>
    %181 = vector.broadcast %15 : vector<1x256xf32> to vector<8x256xf32>
    %182 = arith.mulf %180, %181 : vector<8x256xf32>
    %183 = arith.addf %178, %182 : vector<8x256xf32>
    %184 = math.exp %183 : vector<8x256xf32>
    %cst_54 = arith.constant 1.000000e+00 : f32
    %185 = vector.broadcast %cst_54 : f32 to vector<8x256xf32>
    %186 = arith.addf %185, %184 : vector<8x256xf32>
    %cst_55 = arith.constant 1.000000e+00 : f32
    %187 = vector.broadcast %cst_55 : f32 to vector<8x256xf32>
    %188 = arith.addf %187, %184 : vector<8x256xf32>
    %189 = arith.mulf %186, %188 : vector<8x256xf32>
    %cst_56 = arith.constant 1.000000e+00 : f32
    %190 = vector.broadcast %cst_56 : f32 to vector<8x256xf32>
    %191 = arith.addf %189, %190 : vector<8x256xf32>
    %192 = tpu.reciprocal %191 {approx = true} : vector<8x256xf32> -> vector<8x256xf32>
    %cst_57 = arith.constant 2.000000e+00 : f32
    %193 = vector.broadcast %cst_57 : f32 to vector<8x256xf32>
    %194 = arith.mulf %193, %192 : vector<8x256xf32>
    %cst_58 = arith.constant 1.000000e+00 : f32
    %195 = vector.broadcast %cst_58 : f32 to vector<8x256xf32>
    %196 = arith.subf %195, %194 : vector<8x256xf32>
    %197 = arith.mulf %183, %196 : vector<8x256xf32>
    %198 = arith.truncf %197 : vector<8x256xf32> to vector<8x256xbf16>
    %c0_59 = arith.constant 0 : index
    %c0_60 = arith.constant 0 : index
    %199 = vector.load %arg7[%c0_59, %c0_60] : memref<256x256xbf16, #tpu.memory_space<vmem>>, vector<256x256xbf16>
    %cst_61 = arith.constant dense<0.000000e+00> : vector<8x256xf32>
    %200 = tpu.matmul %198, %199, %cst_61 {dimension_numbers = #tpu.dot_dimension_numbers<[1], [0], [0], [1], [0, 0, 1, 1], [], []>} : vector<8x256xbf16>, vector<256x256xbf16>, vector<8x256xf32> -> vector<8x256xf32>
    %c0_62 = arith.constant 0 : index
    %c0_63 = arith.constant 0 : index
    %201 = vector.load %arg8[%c0_62, %c0_63] : memref<1x256xf32, #tpu.memory_space<vmem>>, vector<1x256xf32>
    %202 = vector.broadcast %201 : vector<1x256xf32> to vector<8x256xf32>
    %203 = arith.addf %200, %202 : vector<8x256xf32>
    %204 = math.exp %203 : vector<8x256xf32>
    %cst_64 = arith.constant 1.000000e+00 : f32
    %205 = vector.broadcast %cst_64 : f32 to vector<8x256xf32>
    %206 = arith.addf %205, %204 : vector<8x256xf32>
    %cst_65 = arith.constant 1.000000e+00 : f32
    %207 = vector.broadcast %cst_65 : f32 to vector<8x256xf32>
    %208 = arith.addf %207, %204 : vector<8x256xf32>
    %209 = arith.mulf %206, %208 : vector<8x256xf32>
    %cst_66 = arith.constant 1.000000e+00 : f32
    %210 = vector.broadcast %cst_66 : f32 to vector<8x256xf32>
    %211 = arith.addf %209, %210 : vector<8x256xf32>
    %212 = tpu.reciprocal %211 {approx = true} : vector<8x256xf32> -> vector<8x256xf32>
    %cst_67 = arith.constant 2.000000e+00 : f32
    %213 = vector.broadcast %cst_67 : f32 to vector<8x256xf32>
    %214 = arith.mulf %213, %212 : vector<8x256xf32>
    %cst_68 = arith.constant 1.000000e+00 : f32
    %215 = vector.broadcast %cst_68 : f32 to vector<8x256xf32>
    %216 = arith.subf %215, %214 : vector<8x256xf32>
    %217 = arith.mulf %203, %216 : vector<8x256xf32>
    %218 = arith.truncf %217 : vector<8x256xf32> to vector<8x256xbf16>
    %c0_69 = arith.constant 0 : index
    %c0_70 = arith.constant 0 : index
    %219 = vector.load %arg9[%c0_69, %c0_70] : memref<256x256xbf16, #tpu.memory_space<vmem>>, vector<256x256xbf16>
    %cst_71 = arith.constant dense<0.000000e+00> : vector<8x256xf32>
    %220 = tpu.matmul %218, %219, %cst_71 {dimension_numbers = #tpu.dot_dimension_numbers<[1], [0], [0], [1], [0, 0, 1, 1], [], []>} : vector<8x256xbf16>, vector<256x256xbf16>, vector<8x256xf32> -> vector<8x256xf32>
    %c0_72 = arith.constant 0 : index
    %c0_73 = arith.constant 0 : index
    %221 = vector.load %arg10[%c0_72, %c0_73] : memref<1x256xf32, #tpu.memory_space<vmem>>, vector<1x256xf32>
    %222 = vector.broadcast %221 : vector<1x256xf32> to vector<8x256xf32>
    %223 = arith.addf %220, %222 : vector<8x256xf32>
    %224 = math.exp %223 : vector<8x256xf32>
    %cst_74 = arith.constant 1.000000e+00 : f32
    %225 = vector.broadcast %cst_74 : f32 to vector<8x256xf32>
    %226 = arith.addf %225, %224 : vector<8x256xf32>
    %cst_75 = arith.constant 1.000000e+00 : f32
    %227 = vector.broadcast %cst_75 : f32 to vector<8x256xf32>
    %228 = arith.addf %227, %224 : vector<8x256xf32>
    %229 = arith.mulf %226, %228 : vector<8x256xf32>
    %cst_76 = arith.constant 1.000000e+00 : f32
    %230 = vector.broadcast %cst_76 : f32 to vector<8x256xf32>
    %231 = arith.addf %229, %230 : vector<8x256xf32>
    %232 = tpu.reciprocal %231 {approx = true} : vector<8x256xf32> -> vector<8x256xf32>
    %cst_77 = arith.constant 2.000000e+00 : f32
    %233 = vector.broadcast %cst_77 : f32 to vector<8x256xf32>
    %234 = arith.mulf %233, %232 : vector<8x256xf32>
    %cst_78 = arith.constant 1.000000e+00 : f32
    %235 = vector.broadcast %cst_78 : f32 to vector<8x256xf32>
    %236 = arith.subf %235, %234 : vector<8x256xf32>
    %237 = arith.mulf %223, %236 : vector<8x256xf32>
    %238 = arith.truncf %237 : vector<8x256xf32> to vector<8x256xbf16>
    %c0_79 = arith.constant 0 : index
    %c0_80 = arith.constant 0 : index
    %239 = vector.load %arg11[%c0_79, %c0_80] : memref<256x8xbf16, #tpu.memory_space<vmem>>, vector<256x8xbf16>
    %cst_81 = arith.constant dense<0.000000e+00> : vector<8x8xf32>
    %240 = tpu.matmul %238, %239, %cst_81 {dimension_numbers = #tpu.dot_dimension_numbers<[1], [0], [0], [1], [0, 0, 1, 1], [], []>} : vector<8x256xbf16>, vector<256x8xbf16>, vector<8x8xf32> -> vector<8x8xf32>
    %c0_82 = arith.constant 0 : index
    %c0_83 = arith.constant 0 : index
    %241 = vector.load %arg12[%c0_82, %c0_83] : memref<1x8xf32, #tpu.memory_space<vmem>>, vector<1x8xf32>
    %242 = vector.broadcast %241 : vector<1x8xf32> to vector<8x8xf32>
    %243 = arith.addf %240, %242 : vector<8x8xf32>
    %cst_84 = arith.constant 5.814860e+00 : f32
    %244 = vector.broadcast %cst_84 : f32 to vector<8x8xf32>
    %245 = arith.mulf %244, %139 : vector<8x8xf32>
    %cst_85 = arith.constant 5.72822762 : f32
    %246 = vector.broadcast %cst_85 : f32 to vector<8x8xf32>
    %247 = arith.mulf %246, %243 : vector<8x8xf32>
    %248 = arith.subf %245, %247 : vector<8x8xf32>
    %cst_86 = arith.constant -1.000000e+00 : f32
    %cst_87 = arith.constant 1.000000e+00 : f32
    %249 = vector.broadcast %cst_86 : f32 to vector<8x8xf32>
    %250 = arith.maximumf %249, %248 : vector<8x8xf32>
    %251 = vector.broadcast %cst_87 : f32 to vector<8x8xf32>
    %252 = arith.minimumf %251, %250 : vector<8x8xf32>
    %cst_88 = arith.constant 0.237111747 : f32
    %253 = vector.broadcast %cst_88 : f32 to vector<8x8xf32>
    %254 = arith.mulf %253, %252 : vector<8x8xf32>
    %cst_89 = arith.constant 0.493370593 : f32
    %255 = vector.broadcast %cst_89 : f32 to vector<8x8xf32>
    %256 = arith.mulf %255, %139 : vector<8x8xf32>
    %257 = arith.addf %254, %256 : vector<8x8xf32>
    %c1_90 = arith.constant 1 : index
    %c0_91 = arith.constant 0 : index
    %c0_92 = arith.constant 0 : index
    %258 = vector.load %arg2[%c1_90, %c0_91, %c0_92] : memref<6x8x8xf32, #tpu.memory_space<vmem>>, vector<1x8x8xf32>
    %259 = vector.shape_cast %258 : vector<1x8x8xf32> to vector<8x8xf32>
    %cst_93 = arith.constant 0.812482178 : f32
    %260 = vector.broadcast %cst_93 : f32 to vector<8x8xf32>
    %261 = arith.mulf %260, %259 : vector<8x8xf32>
    %262 = arith.addf %257, %261 : vector<8x8xf32>
    %c2 = arith.constant 2 : index
    %c0_94 = arith.constant 0 : index
    %c0_95 = arith.constant 0 : index
    %263 = vector.load %arg3[%c2, %c0_94, %c0_95] : memref<6x1x256xf32, #tpu.memory_space<vmem>>, vector<1x1x256xf32>
    %264 = vector.shape_cast %263 : vector<1x1x256xf32> to vector<1x256xf32>
    %265 = vector.broadcast %264 : vector<1x256xf32> to vector<8x256xf32>
    %266 = arith.addf %6, %265 : vector<8x256xf32>
    %267 = vector.extract_strided_slice %262 {offsets = [0, 0], sizes = [8, 1], strides = [1, 1]} : vector<8x8xf32> to vector<8x1xf32>
    %268 = vector.broadcast %267 : vector<8x1xf32> to vector<8x256xf32>
    %269 = vector.broadcast %8 : vector<1x256xf32> to vector<8x256xf32>
    %270 = arith.mulf %268, %269 : vector<8x256xf32>
    %271 = arith.addf %266, %270 : vector<8x256xf32>
    %272 = vector.extract_strided_slice %262 {offsets = [0, 1], sizes = [8, 1], strides = [1, 1]} : vector<8x8xf32> to vector<8x1xf32>
    %273 = vector.broadcast %272 : vector<8x1xf32> to vector<8x256xf32>
    %274 = vector.broadcast %9 : vector<1x256xf32> to vector<8x256xf32>
    %275 = arith.mulf %273, %274 : vector<8x256xf32>
    %276 = arith.addf %271, %275 : vector<8x256xf32>
    %277 = vector.extract_strided_slice %262 {offsets = [0, 2], sizes = [8, 1], strides = [1, 1]} : vector<8x8xf32> to vector<8x1xf32>
    %278 = vector.broadcast %277 : vector<8x1xf32> to vector<8x256xf32>
    %279 = vector.broadcast %10 : vector<1x256xf32> to vector<8x256xf32>
    %280 = arith.mulf %278, %279 : vector<8x256xf32>
    %281 = arith.addf %276, %280 : vector<8x256xf32>
    %282 = vector.extract_strided_slice %262 {offsets = [0, 3], sizes = [8, 1], strides = [1, 1]} : vector<8x8xf32> to vector<8x1xf32>
    %283 = vector.broadcast %282 : vector<8x1xf32> to vector<8x256xf32>
    %284 = vector.broadcast %11 : vector<1x256xf32> to vector<8x256xf32>
    %285 = arith.mulf %283, %284 : vector<8x256xf32>
    %286 = arith.addf %281, %285 : vector<8x256xf32>
    %287 = vector.extract_strided_slice %262 {offsets = [0, 4], sizes = [8, 1], strides = [1, 1]} : vector<8x8xf32> to vector<8x1xf32>
    %288 = vector.broadcast %287 : vector<8x1xf32> to vector<8x256xf32>
    %289 = vector.broadcast %12 : vector<1x256xf32> to vector<8x256xf32>
    %290 = arith.mulf %288, %289 : vector<8x256xf32>
    %291 = arith.addf %286, %290 : vector<8x256xf32>
    %292 = vector.extract_strided_slice %262 {offsets = [0, 5], sizes = [8, 1], strides = [1, 1]} : vector<8x8xf32> to vector<8x1xf32>
    %293 = vector.broadcast %292 : vector<8x1xf32> to vector<8x256xf32>
    %294 = vector.broadcast %13 : vector<1x256xf32> to vector<8x256xf32>
    %295 = arith.mulf %293, %294 : vector<8x256xf32>
    %296 = arith.addf %291, %295 : vector<8x256xf32>
    %297 = vector.extract_strided_slice %262 {offsets = [0, 6], sizes = [8, 1], strides = [1, 1]} : vector<8x8xf32> to vector<8x1xf32>
    %298 = vector.broadcast %297 : vector<8x1xf32> to vector<8x256xf32>
    %299 = vector.broadcast %14 : vector<1x256xf32> to vector<8x256xf32>
    %300 = arith.mulf %298, %299 : vector<8x256xf32>
    %301 = arith.addf %296, %300 : vector<8x256xf32>
    %302 = vector.extract_strided_slice %262 {offsets = [0, 7], sizes = [8, 1], strides = [1, 1]} : vector<8x8xf32> to vector<8x1xf32>
    %303 = vector.broadcast %302 : vector<8x1xf32> to vector<8x256xf32>
    %304 = vector.broadcast %15 : vector<1x256xf32> to vector<8x256xf32>
    %305 = arith.mulf %303, %304 : vector<8x256xf32>
    %306 = arith.addf %301, %305 : vector<8x256xf32>
    %307 = math.exp %306 : vector<8x256xf32>
    %cst_96 = arith.constant 1.000000e+00 : f32
    %308 = vector.broadcast %cst_96 : f32 to vector<8x256xf32>
    %309 = arith.addf %308, %307 : vector<8x256xf32>
    %cst_97 = arith.constant 1.000000e+00 : f32
    %310 = vector.broadcast %cst_97 : f32 to vector<8x256xf32>
    %311 = arith.addf %310, %307 : vector<8x256xf32>
    %312 = arith.mulf %309, %311 : vector<8x256xf32>
    %cst_98 = arith.constant 1.000000e+00 : f32
    %313 = vector.broadcast %cst_98 : f32 to vector<8x256xf32>
    %314 = arith.addf %312, %313 : vector<8x256xf32>
    %315 = tpu.reciprocal %314 {approx = true} : vector<8x256xf32> -> vector<8x256xf32>
    %cst_99 = arith.constant 2.000000e+00 : f32
    %316 = vector.broadcast %cst_99 : f32 to vector<8x256xf32>
    %317 = arith.mulf %316, %315 : vector<8x256xf32>
    %cst_100 = arith.constant 1.000000e+00 : f32
    %318 = vector.broadcast %cst_100 : f32 to vector<8x256xf32>
    %319 = arith.subf %318, %317 : vector<8x256xf32>
    %320 = arith.mulf %306, %319 : vector<8x256xf32>
    %321 = arith.truncf %320 : vector<8x256xf32> to vector<8x256xbf16>
    %c0_101 = arith.constant 0 : index
    %c0_102 = arith.constant 0 : index
    %322 = vector.load %arg7[%c0_101, %c0_102] : memref<256x256xbf16, #tpu.memory_space<vmem>>, vector<256x256xbf16>
    %cst_103 = arith.constant dense<0.000000e+00> : vector<8x256xf32>
    %323 = tpu.matmul %321, %322, %cst_103 {dimension_numbers = #tpu.dot_dimension_numbers<[1], [0], [0], [1], [0, 0, 1, 1], [], []>} : vector<8x256xbf16>, vector<256x256xbf16>, vector<8x256xf32> -> vector<8x256xf32>
    %c0_104 = arith.constant 0 : index
    %c0_105 = arith.constant 0 : index
    %324 = vector.load %arg8[%c0_104, %c0_105] : memref<1x256xf32, #tpu.memory_space<vmem>>, vector<1x256xf32>
    %325 = vector.broadcast %324 : vector<1x256xf32> to vector<8x256xf32>
    %326 = arith.addf %323, %325 : vector<8x256xf32>
    %327 = math.exp %326 : vector<8x256xf32>
    %cst_106 = arith.constant 1.000000e+00 : f32
    %328 = vector.broadcast %cst_106 : f32 to vector<8x256xf32>
    %329 = arith.addf %328, %327 : vector<8x256xf32>
    %cst_107 = arith.constant 1.000000e+00 : f32
    %330 = vector.broadcast %cst_107 : f32 to vector<8x256xf32>
    %331 = arith.addf %330, %327 : vector<8x256xf32>
    %332 = arith.mulf %329, %331 : vector<8x256xf32>
    %cst_108 = arith.constant 1.000000e+00 : f32
    %333 = vector.broadcast %cst_108 : f32 to vector<8x256xf32>
    %334 = arith.addf %332, %333 : vector<8x256xf32>
    %335 = tpu.reciprocal %334 {approx = true} : vector<8x256xf32> -> vector<8x256xf32>
    %cst_109 = arith.constant 2.000000e+00 : f32
    %336 = vector.broadcast %cst_109 : f32 to vector<8x256xf32>
    %337 = arith.mulf %336, %335 : vector<8x256xf32>
    %cst_110 = arith.constant 1.000000e+00 : f32
    %338 = vector.broadcast %cst_110 : f32 to vector<8x256xf32>
    %339 = arith.subf %338, %337 : vector<8x256xf32>
    %340 = arith.mulf %326, %339 : vector<8x256xf32>
    %341 = arith.truncf %340 : vector<8x256xf32> to vector<8x256xbf16>
    %c0_111 = arith.constant 0 : index
    %c0_112 = arith.constant 0 : index
    %342 = vector.load %arg9[%c0_111, %c0_112] : memref<256x256xbf16, #tpu.memory_space<vmem>>, vector<256x256xbf16>
    %cst_113 = arith.constant dense<0.000000e+00> : vector<8x256xf32>
    %343 = tpu.matmul %341, %342, %cst_113 {dimension_numbers = #tpu.dot_dimension_numbers<[1], [0], [0], [1], [0, 0, 1, 1], [], []>} : vector<8x256xbf16>, vector<256x256xbf16>, vector<8x256xf32> -> vector<8x256xf32>
    %c0_114 = arith.constant 0 : index
    %c0_115 = arith.constant 0 : index
    %344 = vector.load %arg10[%c0_114, %c0_115] : memref<1x256xf32, #tpu.memory_space<vmem>>, vector<1x256xf32>
    %345 = vector.broadcast %344 : vector<1x256xf32> to vector<8x256xf32>
    %346 = arith.addf %343, %345 : vector<8x256xf32>
    %347 = math.exp %346 : vector<8x256xf32>
    %cst_116 = arith.constant 1.000000e+00 : f32
    %348 = vector.broadcast %cst_116 : f32 to vector<8x256xf32>
    %349 = arith.addf %348, %347 : vector<8x256xf32>
    %cst_117 = arith.constant 1.000000e+00 : f32
    %350 = vector.broadcast %cst_117 : f32 to vector<8x256xf32>
    %351 = arith.addf %350, %347 : vector<8x256xf32>
    %352 = arith.mulf %349, %351 : vector<8x256xf32>
    %cst_118 = arith.constant 1.000000e+00 : f32
    %353 = vector.broadcast %cst_118 : f32 to vector<8x256xf32>
    %354 = arith.addf %352, %353 : vector<8x256xf32>
    %355 = tpu.reciprocal %354 {approx = true} : vector<8x256xf32> -> vector<8x256xf32>
    %cst_119 = arith.constant 2.000000e+00 : f32
    %356 = vector.broadcast %cst_119 : f32 to vector<8x256xf32>
    %357 = arith.mulf %356, %355 : vector<8x256xf32>
    %cst_120 = arith.constant 1.000000e+00 : f32
    %358 = vector.broadcast %cst_120 : f32 to vector<8x256xf32>
    %359 = arith.subf %358, %357 : vector<8x256xf32>
    %360 = arith.mulf %346, %359 : vector<8x256xf32>
    %361 = arith.truncf %360 : vector<8x256xf32> to vector<8x256xbf16>
    %c0_121 = arith.constant 0 : index
    %c0_122 = arith.constant 0 : index
    %362 = vector.load %arg11[%c0_121, %c0_122] : memref<256x8xbf16, #tpu.memory_space<vmem>>, vector<256x8xbf16>
    %cst_123 = arith.constant dense<0.000000e+00> : vector<8x8xf32>
    %363 = tpu.matmul %361, %362, %cst_123 {dimension_numbers = #tpu.dot_dimension_numbers<[1], [0], [0], [1], [0, 0, 1, 1], [], []>} : vector<8x256xbf16>, vector<256x8xbf16>, vector<8x8xf32> -> vector<8x8xf32>
    %c0_124 = arith.constant 0 : index
    %c0_125 = arith.constant 0 : index
    %364 = vector.load %arg12[%c0_124, %c0_125] : memref<1x8xf32, #tpu.memory_space<vmem>>, vector<1x8xf32>
    %365 = vector.broadcast %364 : vector<1x8xf32> to vector<8x8xf32>
    %366 = arith.addf %363, %365 : vector<8x8xf32>
    %cst_126 = arith.constant 3.10599256 : f32
    %367 = vector.broadcast %cst_126 : f32 to vector<8x8xf32>
    %368 = arith.mulf %367, %262 : vector<8x8xf32>
    %cst_127 = arith.constant 2.94061041 : f32
    %369 = vector.broadcast %cst_127 : f32 to vector<8x8xf32>
    %370 = arith.mulf %369, %366 : vector<8x8xf32>
    %371 = arith.subf %368, %370 : vector<8x8xf32>
    %cst_128 = arith.constant -1.000000e+00 : f32
    %cst_129 = arith.constant 1.000000e+00 : f32
    %372 = vector.broadcast %cst_128 : f32 to vector<8x8xf32>
    %373 = arith.maximumf %372, %371 : vector<8x8xf32>
    %374 = vector.broadcast %cst_129 : f32 to vector<8x8xf32>
    %375 = arith.minimumf %374, %373 : vector<8x8xf32>
    %cst_130 = arith.constant 0.365927428 : f32
    %376 = vector.broadcast %cst_130 : f32 to vector<8x8xf32>
    %377 = arith.mulf %376, %375 : vector<8x8xf32>
    %cst_131 = arith.constant 0.495068341 : f32
    %378 = vector.broadcast %cst_131 : f32 to vector<8x8xf32>
    %379 = arith.mulf %378, %262 : vector<8x8xf32>
    %380 = arith.addf %377, %379 : vector<8x8xf32>
    %c2_132 = arith.constant 2 : index
    %c0_133 = arith.constant 0 : index
    %c0_134 = arith.constant 0 : index
    %381 = vector.load %arg2[%c2_132, %c0_133, %c0_134] : memref<6x8x8xf32, #tpu.memory_space<vmem>>, vector<1x8x8xf32>
    %382 = vector.shape_cast %381 : vector<1x8x8xf32> to vector<8x8xf32>
    %cst_135 = arith.constant 0.710178256 : f32
    %383 = vector.broadcast %cst_135 : f32 to vector<8x8xf32>
    %384 = arith.mulf %383, %382 : vector<8x8xf32>
    %385 = arith.addf %380, %384 : vector<8x8xf32>
    %c3 = arith.constant 3 : index
    %c0_136 = arith.constant 0 : index
    %c0_137 = arith.constant 0 : index
    %386 = vector.load %arg3[%c3, %c0_136, %c0_137] : memref<6x1x256xf32, #tpu.memory_space<vmem>>, vector<1x1x256xf32>
    %387 = vector.shape_cast %386 : vector<1x1x256xf32> to vector<1x256xf32>
    %388 = vector.broadcast %387 : vector<1x256xf32> to vector<8x256xf32>
    %389 = arith.addf %6, %388 : vector<8x256xf32>
    %390 = vector.extract_strided_slice %385 {offsets = [0, 0], sizes = [8, 1], strides = [1, 1]} : vector<8x8xf32> to vector<8x1xf32>
    %391 = vector.broadcast %390 : vector<8x1xf32> to vector<8x256xf32>
    %392 = vector.broadcast %8 : vector<1x256xf32> to vector<8x256xf32>
    %393 = arith.mulf %391, %392 : vector<8x256xf32>
    %394 = arith.addf %389, %393 : vector<8x256xf32>
    %395 = vector.extract_strided_slice %385 {offsets = [0, 1], sizes = [8, 1], strides = [1, 1]} : vector<8x8xf32> to vector<8x1xf32>
    %396 = vector.broadcast %395 : vector<8x1xf32> to vector<8x256xf32>
    %397 = vector.broadcast %9 : vector<1x256xf32> to vector<8x256xf32>
    %398 = arith.mulf %396, %397 : vector<8x256xf32>
    %399 = arith.addf %394, %398 : vector<8x256xf32>
    %400 = vector.extract_strided_slice %385 {offsets = [0, 2], sizes = [8, 1], strides = [1, 1]} : vector<8x8xf32> to vector<8x1xf32>
    %401 = vector.broadcast %400 : vector<8x1xf32> to vector<8x256xf32>
    %402 = vector.broadcast %10 : vector<1x256xf32> to vector<8x256xf32>
    %403 = arith.mulf %401, %402 : vector<8x256xf32>
    %404 = arith.addf %399, %403 : vector<8x256xf32>
    %405 = vector.extract_strided_slice %385 {offsets = [0, 3], sizes = [8, 1], strides = [1, 1]} : vector<8x8xf32> to vector<8x1xf32>
    %406 = vector.broadcast %405 : vector<8x1xf32> to vector<8x256xf32>
    %407 = vector.broadcast %11 : vector<1x256xf32> to vector<8x256xf32>
    %408 = arith.mulf %406, %407 : vector<8x256xf32>
    %409 = arith.addf %404, %408 : vector<8x256xf32>
    %410 = vector.extract_strided_slice %385 {offsets = [0, 4], sizes = [8, 1], strides = [1, 1]} : vector<8x8xf32> to vector<8x1xf32>
    %411 = vector.broadcast %410 : vector<8x1xf32> to vector<8x256xf32>
    %412 = vector.broadcast %12 : vector<1x256xf32> to vector<8x256xf32>
    %413 = arith.mulf %411, %412 : vector<8x256xf32>
    %414 = arith.addf %409, %413 : vector<8x256xf32>
    %415 = vector.extract_strided_slice %385 {offsets = [0, 5], sizes = [8, 1], strides = [1, 1]} : vector<8x8xf32> to vector<8x1xf32>
    %416 = vector.broadcast %415 : vector<8x1xf32> to vector<8x256xf32>
    %417 = vector.broadcast %13 : vector<1x256xf32> to vector<8x256xf32>
    %418 = arith.mulf %416, %417 : vector<8x256xf32>
    %419 = arith.addf %414, %418 : vector<8x256xf32>
    %420 = vector.extract_strided_slice %385 {offsets = [0, 6], sizes = [8, 1], strides = [1, 1]} : vector<8x8xf32> to vector<8x1xf32>
    %421 = vector.broadcast %420 : vector<8x1xf32> to vector<8x256xf32>
    %422 = vector.broadcast %14 : vector<1x256xf32> to vector<8x256xf32>
    %423 = arith.mulf %421, %422 : vector<8x256xf32>
    %424 = arith.addf %419, %423 : vector<8x256xf32>
    %425 = vector.extract_strided_slice %385 {offsets = [0, 7], sizes = [8, 1], strides = [1, 1]} : vector<8x8xf32> to vector<8x1xf32>
    %426 = vector.broadcast %425 : vector<8x1xf32> to vector<8x256xf32>
    %427 = vector.broadcast %15 : vector<1x256xf32> to vector<8x256xf32>
    %428 = arith.mulf %426, %427 : vector<8x256xf32>
    %429 = arith.addf %424, %428 : vector<8x256xf32>
    %430 = math.exp %429 : vector<8x256xf32>
    %cst_138 = arith.constant 1.000000e+00 : f32
    %431 = vector.broadcast %cst_138 : f32 to vector<8x256xf32>
    %432 = arith.addf %431, %430 : vector<8x256xf32>
    %cst_139 = arith.constant 1.000000e+00 : f32
    %433 = vector.broadcast %cst_139 : f32 to vector<8x256xf32>
    %434 = arith.addf %433, %430 : vector<8x256xf32>
    %435 = arith.mulf %432, %434 : vector<8x256xf32>
    %cst_140 = arith.constant 1.000000e+00 : f32
    %436 = vector.broadcast %cst_140 : f32 to vector<8x256xf32>
    %437 = arith.addf %435, %436 : vector<8x256xf32>
    %438 = tpu.reciprocal %437 {approx = true} : vector<8x256xf32> -> vector<8x256xf32>
    %cst_141 = arith.constant 2.000000e+00 : f32
    %439 = vector.broadcast %cst_141 : f32 to vector<8x256xf32>
    %440 = arith.mulf %439, %438 : vector<8x256xf32>
    %cst_142 = arith.constant 1.000000e+00 : f32
    %441 = vector.broadcast %cst_142 : f32 to vector<8x256xf32>
    %442 = arith.subf %441, %440 : vector<8x256xf32>
    %443 = arith.mulf %429, %442 : vector<8x256xf32>
    %444 = arith.truncf %443 : vector<8x256xf32> to vector<8x256xbf16>
    %c0_143 = arith.constant 0 : index
    %c0_144 = arith.constant 0 : index
    %445 = vector.load %arg7[%c0_143, %c0_144] : memref<256x256xbf16, #tpu.memory_space<vmem>>, vector<256x256xbf16>
    %cst_145 = arith.constant dense<0.000000e+00> : vector<8x256xf32>
    %446 = tpu.matmul %444, %445, %cst_145 {dimension_numbers = #tpu.dot_dimension_numbers<[1], [0], [0], [1], [0, 0, 1, 1], [], []>} : vector<8x256xbf16>, vector<256x256xbf16>, vector<8x256xf32> -> vector<8x256xf32>
    %c0_146 = arith.constant 0 : index
    %c0_147 = arith.constant 0 : index
    %447 = vector.load %arg8[%c0_146, %c0_147] : memref<1x256xf32, #tpu.memory_space<vmem>>, vector<1x256xf32>
    %448 = vector.broadcast %447 : vector<1x256xf32> to vector<8x256xf32>
    %449 = arith.addf %446, %448 : vector<8x256xf32>
    %450 = math.exp %449 : vector<8x256xf32>
    %cst_148 = arith.constant 1.000000e+00 : f32
    %451 = vector.broadcast %cst_148 : f32 to vector<8x256xf32>
    %452 = arith.addf %451, %450 : vector<8x256xf32>
    %cst_149 = arith.constant 1.000000e+00 : f32
    %453 = vector.broadcast %cst_149 : f32 to vector<8x256xf32>
    %454 = arith.addf %453, %450 : vector<8x256xf32>
    %455 = arith.mulf %452, %454 : vector<8x256xf32>
    %cst_150 = arith.constant 1.000000e+00 : f32
    %456 = vector.broadcast %cst_150 : f32 to vector<8x256xf32>
    %457 = arith.addf %455, %456 : vector<8x256xf32>
    %458 = tpu.reciprocal %457 {approx = true} : vector<8x256xf32> -> vector<8x256xf32>
    %cst_151 = arith.constant 2.000000e+00 : f32
    %459 = vector.broadcast %cst_151 : f32 to vector<8x256xf32>
    %460 = arith.mulf %459, %458 : vector<8x256xf32>
    %cst_152 = arith.constant 1.000000e+00 : f32
    %461 = vector.broadcast %cst_152 : f32 to vector<8x256xf32>
    %462 = arith.subf %461, %460 : vector<8x256xf32>
    %463 = arith.mulf %449, %462 : vector<8x256xf32>
    %464 = arith.truncf %463 : vector<8x256xf32> to vector<8x256xbf16>
    %c0_153 = arith.constant 0 : index
    %c0_154 = arith.constant 0 : index
    %465 = vector.load %arg9[%c0_153, %c0_154] : memref<256x256xbf16, #tpu.memory_space<vmem>>, vector<256x256xbf16>
    %cst_155 = arith.constant dense<0.000000e+00> : vector<8x256xf32>
    %466 = tpu.matmul %464, %465, %cst_155 {dimension_numbers = #tpu.dot_dimension_numbers<[1], [0], [0], [1], [0, 0, 1, 1], [], []>} : vector<8x256xbf16>, vector<256x256xbf16>, vector<8x256xf32> -> vector<8x256xf32>
    %c0_156 = arith.constant 0 : index
    %c0_157 = arith.constant 0 : index
    %467 = vector.load %arg10[%c0_156, %c0_157] : memref<1x256xf32, #tpu.memory_space<vmem>>, vector<1x256xf32>
    %468 = vector.broadcast %467 : vector<1x256xf32> to vector<8x256xf32>
    %469 = arith.addf %466, %468 : vector<8x256xf32>
    %470 = math.exp %469 : vector<8x256xf32>
    %cst_158 = arith.constant 1.000000e+00 : f32
    %471 = vector.broadcast %cst_158 : f32 to vector<8x256xf32>
    %472 = arith.addf %471, %470 : vector<8x256xf32>
    %cst_159 = arith.constant 1.000000e+00 : f32
    %473 = vector.broadcast %cst_159 : f32 to vector<8x256xf32>
    %474 = arith.addf %473, %470 : vector<8x256xf32>
    %475 = arith.mulf %472, %474 : vector<8x256xf32>
    %cst_160 = arith.constant 1.000000e+00 : f32
    %476 = vector.broadcast %cst_160 : f32 to vector<8x256xf32>
    %477 = arith.addf %475, %476 : vector<8x256xf32>
    %478 = tpu.reciprocal %477 {approx = true} : vector<8x256xf32> -> vector<8x256xf32>
    %cst_161 = arith.constant 2.000000e+00 : f32
    %479 = vector.broadcast %cst_161 : f32 to vector<8x256xf32>
    %480 = arith.mulf %479, %478 : vector<8x256xf32>
    %cst_162 = arith.constant 1.000000e+00 : f32
    %481 = vector.broadcast %cst_162 : f32 to vector<8x256xf32>
    %482 = arith.subf %481, %480 : vector<8x256xf32>
    %483 = arith.mulf %469, %482 : vector<8x256xf32>
    %484 = arith.truncf %483 : vector<8x256xf32> to vector<8x256xbf16>
    %c0_163 = arith.constant 0 : index
    %c0_164 = arith.constant 0 : index
    %485 = vector.load %arg11[%c0_163, %c0_164] : memref<256x8xbf16, #tpu.memory_space<vmem>>, vector<256x8xbf16>
    %cst_165 = arith.constant dense<0.000000e+00> : vector<8x8xf32>
    %486 = tpu.matmul %484, %485, %cst_165 {dimension_numbers = #tpu.dot_dimension_numbers<[1], [0], [0], [1], [0, 0, 1, 1], [], []>} : vector<8x256xbf16>, vector<256x8xbf16>, vector<8x8xf32> -> vector<8x8xf32>
    %c0_166 = arith.constant 0 : index
    %c0_167 = arith.constant 0 : index
    %487 = vector.load %arg12[%c0_166, %c0_167] : memref<1x8xf32, #tpu.memory_space<vmem>>, vector<1x8xf32>
    %488 = vector.broadcast %487 : vector<1x8xf32> to vector<8x8xf32>
    %489 = arith.addf %486, %488 : vector<8x8xf32>
    %cst_168 = arith.constant 1.90360606 : f32
    %490 = vector.broadcast %cst_168 : f32 to vector<8x8xf32>
    %491 = arith.mulf %490, %385 : vector<8x8xf32>
    %cst_169 = arith.constant 1.61978889 : f32
    %492 = vector.broadcast %cst_169 : f32 to vector<8x8xf32>
    %493 = arith.mulf %492, %489 : vector<8x8xf32>
    %494 = arith.subf %491, %493 : vector<8x8xf32>
    %cst_170 = arith.constant -1.000000e+00 : f32
    %cst_171 = arith.constant 1.000000e+00 : f32
    %495 = vector.broadcast %cst_170 : f32 to vector<8x8xf32>
    %496 = arith.maximumf %495, %494 : vector<8x8xf32>
    %497 = vector.broadcast %cst_171 : f32 to vector<8x8xf32>
    %498 = arith.minimumf %497, %496 : vector<8x8xf32>
    %cst_172 = arith.constant 0.521520853 : f32
    %499 = vector.broadcast %cst_172 : f32 to vector<8x8xf32>
    %500 = arith.mulf %499, %498 : vector<8x8xf32>
    %cst_173 = arith.constant 0.429256827 : f32
    %501 = vector.broadcast %cst_173 : f32 to vector<8x8xf32>
    %502 = arith.mulf %501, %385 : vector<8x8xf32>
    %503 = arith.addf %500, %502 : vector<8x8xf32>
    %c3_174 = arith.constant 3 : index
    %c0_175 = arith.constant 0 : index
    %c0_176 = arith.constant 0 : index
    %504 = vector.load %arg2[%c3_174, %c0_175, %c0_176] : memref<6x8x8xf32, #tpu.memory_space<vmem>>, vector<1x8x8xf32>
    %505 = vector.shape_cast %504 : vector<1x8x8xf32> to vector<8x8xf32>
    %cst_177 = arith.constant 0.555474758 : f32
    %506 = vector.broadcast %cst_177 : f32 to vector<8x8xf32>
    %507 = arith.mulf %506, %505 : vector<8x8xf32>
    %508 = arith.addf %503, %507 : vector<8x8xf32>
    %c4 = arith.constant 4 : index
    %c0_178 = arith.constant 0 : index
    %c0_179 = arith.constant 0 : index
    %509 = vector.load %arg3[%c4, %c0_178, %c0_179] : memref<6x1x256xf32, #tpu.memory_space<vmem>>, vector<1x1x256xf32>
    %510 = vector.shape_cast %509 : vector<1x1x256xf32> to vector<1x256xf32>
    %511 = vector.broadcast %510 : vector<1x256xf32> to vector<8x256xf32>
    %512 = arith.addf %6, %511 : vector<8x256xf32>
    %513 = vector.extract_strided_slice %508 {offsets = [0, 0], sizes = [8, 1], strides = [1, 1]} : vector<8x8xf32> to vector<8x1xf32>
    %514 = vector.broadcast %513 : vector<8x1xf32> to vector<8x256xf32>
    %515 = vector.broadcast %8 : vector<1x256xf32> to vector<8x256xf32>
    %516 = arith.mulf %514, %515 : vector<8x256xf32>
    %517 = arith.addf %512, %516 : vector<8x256xf32>
    %518 = vector.extract_strided_slice %508 {offsets = [0, 1], sizes = [8, 1], strides = [1, 1]} : vector<8x8xf32> to vector<8x1xf32>
    %519 = vector.broadcast %518 : vector<8x1xf32> to vector<8x256xf32>
    %520 = vector.broadcast %9 : vector<1x256xf32> to vector<8x256xf32>
    %521 = arith.mulf %519, %520 : vector<8x256xf32>
    %522 = arith.addf %517, %521 : vector<8x256xf32>
    %523 = vector.extract_strided_slice %508 {offsets = [0, 2], sizes = [8, 1], strides = [1, 1]} : vector<8x8xf32> to vector<8x1xf32>
    %524 = vector.broadcast %523 : vector<8x1xf32> to vector<8x256xf32>
    %525 = vector.broadcast %10 : vector<1x256xf32> to vector<8x256xf32>
    %526 = arith.mulf %524, %525 : vector<8x256xf32>
    %527 = arith.addf %522, %526 : vector<8x256xf32>
    %528 = vector.extract_strided_slice %508 {offsets = [0, 3], sizes = [8, 1], strides = [1, 1]} : vector<8x8xf32> to vector<8x1xf32>
    %529 = vector.broadcast %528 : vector<8x1xf32> to vector<8x256xf32>
    %530 = vector.broadcast %11 : vector<1x256xf32> to vector<8x256xf32>
    %531 = arith.mulf %529, %530 : vector<8x256xf32>
    %532 = arith.addf %527, %531 : vector<8x256xf32>
    %533 = vector.extract_strided_slice %508 {offsets = [0, 4], sizes = [8, 1], strides = [1, 1]} : vector<8x8xf32> to vector<8x1xf32>
    %534 = vector.broadcast %533 : vector<8x1xf32> to vector<8x256xf32>
    %535 = vector.broadcast %12 : vector<1x256xf32> to vector<8x256xf32>
    %536 = arith.mulf %534, %535 : vector<8x256xf32>
    %537 = arith.addf %532, %536 : vector<8x256xf32>
    %538 = vector.extract_strided_slice %508 {offsets = [0, 5], sizes = [8, 1], strides = [1, 1]} : vector<8x8xf32> to vector<8x1xf32>
    %539 = vector.broadcast %538 : vector<8x1xf32> to vector<8x256xf32>
    %540 = vector.broadcast %13 : vector<1x256xf32> to vector<8x256xf32>
    %541 = arith.mulf %539, %540 : vector<8x256xf32>
    %542 = arith.addf %537, %541 : vector<8x256xf32>
    %543 = vector.extract_strided_slice %508 {offsets = [0, 6], sizes = [8, 1], strides = [1, 1]} : vector<8x8xf32> to vector<8x1xf32>
    %544 = vector.broadcast %543 : vector<8x1xf32> to vector<8x256xf32>
    %545 = vector.broadcast %14 : vector<1x256xf32> to vector<8x256xf32>
    %546 = arith.mulf %544, %545 : vector<8x256xf32>
    %547 = arith.addf %542, %546 : vector<8x256xf32>
    %548 = vector.extract_strided_slice %508 {offsets = [0, 7], sizes = [8, 1], strides = [1, 1]} : vector<8x8xf32> to vector<8x1xf32>
    %549 = vector.broadcast %548 : vector<8x1xf32> to vector<8x256xf32>
    %550 = vector.broadcast %15 : vector<1x256xf32> to vector<8x256xf32>
    %551 = arith.mulf %549, %550 : vector<8x256xf32>
    %552 = arith.addf %547, %551 : vector<8x256xf32>
    %553 = math.exp %552 : vector<8x256xf32>
    %cst_180 = arith.constant 1.000000e+00 : f32
    %554 = vector.broadcast %cst_180 : f32 to vector<8x256xf32>
    %555 = arith.addf %554, %553 : vector<8x256xf32>
    %cst_181 = arith.constant 1.000000e+00 : f32
    %556 = vector.broadcast %cst_181 : f32 to vector<8x256xf32>
    %557 = arith.addf %556, %553 : vector<8x256xf32>
    %558 = arith.mulf %555, %557 : vector<8x256xf32>
    %cst_182 = arith.constant 1.000000e+00 : f32
    %559 = vector.broadcast %cst_182 : f32 to vector<8x256xf32>
    %560 = arith.addf %558, %559 : vector<8x256xf32>
    %561 = tpu.reciprocal %560 {approx = true} : vector<8x256xf32> -> vector<8x256xf32>
    %cst_183 = arith.constant 2.000000e+00 : f32
    %562 = vector.broadcast %cst_183 : f32 to vector<8x256xf32>
    %563 = arith.mulf %562, %561 : vector<8x256xf32>
    %cst_184 = arith.constant 1.000000e+00 : f32
    %564 = vector.broadcast %cst_184 : f32 to vector<8x256xf32>
    %565 = arith.subf %564, %563 : vector<8x256xf32>
    %566 = arith.mulf %552, %565 : vector<8x256xf32>
    %567 = arith.truncf %566 : vector<8x256xf32> to vector<8x256xbf16>
    %c0_185 = arith.constant 0 : index
    %c0_186 = arith.constant 0 : index
    %568 = vector.load %arg7[%c0_185, %c0_186] : memref<256x256xbf16, #tpu.memory_space<vmem>>, vector<256x256xbf16>
    %cst_187 = arith.constant dense<0.000000e+00> : vector<8x256xf32>
    %569 = tpu.matmul %567, %568, %cst_187 {dimension_numbers = #tpu.dot_dimension_numbers<[1], [0], [0], [1], [0, 0, 1, 1], [], []>} : vector<8x256xbf16>, vector<256x256xbf16>, vector<8x256xf32> -> vector<8x256xf32>
    %c0_188 = arith.constant 0 : index
    %c0_189 = arith.constant 0 : index
    %570 = vector.load %arg8[%c0_188, %c0_189] : memref<1x256xf32, #tpu.memory_space<vmem>>, vector<1x256xf32>
    %571 = vector.broadcast %570 : vector<1x256xf32> to vector<8x256xf32>
    %572 = arith.addf %569, %571 : vector<8x256xf32>
    %573 = math.exp %572 : vector<8x256xf32>
    %cst_190 = arith.constant 1.000000e+00 : f32
    %574 = vector.broadcast %cst_190 : f32 to vector<8x256xf32>
    %575 = arith.addf %574, %573 : vector<8x256xf32>
    %cst_191 = arith.constant 1.000000e+00 : f32
    %576 = vector.broadcast %cst_191 : f32 to vector<8x256xf32>
    %577 = arith.addf %576, %573 : vector<8x256xf32>
    %578 = arith.mulf %575, %577 : vector<8x256xf32>
    %cst_192 = arith.constant 1.000000e+00 : f32
    %579 = vector.broadcast %cst_192 : f32 to vector<8x256xf32>
    %580 = arith.addf %578, %579 : vector<8x256xf32>
    %581 = tpu.reciprocal %580 {approx = true} : vector<8x256xf32> -> vector<8x256xf32>
    %cst_193 = arith.constant 2.000000e+00 : f32
    %582 = vector.broadcast %cst_193 : f32 to vector<8x256xf32>
    %583 = arith.mulf %582, %581 : vector<8x256xf32>
    %cst_194 = arith.constant 1.000000e+00 : f32
    %584 = vector.broadcast %cst_194 : f32 to vector<8x256xf32>
    %585 = arith.subf %584, %583 : vector<8x256xf32>
    %586 = arith.mulf %572, %585 : vector<8x256xf32>
    %587 = arith.truncf %586 : vector<8x256xf32> to vector<8x256xbf16>
    %c0_195 = arith.constant 0 : index
    %c0_196 = arith.constant 0 : index
    %588 = vector.load %arg9[%c0_195, %c0_196] : memref<256x256xbf16, #tpu.memory_space<vmem>>, vector<256x256xbf16>
    %cst_197 = arith.constant dense<0.000000e+00> : vector<8x256xf32>
    %589 = tpu.matmul %587, %588, %cst_197 {dimension_numbers = #tpu.dot_dimension_numbers<[1], [0], [0], [1], [0, 0, 1, 1], [], []>} : vector<8x256xbf16>, vector<256x256xbf16>, vector<8x256xf32> -> vector<8x256xf32>
    %c0_198 = arith.constant 0 : index
    %c0_199 = arith.constant 0 : index
    %590 = vector.load %arg10[%c0_198, %c0_199] : memref<1x256xf32, #tpu.memory_space<vmem>>, vector<1x256xf32>
    %591 = vector.broadcast %590 : vector<1x256xf32> to vector<8x256xf32>
    %592 = arith.addf %589, %591 : vector<8x256xf32>
    %593 = math.exp %592 : vector<8x256xf32>
    %cst_200 = arith.constant 1.000000e+00 : f32
    %594 = vector.broadcast %cst_200 : f32 to vector<8x256xf32>
    %595 = arith.addf %594, %593 : vector<8x256xf32>
    %cst_201 = arith.constant 1.000000e+00 : f32
    %596 = vector.broadcast %cst_201 : f32 to vector<8x256xf32>
    %597 = arith.addf %596, %593 : vector<8x256xf32>
    %598 = arith.mulf %595, %597 : vector<8x256xf32>
    %cst_202 = arith.constant 1.000000e+00 : f32
    %599 = vector.broadcast %cst_202 : f32 to vector<8x256xf32>
    %600 = arith.addf %598, %599 : vector<8x256xf32>
    %601 = tpu.reciprocal %600 {approx = true} : vector<8x256xf32> -> vector<8x256xf32>
    %cst_203 = arith.constant 2.000000e+00 : f32
    %602 = vector.broadcast %cst_203 : f32 to vector<8x256xf32>
    %603 = arith.mulf %602, %601 : vector<8x256xf32>
    %cst_204 = arith.constant 1.000000e+00 : f32
    %604 = vector.broadcast %cst_204 : f32 to vector<8x256xf32>
    %605 = arith.subf %604, %603 : vector<8x256xf32>
    %606 = arith.mulf %592, %605 : vector<8x256xf32>
    %607 = arith.truncf %606 : vector<8x256xf32> to vector<8x256xbf16>
    %c0_205 = arith.constant 0 : index
    %c0_206 = arith.constant 0 : index
    %608 = vector.load %arg11[%c0_205, %c0_206] : memref<256x8xbf16, #tpu.memory_space<vmem>>, vector<256x8xbf16>
    %cst_207 = arith.constant dense<0.000000e+00> : vector<8x8xf32>
    %609 = tpu.matmul %607, %608, %cst_207 {dimension_numbers = #tpu.dot_dimension_numbers<[1], [0], [0], [1], [0, 0, 1, 1], [], []>} : vector<8x256xbf16>, vector<256x8xbf16>, vector<8x8xf32> -> vector<8x8xf32>
    %c0_208 = arith.constant 0 : index
    %c0_209 = arith.constant 0 : index
    %610 = vector.load %arg12[%c0_208, %c0_209] : memref<1x8xf32, #tpu.memory_space<vmem>>, vector<1x8xf32>
    %611 = vector.broadcast %610 : vector<1x8xf32> to vector<8x8xf32>
    %612 = arith.addf %609, %611 : vector<8x8xf32>
    %cst_210 = arith.constant 1.33865678 : f32
    %613 = vector.broadcast %cst_210 : f32 to vector<8x8xf32>
    %614 = arith.mulf %613, %508 : vector<8x8xf32>
    %cst_211 = arith.constant 0.889944851 : f32
    %615 = vector.broadcast %cst_211 : f32 to vector<8x8xf32>
    %616 = arith.mulf %615, %612 : vector<8x8xf32>
    %617 = arith.subf %614, %616 : vector<8x8xf32>
    %cst_212 = arith.constant -1.000000e+00 : f32
    %cst_213 = arith.constant 1.000000e+00 : f32
    %618 = vector.broadcast %cst_212 : f32 to vector<8x8xf32>
    %619 = arith.maximumf %618, %617 : vector<8x8xf32>
    %620 = vector.broadcast %cst_213 : f32 to vector<8x8xf32>
    %621 = arith.minimumf %620, %619 : vector<8x8xf32>
    %cst_214 = arith.constant 0.730965435 : f32
    %622 = vector.broadcast %cst_214 : f32 to vector<8x8xf32>
    %623 = arith.mulf %622, %621 : vector<8x8xf32>
    %cst_215 = arith.constant 0.260833591 : f32
    %624 = vector.broadcast %cst_215 : f32 to vector<8x8xf32>
    %625 = arith.mulf %624, %508 : vector<8x8xf32>
    %626 = arith.addf %623, %625 : vector<8x8xf32>
    %c4_216 = arith.constant 4 : index
    %c0_217 = arith.constant 0 : index
    %c0_218 = arith.constant 0 : index
    %627 = vector.load %arg2[%c4_216, %c0_217, %c0_218] : memref<6x8x8xf32, #tpu.memory_space<vmem>>, vector<1x8x8xf32>
    %628 = vector.shape_cast %627 : vector<1x8x8xf32> to vector<8x8xf32>
    %cst_219 = arith.constant 0.335860282 : f32
    %629 = vector.broadcast %cst_219 : f32 to vector<8x8xf32>
    %630 = arith.mulf %629, %628 : vector<8x8xf32>
    %631 = arith.addf %626, %630 : vector<8x8xf32>
    %c5 = arith.constant 5 : index
    %c0_220 = arith.constant 0 : index
    %c0_221 = arith.constant 0 : index
    %632 = vector.load %arg3[%c5, %c0_220, %c0_221] : memref<6x1x256xf32, #tpu.memory_space<vmem>>, vector<1x1x256xf32>
    %633 = vector.shape_cast %632 : vector<1x1x256xf32> to vector<1x256xf32>
    %634 = vector.broadcast %633 : vector<1x256xf32> to vector<8x256xf32>
    %635 = arith.addf %6, %634 : vector<8x256xf32>
    %636 = vector.extract_strided_slice %631 {offsets = [0, 0], sizes = [8, 1], strides = [1, 1]} : vector<8x8xf32> to vector<8x1xf32>
    %637 = vector.broadcast %636 : vector<8x1xf32> to vector<8x256xf32>
    %638 = vector.broadcast %8 : vector<1x256xf32> to vector<8x256xf32>
    %639 = arith.mulf %637, %638 : vector<8x256xf32>
    %640 = arith.addf %635, %639 : vector<8x256xf32>
    %641 = vector.extract_strided_slice %631 {offsets = [0, 1], sizes = [8, 1], strides = [1, 1]} : vector<8x8xf32> to vector<8x1xf32>
    %642 = vector.broadcast %641 : vector<8x1xf32> to vector<8x256xf32>
    %643 = vector.broadcast %9 : vector<1x256xf32> to vector<8x256xf32>
    %644 = arith.mulf %642, %643 : vector<8x256xf32>
    %645 = arith.addf %640, %644 : vector<8x256xf32>
    %646 = vector.extract_strided_slice %631 {offsets = [0, 2], sizes = [8, 1], strides = [1, 1]} : vector<8x8xf32> to vector<8x1xf32>
    %647 = vector.broadcast %646 : vector<8x1xf32> to vector<8x256xf32>
    %648 = vector.broadcast %10 : vector<1x256xf32> to vector<8x256xf32>
    %649 = arith.mulf %647, %648 : vector<8x256xf32>
    %650 = arith.addf %645, %649 : vector<8x256xf32>
    %651 = vector.extract_strided_slice %631 {offsets = [0, 3], sizes = [8, 1], strides = [1, 1]} : vector<8x8xf32> to vector<8x1xf32>
    %652 = vector.broadcast %651 : vector<8x1xf32> to vector<8x256xf32>
    %653 = vector.broadcast %11 : vector<1x256xf32> to vector<8x256xf32>
    %654 = arith.mulf %652, %653 : vector<8x256xf32>
    %655 = arith.addf %650, %654 : vector<8x256xf32>
    %656 = vector.extract_strided_slice %631 {offsets = [0, 4], sizes = [8, 1], strides = [1, 1]} : vector<8x8xf32> to vector<8x1xf32>
    %657 = vector.broadcast %656 : vector<8x1xf32> to vector<8x256xf32>
    %658 = vector.broadcast %12 : vector<1x256xf32> to vector<8x256xf32>
    %659 = arith.mulf %657, %658 : vector<8x256xf32>
    %660 = arith.addf %655, %659 : vector<8x256xf32>
    %661 = vector.extract_strided_slice %631 {offsets = [0, 5], sizes = [8, 1], strides = [1, 1]} : vector<8x8xf32> to vector<8x1xf32>
    %662 = vector.broadcast %661 : vector<8x1xf32> to vector<8x256xf32>
    %663 = vector.broadcast %13 : vector<1x256xf32> to vector<8x256xf32>
    %664 = arith.mulf %662, %663 : vector<8x256xf32>
    %665 = arith.addf %660, %664 : vector<8x256xf32>
    %666 = vector.extract_strided_slice %631 {offsets = [0, 6], sizes = [8, 1], strides = [1, 1]} : vector<8x8xf32> to vector<8x1xf32>
    %667 = vector.broadcast %666 : vector<8x1xf32> to vector<8x256xf32>
    %668 = vector.broadcast %14 : vector<1x256xf32> to vector<8x256xf32>
    %669 = arith.mulf %667, %668 : vector<8x256xf32>
    %670 = arith.addf %665, %669 : vector<8x256xf32>
    %671 = vector.extract_strided_slice %631 {offsets = [0, 7], sizes = [8, 1], strides = [1, 1]} : vector<8x8xf32> to vector<8x1xf32>
    %672 = vector.broadcast %671 : vector<8x1xf32> to vector<8x256xf32>
    %673 = vector.broadcast %15 : vector<1x256xf32> to vector<8x256xf32>
    %674 = arith.mulf %672, %673 : vector<8x256xf32>
    %675 = arith.addf %670, %674 : vector<8x256xf32>
    %676 = math.exp %675 : vector<8x256xf32>
    %cst_222 = arith.constant 1.000000e+00 : f32
    %677 = vector.broadcast %cst_222 : f32 to vector<8x256xf32>
    %678 = arith.addf %677, %676 : vector<8x256xf32>
    %cst_223 = arith.constant 1.000000e+00 : f32
    %679 = vector.broadcast %cst_223 : f32 to vector<8x256xf32>
    %680 = arith.addf %679, %676 : vector<8x256xf32>
    %681 = arith.mulf %678, %680 : vector<8x256xf32>
    %cst_224 = arith.constant 1.000000e+00 : f32
    %682 = vector.broadcast %cst_224 : f32 to vector<8x256xf32>
    %683 = arith.addf %681, %682 : vector<8x256xf32>
    %684 = tpu.reciprocal %683 {approx = true} : vector<8x256xf32> -> vector<8x256xf32>
    %cst_225 = arith.constant 2.000000e+00 : f32
    %685 = vector.broadcast %cst_225 : f32 to vector<8x256xf32>
    %686 = arith.mulf %685, %684 : vector<8x256xf32>
    %cst_226 = arith.constant 1.000000e+00 : f32
    %687 = vector.broadcast %cst_226 : f32 to vector<8x256xf32>
    %688 = arith.subf %687, %686 : vector<8x256xf32>
    %689 = arith.mulf %675, %688 : vector<8x256xf32>
    %690 = arith.truncf %689 : vector<8x256xf32> to vector<8x256xbf16>
    %c0_227 = arith.constant 0 : index
    %c0_228 = arith.constant 0 : index
    %691 = vector.load %arg7[%c0_227, %c0_228] : memref<256x256xbf16, #tpu.memory_space<vmem>>, vector<256x256xbf16>
    %cst_229 = arith.constant dense<0.000000e+00> : vector<8x256xf32>
    %692 = tpu.matmul %690, %691, %cst_229 {dimension_numbers = #tpu.dot_dimension_numbers<[1], [0], [0], [1], [0, 0, 1, 1], [], []>} : vector<8x256xbf16>, vector<256x256xbf16>, vector<8x256xf32> -> vector<8x256xf32>
    %c0_230 = arith.constant 0 : index
    %c0_231 = arith.constant 0 : index
    %693 = vector.load %arg8[%c0_230, %c0_231] : memref<1x256xf32, #tpu.memory_space<vmem>>, vector<1x256xf32>
    %694 = vector.broadcast %693 : vector<1x256xf32> to vector<8x256xf32>
    %695 = arith.addf %692, %694 : vector<8x256xf32>
    %696 = math.exp %695 : vector<8x256xf32>
    %cst_232 = arith.constant 1.000000e+00 : f32
    %697 = vector.broadcast %cst_232 : f32 to vector<8x256xf32>
    %698 = arith.addf %697, %696 : vector<8x256xf32>
    %cst_233 = arith.constant 1.000000e+00 : f32
    %699 = vector.broadcast %cst_233 : f32 to vector<8x256xf32>
    %700 = arith.addf %699, %696 : vector<8x256xf32>
    %701 = arith.mulf %698, %700 : vector<8x256xf32>
    %cst_234 = arith.constant 1.000000e+00 : f32
    %702 = vector.broadcast %cst_234 : f32 to vector<8x256xf32>
    %703 = arith.addf %701, %702 : vector<8x256xf32>
    %704 = tpu.reciprocal %703 {approx = true} : vector<8x256xf32> -> vector<8x256xf32>
    %cst_235 = arith.constant 2.000000e+00 : f32
    %705 = vector.broadcast %cst_235 : f32 to vector<8x256xf32>
    %706 = arith.mulf %705, %704 : vector<8x256xf32>
    %cst_236 = arith.constant 1.000000e+00 : f32
    %707 = vector.broadcast %cst_236 : f32 to vector<8x256xf32>
    %708 = arith.subf %707, %706 : vector<8x256xf32>
    %709 = arith.mulf %695, %708 : vector<8x256xf32>
    %710 = arith.truncf %709 : vector<8x256xf32> to vector<8x256xbf16>
    %c0_237 = arith.constant 0 : index
    %c0_238 = arith.constant 0 : index
    %711 = vector.load %arg9[%c0_237, %c0_238] : memref<256x256xbf16, #tpu.memory_space<vmem>>, vector<256x256xbf16>
    %cst_239 = arith.constant dense<0.000000e+00> : vector<8x256xf32>
    %712 = tpu.matmul %710, %711, %cst_239 {dimension_numbers = #tpu.dot_dimension_numbers<[1], [0], [0], [1], [0, 0, 1, 1], [], []>} : vector<8x256xbf16>, vector<256x256xbf16>, vector<8x256xf32> -> vector<8x256xf32>
    %c0_240 = arith.constant 0 : index
    %c0_241 = arith.constant 0 : index
    %713 = vector.load %arg10[%c0_240, %c0_241] : memref<1x256xf32, #tpu.memory_space<vmem>>, vector<1x256xf32>
    %714 = vector.broadcast %713 : vector<1x256xf32> to vector<8x256xf32>
    %715 = arith.addf %712, %714 : vector<8x256xf32>
    %716 = math.exp %715 : vector<8x256xf32>
    %cst_242 = arith.constant 1.000000e+00 : f32
    %717 = vector.broadcast %cst_242 : f32 to vector<8x256xf32>
    %718 = arith.addf %717, %716 : vector<8x256xf32>
    %cst_243 = arith.constant 1.000000e+00 : f32
    %719 = vector.broadcast %cst_243 : f32 to vector<8x256xf32>
    %720 = arith.addf %719, %716 : vector<8x256xf32>
    %721 = arith.mulf %718, %720 : vector<8x256xf32>
    %cst_244 = arith.constant 1.000000e+00 : f32
    %722 = vector.broadcast %cst_244 : f32 to vector<8x256xf32>
    %723 = arith.addf %721, %722 : vector<8x256xf32>
    %724 = tpu.reciprocal %723 {approx = true} : vector<8x256xf32> -> vector<8x256xf32>
    %cst_245 = arith.constant 2.000000e+00 : f32
    %725 = vector.broadcast %cst_245 : f32 to vector<8x256xf32>
    %726 = arith.mulf %725, %724 : vector<8x256xf32>
    %cst_246 = arith.constant 1.000000e+00 : f32
    %727 = vector.broadcast %cst_246 : f32 to vector<8x256xf32>
    %728 = arith.subf %727, %726 : vector<8x256xf32>
    %729 = arith.mulf %715, %728 : vector<8x256xf32>
    %730 = arith.truncf %729 : vector<8x256xf32> to vector<8x256xbf16>
    %c0_247 = arith.constant 0 : index
    %c0_248 = arith.constant 0 : index
    %731 = vector.load %arg11[%c0_247, %c0_248] : memref<256x8xbf16, #tpu.memory_space<vmem>>, vector<256x8xbf16>
    %cst_249 = arith.constant dense<0.000000e+00> : vector<8x8xf32>
    %732 = tpu.matmul %730, %731, %cst_249 {dimension_numbers = #tpu.dot_dimension_numbers<[1], [0], [0], [1], [0, 0, 1, 1], [], []>} : vector<8x256xbf16>, vector<256x8xbf16>, vector<8x8xf32> -> vector<8x8xf32>
    %c0_250 = arith.constant 0 : index
    %c0_251 = arith.constant 0 : index
    %733 = vector.load %arg12[%c0_250, %c0_251] : memref<1x8xf32, #tpu.memory_space<vmem>>, vector<1x8xf32>
    %734 = vector.broadcast %733 : vector<1x8xf32> to vector<8x8xf32>
    %735 = arith.addf %732, %734 : vector<8x8xf32>
    %cst_252 = arith.constant 1.08013213 : f32
    %736 = vector.broadcast %cst_252 : f32 to vector<8x8xf32>
    %737 = arith.mulf %736, %631 : vector<8x8xf32>
    %cst_253 = arith.constant 0.408271134 : f32
    %738 = vector.broadcast %cst_253 : f32 to vector<8x8xf32>
    %739 = arith.mulf %738, %735 : vector<8x8xf32>
    %740 = arith.subf %737, %739 : vector<8x8xf32>
    %cst_254 = arith.constant -1.000000e+00 : f32
    %cst_255 = arith.constant 1.000000e+00 : f32
    %741 = vector.broadcast %cst_254 : f32 to vector<8x8xf32>
    %742 = arith.maximumf %741, %740 : vector<8x8xf32>
    %743 = vector.broadcast %cst_255 : f32 to vector<8x8xf32>
    %744 = arith.minimumf %743, %742 : vector<8x8xf32>
    %cst_256 = arith.constant 1.000000e+00 : f32
    %745 = vector.broadcast %cst_256 : f32 to vector<8x8xf32>
    %746 = arith.mulf %745, %744 : vector<8x8xf32>
    %cst_257 = arith.constant 0.000000e+00 : f32
    %747 = vector.broadcast %cst_257 : f32 to vector<8x8xf32>
    %748 = arith.mulf %747, %631 : vector<8x8xf32>
    %749 = arith.addf %746, %748 : vector<8x8xf32>
    %cst_258 = arith.constant -1.000000e+00 : f32
    %cst_259 = arith.constant 1.000000e+00 : f32
    %750 = vector.broadcast %cst_258 : f32 to vector<8x8xf32>
    %751 = arith.maximumf %750, %749 : vector<8x8xf32>
    %752 = vector.broadcast %cst_259 : f32 to vector<8x8xf32>
    %753 = arith.minimumf %752, %751 : vector<8x8xf32>
    %c0_260 = arith.constant 0 : index
    %c0_261 = arith.constant 0 : index
    %754 = vector.load %arg13[%c0_260, %c0_261] : memref<8x8xf32, #tpu.memory_space<vmem>>, vector<8x8xf32>
    tpu.vector_store %arg13[%c0_260, %c0_261], %753 {strides = array<i32>} : memref<8x8xf32, #tpu.memory_space<vmem>>, vector<8x8xf32>,
    return
  }
}

</mosaic_0001>

<llo_original>
// kernel: tpu_custom_call.1
$region0: #{tpu_custom_call.1}
  #allocation0 [shape = 'u32[]', space=smem, size = 0x4, offset = 0x4, fixed_abs, tag = 'smem constant byte address 0x4 - core index']
  #allocation1 [shape = 'u32[144,128]{1,0:T(1,128)}', space=vmem, size = 0x12000, scoped, tag = 'internal scratch']
  %s0 = inlined_call_operand.vmem [shape: f32[8,16], index: 0, kind: input, shape index: {}]
  %s1 = inlined_call_operand.vmem [shape: f32[8,8], index: 1, kind: input, shape index: {}]
  %s2 = inlined_call_operand.vmem [shape: f32[6,8,8], index: 2, kind: input, shape index: {}]
  %s3 = inlined_call_operand.vmem [shape: f32[6,1,256], index: 3, kind: input, shape index: {}]
  %s4 = inlined_call_operand.vmem [shape: f32[8,256], index: 4, kind: input, shape index: {}]
  %s5 = inlined_call_operand.vmem [shape: bf16[16,256], index: 5, kind: input, shape index: {}]
  %s6 = inlined_call_operand.vmem [shape: f32[1,256], index: 6, kind: input, shape index: {}]
  %s7 = inlined_call_operand.hbm [shape: bf16[256,256], index: 7, kind: input, shape index: {}]
  %s8 = inlined_call_operand.vmem [shape: f32[1,256], index: 8, kind: input, shape index: {}]
  %s9 = inlined_call_operand.hbm [shape: bf16[256,256], index: 9, kind: input, shape index: {}]
  %s10 = inlined_call_operand.vmem [shape: f32[1,256], index: 10, kind: input, shape index: {}]
  %s11 = inlined_call_operand.vmem [shape: bf16[256,8], index: 11, kind: input, shape index: {}]
  %s12 = inlined_call_operand.vmem [shape: f32[1,8], index: 12, kind: input, shape index: {}]
  %s13 = inlined_call_operand.hbm [shape: f32[8,8], index: 13, kind: output, shape index: {}]
  %s14 = sld [smem:[#allocation0]]
  $region70: #{tpu_custom_call.1} parent=0
    _
  %s16 = ssub.s32 1, %s14
  %s17 = scalar_select 0, %s16, %s14
  $region1: #{tpu_custom_call.1} parent=0
    #allocation2 [shape = 'u8[131072]{0}', space=vmem, size = 0x20000, scoped, tag = 'input window, operand 7, single buffered']
    #allocation3 [shape = 's32[1]{0}', space=sflag, size = 0x4, scoped, tag = 'scoped memory for tpu_custom_call.1']
    #allocation4 [shape = 's32[1]{0}', space=sflag, size = 0x4, scoped, tag = 'scoped memory for tpu_custom_call.1']
    #allocation5 [shape = 'u8[131072]{0}', space=vmem, size = 0x20000, scoped, tag = 'input window, operand 9, single buffered']
    #allocation6 [shape = 's32[1]{0}', space=sflag, size = 0x4, scoped, tag = 'scoped memory for tpu_custom_call.1']
    #allocation7 [shape = 'u8[4096]{0}', space=vmem, size = 0x1000, scoped, tag = 'output window, operand 0, single buffered']
    %18 = vsyncpa [#allocation3], 0
    %19 = vsyncpa [#allocation6], 0
    %20 = vsyncpa [#allocation4], 0
    // Predicated region
    $region2: #{tpu_custom_call.1} parent=1 // pred_check
      _
    $region3: #{tpu_custom_call.1} parent=1 // pred_check_branch
      %22 = sbr.rel (0) target = $region5
    $region4: #{tpu_custom_call.1} parent=1 // pred_region
      _
    $region5: #{tpu_custom_call.1} parent=1 // pred_fallthru
      _
    // Predicated region
    $region6: #{tpu_custom_call.1} parent=1 // pred_check
      _
    $region7: #{tpu_custom_call.1} parent=1 // pred_check_branch
      %24 = sbr.rel (0) target = $region9
    $region8: #{tpu_custom_call.1} parent=1 // pred_region
      _
    $region9: #{tpu_custom_call.1} parent=1 // pred_fallthru
      _
    // Predicated region
    $region10: #{tpu_custom_call.1} parent=1 // pred_check
      _
    $region11: #{tpu_custom_call.1} parent=1 // pred_check_branch
      %26 = sbr.rel (0) target = $region13
    $region12: #{tpu_custom_call.1} parent=1 // pred_region
      _
    $region13: #{tpu_custom_call.1} parent=1 // pred_fallthru
      _
    // Predicated region
    $region14: #{tpu_custom_call.1} parent=1 // pred_check
      _
    $region15: #{tpu_custom_call.1} parent=1 // pred_check_branch
      %28 = sbr.rel (0) target = $region17
    $region16: #{tpu_custom_call.1} parent=1 // pred_region
      _
    $region17: #{tpu_custom_call.1} parent=1 // pred_fallthru
      _
    // Predicated region
    $region18: #{tpu_custom_call.1} parent=1 // pred_check
      _
    $region19: #{tpu_custom_call.1} parent=1 // pred_check_branch
      %30 = sbr.rel (0) target = $region21
    $region20: #{tpu_custom_call.1} parent=1 // pred_region
      _
    $region21: #{tpu_custom_call.1} parent=1 // pred_fallthru
      _
    // Predicated region
    $region22: #{tpu_custom_call.1} parent=1 // pred_check
      _
    $region23: #{tpu_custom_call.1} parent=1 // pred_check_branch
      %32 = sbr.rel (0) target = $region25
    $region24: #{tpu_custom_call.1} parent=1 // pred_region
      _
    $region25: #{tpu_custom_call.1} parent=1 // pred_fallthru
      _
    // Predicated region
    $region26: #{tpu_custom_call.1} parent=1 // pred_check
      _
    $region27: #{tpu_custom_call.1} parent=1 // pred_check_branch
      %34 = sbr.rel (0) target = $region29
    $region28: #{tpu_custom_call.1} parent=1 // pred_region
      _
    $region29: #{tpu_custom_call.1} parent=1 // pred_fallthru
      _
    // Predicated region
    $region30: #{tpu_custom_call.1} parent=1 // pred_check
      _
    $region31: #{tpu_custom_call.1} parent=1 // pred_check_branch
      %36 = sbr.rel (0) target = $region33
    $region32: #{tpu_custom_call.1} parent=1 // pred_region
      %s38 = ssub.s32 4096, 4096
      %39 = vsyncadd [#allocation3], %s38
      %s40 = sshll.u32 [#allocation2], 4
      %s41 = int_to_ptr.vmem [resolvable:$true] %s40
      %46 = dma.hbm_to_vmem [thread:$0]  %s7, 4096, %s41, [#allocation3], 128, 128, 8
    $region33: #{tpu_custom_call.1} parent=1 // pred_fallthru
      _
    // Predicated region
    $region34: #{tpu_custom_call.1} parent=1 // pred_check
      _
    $region35: #{tpu_custom_call.1} parent=1 // pred_check_branch
      %48 = sbr.rel (0) target = $region37
    $region36: #{tpu_custom_call.1} parent=1 // pred_region
      _
    $region37: #{tpu_custom_call.1} parent=1 // pred_fallthru
      _
    // Predicated region
    $region38: #{tpu_custom_call.1} parent=1 // pred_check
      _
    $region39: #{tpu_custom_call.1} parent=1 // pred_check_branch
      %50 = sbr.rel (0) target = $region41
    $region40: #{tpu_custom_call.1} parent=1 // pred_region
      %s52 = ssub.s32 4096, 4096
      %53 = vsyncadd [#allocation6], %s52
      %s54 = sshll.u32 [#allocation5], 4
      %s55 = int_to_ptr.vmem [resolvable:$true] %s54
      %60 = dma.hbm_to_vmem [thread:$0]  %s9, 4096, %s55, [#allocation6], 128, 128, 8
    $region41: #{tpu_custom_call.1} parent=1 // pred_fallthru
      _
    // Predicated region
    $region42: #{tpu_custom_call.1} parent=1 // pred_check
      _
    $region43: #{tpu_custom_call.1} parent=1 // pred_check_branch
      %62 = sbr.rel (0) target = $region45
    $region44: #{tpu_custom_call.1} parent=1 // pred_region
      _
    $region45: #{tpu_custom_call.1} parent=1 // pred_fallthru
      _
    // Predicated region
    $region46: #{tpu_custom_call.1} parent=1 // pred_check
      _
    $region47: #{tpu_custom_call.1} parent=1 // pred_check_branch
      %64 = sbr.rel (0) target = $region49
    $region48: #{tpu_custom_call.1} parent=1 // pred_region
      _
    $region49: #{tpu_custom_call.1} parent=1 // pred_fallthru
      _
    // Predicated region
    $region50: #{tpu_custom_call.1} parent=1 // pred_check
      _
    $region51: #{tpu_custom_call.1} parent=1 // pred_check_branch
      %66 = sbr.rel (0) target = $region53
    $region52: #{tpu_custom_call.1} parent=1 // pred_region
      _
    $region53: #{tpu_custom_call.1} parent=1 // pred_fallthru
      _
    // Predicated region
    $region54: #{tpu_custom_call.1} parent=1 // pred_check
      _
    $region55: #{tpu_custom_call.1} parent=1 // pred_check_branch
      %68 = sbr.rel (0) target = $region57
    $region56: #{tpu_custom_call.1} parent=1 // pred_region
      %69 = dma.done [#allocation3], 4096
    $region57: #{tpu_custom_call.1} parent=1 // pred_fallthru
      _
    // Predicated region
    $region58: #{tpu_custom_call.1} parent=1 // pred_check
      _
    $region59: #{tpu_custom_call.1} parent=1 // pred_check_branch
      %71 = sbr.rel (0) target = $region61
    $region60: #{tpu_custom_call.1} parent=1 // pred_region
      %72 = dma.done [#allocation6], 4096
    $region61: #{tpu_custom_call.1} parent=1 // pred_fallthru
      _
    %v74 = vld [vmem:[%s0] sm:$0xff]
    %v75 = vpack.c.bf16 %v74, %v74
    %v76 = vld [vmem:[%s5] sm:$0xff]
    %v77 = vld [vmem:[%s5 + $0x8] sm:$0xff]
    %v78 = vld [vmem:[%s6] sm:$0x3]
    %v80 = vlaneseq
    %v81 = vshrl.u32 %v80, 7
    %v82 = vsub.s32 0, %v81
    %v83 = vrot.slane %v78, %v82
    %v84 = vlaneseq
    %v85 = vshrl.u32 %v84, 7
    %v86 = vsub.s32 1, %v85
    %v87 = vrot.slane %v78, %v86
    %v92 = vunpack.c.l.b16 %v76
    %v93 = vunpack.c.h.b16 %v76
    %v94 = vunpack.c.l.b16 %v77
    %v95 = vunpack.c.h.b16 %v77
    %v96 = vpack.c.b16 %v94, %v92
    %v97 = vpack.c.b16 %v95, %v93
    %vm100 = vcmask 130048
    %v102 = vsel %vm100, %v75, 0
    %104 = vmatprep.subr.bf16.mxu0 %v97
    %105 = vmatpush1.bf16.msra.mxu0 %v96
    %106 = vmatprep.subr.bf16.mxu0 0
    %107 = vmatpush1.bf16.msra.mxu0 0
    %108 = vmatprep.subr.bf16.mxu0 0
    %109 = vmatpush1.bf16.msra.mxu0 0
    %110 = vmatprep.subr.bf16.mxu0 0
    %111 = vmatpush1.bf16.msra.mxu0 0
    %112 = vmatprep.subr.bf16.mxu0 0
    %113 = vmatpush1.bf16.msra.mxu0 0
    %114 = vmatprep.subr.bf16.mxu0 0
    %115 = vmatpush1.bf16.msra.mxu0 0
    %116 = vmatprep.subr.bf16.mxu0 0
    %117 = vmatpush1.bf16.msra.mxu0 0
    %118 = vmatprep.subr.bf16.mxu0 0
    %119 = vmatpush1.bf16.msra.mxu0 0
    %120 = vmatprep.subr.bf16.mxu0 0
    %121 = vmatpush1.bf16.msra.mxu0 0
    %122 = vmatprep.subr.bf16.mxu0 0
    %123 = vmatpush1.bf16.msra.mxu0 0
    %124 = vmatprep.subr.bf16.mxu0 0
    %125 = vmatpush1.bf16.msra.mxu0 0
    %126 = vmatprep.subr.bf16.mxu0 0
    %127 = vmatpush1.bf16.msra.mxu0 0
    %128 = vmatprep.subr.bf16.mxu0 0
    %129 = vmatpush1.bf16.msra.mxu0 0
    %130 = vmatprep.subr.bf16.mxu0 0
    %131 = vmatpush1.bf16.msra.mxu0 0
    %132 = vmatprep.subr.bf16.mxu0 0
    %133 = vmatpush1.bf16.msra.mxu0 0
    %134 = vmatprep.subr.bf16.mxu0 0
    %135 = vmatpush1.bf16.msra.mxu0 0
    %136 = vmatprep.mubr.bf16.mxu0 0
    %137 = vmatmul.mubr.bf16.gmra.mrb[0].mxu0 %v102
    %v138 = vpop.f32.mrb[0].mxu0
    %v139 = vadd.f32 %v83, %v138
    %v140 = vpop.f32.mrb[0].mxu0
    %v141 = vadd.f32 %v87, %v140
    %v142 = vpop.f32.mrb[0].mxu0
    %v143 = vpop.f32.mrb[0].mxu0
    %144 = vdwg.mxu0
    %v145 = vld [vmem:[%s4] sm:$0xff]
    %v146 = vld [vmem:[%s4 + $0x8] sm:$0xff]
    %v147 = vld [vmem:[%s1] sm:$0xff]
    %v148 = vld [vmem:[%s3] sm:$0x3]
    %v150 = vlaneseq
    %v151 = vshrl.u32 %v150, 7
    %v152 = vsub.s32 0, %v151
    %v153 = vrot.slane %v148, %v152
    %v154 = vlaneseq
    %v155 = vshrl.u32 %v154, 7
    %v156 = vsub.s32 1, %v155
    %v157 = vrot.slane %v148, %v156
    %v160 = vadd.f32 %v139, %v153
    %v161 = vadd.f32 %v141, %v157
    %163 = vset.pattern.permute.xlu0 0
    %164 = vperm.xlu0 %163, %v147
    %v165 = vpop.permute.xlu0 %164
    %v167 = vlaneseq
    %v168 = vshrl.u32 %v167, 7
    %v169 = vsub.s32 0, %v168
    %v170 = vrot.slane %v145, %v169
    %v171 = vlaneseq
    %v172 = vshrl.u32 %v171, 7
    %v173 = vsub.s32 0, %v172
    %v174 = vrot.slane %v146, %v173
    %v175 = vmul.f32 %v165, %v170
    %v176 = vmul.f32 %v165, %v174
    %v177 = vadd.f32 %v160, %v175
    %v178 = vadd.f32 %v161, %v176
    %179 = vset.pattern.permute.xlu0 1
    %180 = vperm.xlu0 %179, %v147
    %v181 = vpop.permute.xlu0 %180
    %v183 = vlaneseq
    %v184 = vshrl.u32 %v183, 7
    %v185 = vsub.s32 1, %v184
    %v186 = vrot.slane %v145, %v185
    %v187 = vlaneseq
    %v188 = vshrl.u32 %v187, 7
    %v189 = vsub.s32 1, %v188
    %v190 = vrot.slane %v146, %v189
    %v191 = vmul.f32 %v181, %v186
    %v192 = vmul.f32 %v181, %v190
    %v193 = vadd.f32 %v177, %v191
    %v194 = vadd.f32 %v178, %v192
    %195 = vset.pattern.permute.xlu0 2
    %196 = vperm.xlu0 %195, %v147
    %v197 = vpop.permute.xlu0 %196
    %v199 = vlaneseq
    %v200 = vshrl.u32 %v199, 7
    %v201 = vsub.s32 2, %v200
    %v202 = vrot.slane %v145, %v201
    %v203 = vlaneseq
    %v204 = vshrl.u32 %v203, 7
    %v205 = vsub.s32 2, %v204
    %v206 = vrot.slane %v146, %v205
    %v207 = vmul.f32 %v197, %v202
    %v208 = vmul.f32 %v197, %v206
    %v209 = vadd.f32 %v193, %v207
    %v210 = vadd.f32 %v194, %v208
    %211 = vset.pattern.permute.xlu0 3
    %212 = vperm.xlu0 %211, %v147
    %v213 = vpop.permute.xlu0 %212
    %v215 = vlaneseq
    %v216 = vshrl.u32 %v215, 7
    %v217 = vsub.s32 3, %v216
    %v218 = vrot.slane %v145, %v217
    %v219 = vlaneseq
    %v220 = vshrl.u32 %v219, 7
    %v221 = vsub.s32 3, %v220
    %v222 = vrot.slane %v146, %v221
    %v223 = vmul.f32 %v213, %v218
    %v224 = vmul.f32 %v213, %v222
    %v225 = vadd.f32 %v209, %v223
    %v226 = vadd.f32 %v210, %v224
    %227 = vset.pattern.permute.xlu0 4
    %228 = vperm.xlu0 %227, %v147
    %v229 = vpop.permute.xlu0 %228
    %v231 = vlaneseq
    %v232 = vshrl.u32 %v231, 7
    %v233 = vsub.s32 4, %v232
    %v234 = vrot.slane %v145, %v233
    %v235 = vlaneseq
    %v236 = vshrl.u32 %v235, 7
    %v237 = vsub.s32 4, %v236
    %v238 = vrot.slane %v146, %v237
    %v239 = vmul.f32 %v229, %v234
    %v240 = vmul.f32 %v229, %v238
    %v241 = vadd.f32 %v225, %v239
    %v242 = vadd.f32 %v226, %v240
    %243 = vset.pattern.permute.xlu0 5
    %244 = vperm.xlu0 %243, %v147
    %v245 = vpop.permute.xlu0 %244
    %v247 = vlaneseq
    %v248 = vshrl.u32 %v247, 7
    %v249 = vsub.s32 5, %v248
    %v250 = vrot.slane %v145, %v249
    %v251 = vlaneseq
    %v252 = vshrl.u32 %v251, 7
    %v253 = vsub.s32 5, %v252
    %v254 = vrot.slane %v146, %v253
    %v255 = vmul.f32 %v245, %v250
    %v256 = vmul.f32 %v245, %v254
    %v257 = vadd.f32 %v241, %v255
    %v258 = vadd.f32 %v242, %v256
    %259 = vset.pattern.permute.xlu0 6
    %260 = vperm.xlu0 %259, %v147
    %v261 = vpop.permute.xlu0 %260
    %v263 = vlaneseq
    %v264 = vshrl.u32 %v263, 7
    %v265 = vsub.s32 6, %v264
    %v266 = vrot.slane %v145, %v265
    %v267 = vlaneseq
    %v268 = vshrl.u32 %v267, 7
    %v269 = vsub.s32 6, %v268
    %v270 = vrot.slane %v146, %v269
    %v271 = vmul.f32 %v261, %v266
    %v272 = vmul.f32 %v261, %v270
    %v273 = vadd.f32 %v257, %v271
    %v274 = vadd.f32 %v258, %v272
    %275 = vset.pattern.permute.xlu0 7
    %276 = vperm.xlu0 %275, %v147
    %v277 = vpop.permute.xlu0 %276
    %v279 = vlaneseq
    %v280 = vshrl.u32 %v279, 7
    %v281 = vsub.s32 7, %v280
    %v282 = vrot.slane %v145, %v281
    %v283 = vlaneseq
    %v284 = vshrl.u32 %v283, 7
    %v285 = vsub.s32 7, %v284
    %v286 = vrot.slane %v146, %v285
    %v287 = vmul.f32 %v277, %v282
    %v288 = vmul.f32 %v277, %v286
    %v289 = vadd.f32 %v273, %v287
    %v290 = vadd.f32 %v274, %v288
    %v291 = vmul.f32 %v289, 1.442695
    %v292 = vpow.pop %v291
    %v293 = vmul.f32 %v290, 1.442695
    %v294 = vpow.pop %v293
    %v295 = vadd.f32 %v292, 1.0
    %v296 = vadd.f32 %v294, 1.0
    %v297 = vmul.f32 %v295, %v295
    %v298 = vmul.f32 %v296, %v296
    %v299 = vadd.f32 %v297, 1.0
    %v300 = vadd.f32 %v298, 1.0
    %v301 = vrcp.pop %v299
    %v302 = vrcp.pop %v300
    %v303 = vmul.f32 %v301, 2.0
    %v304 = vmul.f32 %v302, 2.0
    %v305 = vsub.f32 1.0, %v303
    %v306 = vsub.f32 1.0, %v304
    %v307 = vmul.f32 %v289, %v305
    %v308 = vmul.f32 %v290, %v306
    %v309 = vpack.c.bf16 %v307, %v307
    %v310 = vpack.c.bf16 %v308, %v308
    %v311 = vld [vmem:[#allocation2] sm:$0xff]
    %v312 = vld [vmem:[#allocation2 + $0x8] sm:$0xff]
    %v313 = vld [vmem:[#allocation2 + $0x10] sm:$0xff]
    %v314 = vld [vmem:[#allocation2 + $0x18] sm:$0xff]
    %v315 = vld [vmem:[#allocation2 + $0x20] sm:$0xff]
    %v316 = vld [vmem:[#allocation2 + $0x28] sm:$0xff]
    %v317 = vld [vmem:[#allocation2 + $0x30] sm:$0xff]
    %v318 = vld [vmem:[#allocation2 + $0x38] sm:$0xff]
    %v319 = vld [vmem:[#allocation2 + $0x40] sm:$0xff]
    %v320 = vld [vmem:[#allocation2 + $0x48] sm:$0xff]
    %v321 = vld [vmem:[#allocation2 + $0x50] sm:$0xff]
    %v322 = vld [vmem:[#allocation2 + $0x58] sm:$0xff]
    %v323 = vld [vmem:[#allocation2 + $0x60] sm:$0xff]
    %v324 = vld [vmem:[#allocation2 + $0x68] sm:$0xff]
    %v325 = vld [vmem:[#allocation2 + $0x70] sm:$0xff]
    %v326 = vld [vmem:[#allocation2 + $0x78] sm:$0xff]
    %v327 = vld [vmem:[#allocation2 + $0x80] sm:$0xff]
    %v328 = vld [vmem:[#allocation2 + $0x88] sm:$0xff]
    %v329 = vld [vmem:[#allocation2 + $0x90] sm:$0xff]
    %v330 = vld [vmem:[#allocation2 + $0x98] sm:$0xff]
    %v331 = vld [vmem:[#allocation2 + $0xa0] sm:$0xff]
    %v332 = vld [vmem:[#allocation2 + $0xa8] sm:$0xff]
    %v333 = vld [vmem:[#allocation2 + $0xb0] sm:$0xff]
    %v334 = vld [vmem:[#allocation2 + $0xb8] sm:$0xff]
    %v335 = vld [vmem:[#allocation2 + $0xc0] sm:$0xff]
    %v336 = vld [vmem:[#allocation2 + $0xc8] sm:$0xff]
    %v337 = vld [vmem:[#allocation2 + $0xd0] sm:$0xff]
    %v338 = vld [vmem:[#allocation2 + $0xd8] sm:$0xff]
    %v339 = vld [vmem:[#allocation2 + $0xe0] sm:$0xff]
    %v340 = vld [vmem:[#allocation2 + $0xe8] sm:$0xff]
    %v341 = vld [vmem:[#allocation2 + $0xf0] sm:$0xff]
    %v342 = vld [vmem:[#allocation2 + $0xf8] sm:$0xff]
    %v343 = vld [vmem:[%s8] sm:$0x3]
    %v345 = vlaneseq
    %v346 = vshrl.u32 %v345, 7
    %v347 = vsub.s32 0, %v346
    %v348 = vrot.slane %v343, %v347
    %v349 = vlaneseq
    %v350 = vshrl.u32 %v349, 7
    %v351 = vsub.s32 1, %v350
    %v352 = vrot.slane %v343, %v351
    %v387 = vunpack.c.l.b16 %v311
    %v388 = vunpack.c.h.b16 %v311
    %v389 = vunpack.c.l.b16 %v312
    %v390 = vunpack.c.h.b16 %v312
    %v391 = vunpack.c.l.b16 %v313
    %v392 = vunpack.c.h.b16 %v313
    %v393 = vunpack.c.l.b16 %v314
    %v394 = vunpack.c.h.b16 %v314
    %v395 = vunpack.c.l.b16 %v315
    %v396 = vunpack.c.h.b16 %v315
    %v397 = vunpack.c.l.b16 %v316
    %v398 = vunpack.c.h.b16 %v316
    %v399 = vunpack.c.l.b16 %v317
    %v400 = vunpack.c.h.b16 %v317
    %v401 = vunpack.c.l.b16 %v318
    %v402 = vunpack.c.h.b16 %v318
    %v403 = vunpack.c.l.b16 %v319
    %v404 = vunpack.c.h.b16 %v319
    %v405 = vunpack.c.l.b16 %v320
    %v406 = vunpack.c.h.b16 %v320
    %v407 = vunpack.c.l.b16 %v321
    %v408 = vunpack.c.h.b16 %v321
    %v409 = vunpack.c.l.b16 %v322
    %v410 = vunpack.c.h.b16 %v322
    %v411 = vunpack.c.l.b16 %v323
    %v412 = vunpack.c.h.b16 %v323
    %v413 = vunpack.c.l.b16 %v324
    %v414 = vunpack.c.h.b16 %v324
    %v415 = vunpack.c.l.b16 %v325
    %v416 = vunpack.c.h.b16 %v325
    %v417 = vunpack.c.l.b16 %v326
    %v418 = vunpack.c.h.b16 %v326
    %v419 = vunpack.c.l.b16 %v327
    %v420 = vunpack.c.h.b16 %v327
    %v421 = vunpack.c.l.b16 %v328
    %v422 = vunpack.c.h.b16 %v328
    %v423 = vunpack.c.l.b16 %v329
    %v424 = vunpack.c.h.b16 %v329
    %v425 = vunpack.c.l.b16 %v330
    %v426 = vunpack.c.h.b16 %v330
    %v427 = vunpack.c.l.b16 %v331
    %v428 = vunpack.c.h.b16 %v331
    %v429 = vunpack.c.l.b16 %v332
    %v430 = vunpack.c.h.b16 %v332
    %v431 = vunpack.c.l.b16 %v333
    %v432 = vunpack.c.h.b16 %v333
    %v433 = vunpack.c.l.b16 %v334
    %v434 = vunpack.c.h.b16 %v334
    %v435 = vunpack.c.l.b16 %v335
    %v436 = vunpack.c.h.b16 %v335
    %v437 = vunpack.c.l.b16 %v336
    %v438 = vunpack.c.h.b16 %v336
    %v439 = vunpack.c.l.b16 %v337
    %v440 = vunpack.c.h.b16 %v337
    %v441 = vunpack.c.l.b16 %v338
    %v442 = vunpack.c.h.b16 %v338
    %v443 = vunpack.c.l.b16 %v339
    %v444 = vunpack.c.h.b16 %v339
    %v445 = vunpack.c.l.b16 %v340
    %v446 = vunpack.c.h.b16 %v340
    %v447 = vunpack.c.l.b16 %v341
    %v448 = vunpack.c.h.b16 %v341
    %v449 = vunpack.c.l.b16 %v342
    %v450 = vunpack.c.h.b16 %v342
    %v451 = vpack.c.b16 %v389, %v387
    %v452 = vpack.c.b16 %v390, %v388
    %v453 = vpack.c.b16 %v393, %v391
    %v454 = vpack.c.b16 %v394, %v392
    %v455 = vpack.c.b16 %v397, %v395
    %v456 = vpack.c.b16 %v398, %v396
    %v457 = vpack.c.b16 %v401, %v399
    %v458 = vpack.c.b16 %v402, %v400
    %v459 = vpack.c.b16 %v405, %v403
    %v460 = vpack.c.b16 %v406, %v404
    %v461 = vpack.c.b16 %v409, %v407
    %v462 = vpack.c.b16 %v410, %v408
    %v463 = vpack.c.b16 %v413, %v411
    %v464 = vpack.c.b16 %v414, %v412
    %v465 = vpack.c.b16 %v417, %v415
    %v466 = vpack.c.b16 %v418, %v416
    %v467 = vpack.c.b16 %v421, %v419
    %v468 = vpack.c.b16 %v422, %v420
    %v469 = vpack.c.b16 %v425, %v423
    %v470 = vpack.c.b16 %v426, %v424
    %v471 = vpack.c.b16 %v429, %v427
    %v472 = vpack.c.b16 %v430, %v428
    %v473 = vpack.c.b16 %v433, %v431
    %v474 = vpack.c.b16 %v434, %v432
    %v475 = vpack.c.b16 %v437, %v435
    %v476 = vpack.c.b16 %v438, %v436
    %v477 = vpack.c.b16 %v441, %v439
    %v478 = vpack.c.b16 %v442, %v440
    %v479 = vpack.c.b16 %v445, %v443
    %v480 = vpack.c.b16 %v446, %v444
    %v481 = vpack.c.b16 %v449, %v447
    %v482 = vpack.c.b16 %v450, %v448
    %515 = vmatprep.subr.bf16.mxu0 %v452
    %516 = vmatpush1.bf16.msra.mxu0 %v451
    %517 = vmatprep.subr.bf16.mxu0 %v454
    %518 = vmatpush1.bf16.msra.mxu0 %v453
    %519 = vmatprep.subr.bf16.mxu0 %v456
    %520 = vmatpush1.bf16.msra.mxu0 %v455
    %521 = vmatprep.subr.bf16.mxu0 %v458
    %522 = vmatpush1.bf16.msra.mxu0 %v457
    %523 = vmatprep.subr.bf16.mxu0 %v460
    %524 = vmatpush1.bf16.msra.mxu0 %v459
    %525 = vmatprep.subr.bf16.mxu0 %v462
    %526 = vmatpush1.bf16.msra.mxu0 %v461
    %527 = vmatprep.subr.bf16.mxu0 %v464
    %528 = vmatpush1.bf16.msra.mxu0 %v463
    %529 = vmatprep.subr.bf16.mxu0 %v466
    %530 = vmatpush1.bf16.msra.mxu0 %v465
    %531 = vmatprep.subr.bf16.mxu0 %v468
    %532 = vmatpush1.bf16.msra.mxu0 %v467
    %533 = vmatprep.subr.bf16.mxu0 %v470
    %534 = vmatpush1.bf16.msra.mxu0 %v469
    %535 = vmatprep.subr.bf16.mxu0 %v472
    %536 = vmatpush1.bf16.msra.mxu0 %v471
    %537 = vmatprep.subr.bf16.mxu0 %v474
    %538 = vmatpush1.bf16.msra.mxu0 %v473
    %539 = vmatprep.subr.bf16.mxu0 %v476
    %540 = vmatpush1.bf16.msra.mxu0 %v475
    %541 = vmatprep.subr.bf16.mxu0 %v478
    %542 = vmatpush1.bf16.msra.mxu0 %v477
    %543 = vmatprep.subr.bf16.mxu0 %v480
    %544 = vmatpush1.bf16.msra.mxu0 %v479
    %545 = vmatprep.subr.bf16.mxu0 %v482
    %546 = vmatpush1.bf16.msra.mxu0 %v481
    %547 = vmatprep.mubr.bf16.mxu0 %v310
    %548 = vmatmul.mubr.bf16.gmra.mrb[0].mxu0 %v309
    %v549 = vpop.f32.mrb[0].mxu0
    %v550 = vadd.f32 %v348, %v549
    %v551 = vpop.f32.mrb[0].mxu0
    %v552 = vadd.f32 %v352, %v551
    %v553 = vpop.f32.mrb[0].mxu0
    %v554 = vpop.f32.mrb[0].mxu0
    %555 = vdwg.mxu0
    %v556 = vmul.f32 %v550, 1.442695
    %v557 = vpow.pop %v556
    %v558 = vmul.f32 %v552, 1.442695
    %v559 = vpow.pop %v558
    %v560 = vadd.f32 %v557, 1.0
    %v561 = vadd.f32 %v559, 1.0
    %v562 = vmul.f32 %v560, %v560
    %v563 = vmul.f32 %v561, %v561
    %v564 = vadd.f32 %v562, 1.0
    %v565 = vadd.f32 %v563, 1.0
    %v566 = vrcp.pop %v564
    %v567 = vrcp.pop %v565
    %v568 = vmul.f32 %v566, 2.0
    %v569 = vmul.f32 %v567, 2.0
    %v570 = vsub.f32 1.0, %v568
    %v571 = vsub.f32 1.0, %v569
    %v572 = vmul.f32 %v550, %v570
    %v573 = vmul.f32 %v552, %v571
    %v574 = vpack.c.bf16 %v572, %v572
    %v575 = vpack.c.bf16 %v573, %v573
    %v576 = vld [vmem:[#allocation5] sm:$0xff]
    %v577 = vld [vmem:[#allocation5 + $0x8] sm:$0xff]
    %v578 = vld [vmem:[#allocation5 + $0x10] sm:$0xff]
    %v579 = vld [vmem:[#allocation5 + $0x18] sm:$0xff]
    %v580 = vld [vmem:[#allocation5 + $0x20] sm:$0xff]
    %v581 = vld [vmem:[#allocation5 + $0x28] sm:$0xff]
    %v582 = vld [vmem:[#allocation5 + $0x30] sm:$0xff]
    %v583 = vld [vmem:[#allocation5 + $0x38] sm:$0xff]
    %v584 = vld [vmem:[#allocation5 + $0x40] sm:$0xff]
    %v585 = vld [vmem:[#allocation5 + $0x48] sm:$0xff]
    %v586 = vld [vmem:[#allocation5 + $0x50] sm:$0xff]
    %v587 = vld [vmem:[#allocation5 + $0x58] sm:$0xff]
    %v588 = vld [vmem:[#allocation5 + $0x60] sm:$0xff]
    %v589 = vld [vmem:[#allocation5 + $0x68] sm:$0xff]
    %v590 = vld [vmem:[#allocation5 + $0x70] sm:$0xff]
    %v591 = vld [vmem:[#allocation5 + $0x78] sm:$0xff]
    %v592 = vld [vmem:[#allocation5 + $0x80] sm:$0xff]
    %v593 = vld [vmem:[#allocation5 + $0x88] sm:$0xff]
    %v594 = vld [vmem:[#allocation5 + $0x90] sm:$0xff]
    %v595 = vld [vmem:[#allocation5 + $0x98] sm:$0xff]
    %v596 = vld [vmem:[#allocation5 + $0xa0] sm:$0xff]
    %v597 = vld [vmem:[#allocation5 + $0xa8] sm:$0xff]
    %v598 = vld [vmem:[#allocation5 + $0xb0] sm:$0xff]
    %v599 = vld [vmem:[#allocation5 + $0xb8] sm:$0xff]
    %v600 = vld [vmem:[#allocation5 + $0xc0] sm:$0xff]
    %v601 = vld [vmem:[#allocation5 + $0xc8] sm:$0xff]
    %v602 = vld [vmem:[#allocation5 + $0xd0] sm:$0xff]
    %v603 = vld [vmem:[#allocation5 + $0xd8] sm:$0xff]
    %v604 = vld [vmem:[#allocation5 + $0xe0] sm:$0xff]
    %v605 = vld [vmem:[#allocation5 + $0xe8] sm:$0xff]
    %v606 = vld [vmem:[#allocation5 + $0xf0] sm:$0xff]
    %v607 = vld [vmem:[#allocation5 + $0xf8] sm:$0xff]
    %v608 = vld [vmem:[%s10] sm:$0x3]
    %v610 = vlaneseq
    %v611 = vshrl.u32 %v610, 7
    %v612 = vsub.s32 0, %v611
    %v613 = vrot.slane %v608, %v612
    %v614 = vlaneseq
    %v615 = vshrl.u32 %v614, 7
    %v616 = vsub.s32 1, %v615
    %v617 = vrot.slane %v608, %v616
    %v652 = vunpack.c.l.b16 %v576
    %v653 = vunpack.c.h.b16 %v576
    %v654 = vunpack.c.l.b16 %v577
    %v655 = vunpack.c.h.b16 %v577
    %v656 = vunpack.c.l.b16 %v578
    %v657 = vunpack.c.h.b16 %v578
    %v658 = vunpack.c.l.b16 %v579
    %v659 = vunpack.c.h.b16 %v579
    %v660 = vunpack.c.l.b16 %v580
    %v661 = vunpack.c.h.b16 %v580
    %v662 = vunpack.c.l.b16 %v581
    %v663 = vunpack.c.h.b16 %v581
    %v664 = vunpack.c.l.b16 %v582
    %v665 = vunpack.c.h.b16 %v582
    %v666 = vunpack.c.l.b16 %v583
    %v667 = vunpack.c.h.b16 %v583
    %v668 = vunpack.c.l.b16 %v584
    %v669 = vunpack.c.h.b16 %v584
    %v670 = vunpack.c.l.b16 %v585
    %v671 = vunpack.c.h.b16 %v585
    %v672 = vunpack.c.l.b16 %v586
    %v673 = vunpack.c.h.b16 %v586
    %v674 = vunpack.c.l.b16 %v587
    %v675 = vunpack.c.h.b16 %v587
    %v676 = vunpack.c.l.b16 %v588
    %v677 = vunpack.c.h.b16 %v588
    %v678 = vunpack.c.l.b16 %v589
    %v679 = vunpack.c.h.b16 %v589
    %v680 = vunpack.c.l.b16 %v590
    %v681 = vunpack.c.h.b16 %v590
    %v682 = vunpack.c.l.b16 %v591
    %v683 = vunpack.c.h.b16 %v591
    %v684 = vunpack.c.l.b16 %v592
    %v685 = vunpack.c.h.b16 %v592
    %v686 = vunpack.c.l.b16 %v593
    %v687 = vunpack.c.h.b16 %v593
    %v688 = vunpack.c.l.b16 %v594
    %v689 = vunpack.c.h.b16 %v594
    %v690 = vunpack.c.l.b16 %v595
    %v691 = vunpack.c.h.b16 %v595
    %v692 = vunpack.c.l.b16 %v596
    %v693 = vunpack.c.h.b16 %v596
    %v694 = vunpack.c.l.b16 %v597
    %v695 = vunpack.c.h.b16 %v597
    %v696 = vunpack.c.l.b16 %v598
    %v697 = vunpack.c.h.b16 %v598
    %v698 = vunpack.c.l.b16 %v599
    %v699 = vunpack.c.h.b16 %v599
    %v700 = vunpack.c.l.b16 %v600
    %v701 = vunpack.c.h.b16 %v600
    %v702 = vunpack.c.l.b16 %v601
    %v703 = vunpack.c.h.b16 %v601
    %v704 = vunpack.c.l.b16 %v602
    %v705 = vunpack.c.h.b16 %v602
    %v706 = vunpack.c.l.b16 %v603
    %v707 = vunpack.c.h.b16 %v603
    %v708 = vunpack.c.l.b16 %v604
    %v709 = vunpack.c.h.b16 %v604
    %v710 = vunpack.c.l.b16 %v605
    %v711 = vunpack.c.h.b16 %v605
    %v712 = vunpack.c.l.b16 %v606
    %v713 = vunpack.c.h.b16 %v606
    %v714 = vunpack.c.l.b16 %v607
    %v715 = vunpack.c.h.b16 %v607
    %v716 = vpack.c.b16 %v654, %v652
    %v717 = vpack.c.b16 %v655, %v653
    %v718 = vpack.c.b16 %v658, %v656
    %v719 = vpack.c.b16 %v659, %v657
    %v720 = vpack.c.b16 %v662, %v660
    %v721 = vpack.c.b16 %v663, %v661
    %v722 = vpack.c.b16 %v666, %v664
    %v723 = vpack.c.b16 %v667, %v665
    %v724 = vpack.c.b16 %v670, %v668
    %v725 = vpack.c.b16 %v671, %v669
    %v726 = vpack.c.b16 %v674, %v672
    %v727 = vpack.c.b16 %v675, %v673
    %v728 = vpack.c.b16 %v678, %v676
    %v729 = vpack.c.b16 %v679, %v677
    %v730 = vpack.c.b16 %v682, %v680
    %v731 = vpack.c.b16 %v683, %v681
    %v732 = vpack.c.b16 %v686, %v684
    %v733 = vpack.c.b16 %v687, %v685
    %v734 = vpack.c.b16 %v690, %v688
    %v735 = vpack.c.b16 %v691, %v689
    %v736 = vpack.c.b16 %v694, %v692
    %v737 = vpack.c.b16 %v695, %v693
    %v738 = vpack.c.b16 %v698, %v696
    %v739 = vpack.c.b16 %v699, %v697
    %v740 = vpack.c.b16 %v702, %v700
    %v741 = vpack.c.b16 %v703, %v701
    %v742 = vpack.c.b16 %v706, %v704
    %v743 = vpack.c.b16 %v707, %v705
    %v744 = vpack.c.b16 %v710, %v708
    %v745 = vpack.c.b16 %v711, %v709
    %v746 = vpack.c.b16 %v714, %v712
    %v747 = vpack.c.b16 %v715, %v713
    %780 = vmatprep.subr.bf16.mxu0 %v717
    %781 = vmatpush1.bf16.msra.mxu0 %v716
    %782 = vmatprep.subr.bf16.mxu0 %v719
    %783 = vmatpush1.bf16.msra.mxu0 %v718
    %784 = vmatprep.subr.bf16.mxu0 %v721
    %785 = vmatpush1.bf16.msra.mxu0 %v720
    %786 = vmatprep.subr.bf16.mxu0 %v723
    %787 = vmatpush1.bf16.msra.mxu0 %v722
    %788 = vmatprep.subr.bf16.mxu0 %v725
    %789 = vmatpush1.bf16.msra.mxu0 %v724
    %790 = vmatprep.subr.bf16.mxu0 %v727
    %791 = vmatpush1.bf16.msra.mxu0 %v726
    %792 = vmatprep.subr.bf16.mxu0 %v729
    %793 = vmatpush1.bf16.msra.mxu0 %v728
    %794 = vmatprep.subr.bf16.mxu0 %v731
    %795 = vmatpush1.bf16.msra.mxu0 %v730
    %796 = vmatprep.subr.bf16.mxu0 %v733
    %797 = vmatpush1.bf16.msra.mxu0 %v732
    %798 = vmatprep.subr.bf16.mxu0 %v735
    %799 = vmatpush1.bf16.msra.mxu0 %v734
    %800 = vmatprep.subr.bf16.mxu0 %v737
    %801 = vmatpush1.bf16.msra.mxu0 %v736
    %802 = vmatprep.subr.bf16.mxu0 %v739
    %803 = vmatpush1.bf16.msra.mxu0 %v738
    %804 = vmatprep.subr.bf16.mxu0 %v741
    %805 = vmatpush1.bf16.msra.mxu0 %v740
    %806 = vmatprep.subr.bf16.mxu0 %v743
    %807 = vmatpush1.bf16.msra.mxu0 %v742
    %808 = vmatprep.subr.bf16.mxu0 %v745
    %809 = vmatpush1.bf16.msra.mxu0 %v744
    %810 = vmatprep.subr.bf16.mxu0 %v747
    %811 = vmatpush1.bf16.msra.mxu0 %v746
    %812 = vmatprep.mubr.bf16.mxu0 %v575
    %813 = vmatmul.mubr.bf16.gmra.mrb[0].mxu0 %v574
    %v814 = vpop.f32.mrb[0].mxu0
    %v815 = vadd.f32 %v613, %v814
    %v816 = vpop.f32.mrb[0].mxu0
    %v817 = vadd.f32 %v617, %v816
    %v818 = vpop.f32.mrb[0].mxu0
    %v819 = vpop.f32.mrb[0].mxu0
    %820 = vdwg.mxu0
    %v821 = vmul.f32 %v815, 1.442695
    %v822 = vpow.pop %v821
    %v823 = vmul.f32 %v817, 1.442695
    %v824 = vpow.pop %v823
    %v825 = vadd.f32 %v822, 1.0
    %v826 = vadd.f32 %v824, 1.0
    %v827 = vmul.f32 %v825, %v825
    %v828 = vmul.f32 %v826, %v826
    %v829 = vadd.f32 %v827, 1.0
    %v830 = vadd.f32 %v828, 1.0
    %v831 = vrcp.pop %v829
    %v832 = vrcp.pop %v830
    %v833 = vmul.f32 %v831, 2.0
    %v834 = vmul.f32 %v832, 2.0
    %v835 = vsub.f32 1.0, %v833
    %v836 = vsub.f32 1.0, %v834
    %v837 = vmul.f32 %v815, %v835
    %v838 = vmul.f32 %v817, %v836
    %v839 = vpack.c.bf16 %v837, %v837
    %v840 = vpack.c.bf16 %v838, %v838
    %v841 = vld [vmem:[%s11] sm:$0xf]
    %v842 = vld [vmem:[%s11 + $0x4] sm:$0xf]
    %v843 = vld [vmem:[%s11 + $0x8] sm:$0xf]
    %v844 = vld [vmem:[%s11 + $0xc] sm:$0xf]
    %v845 = vld [vmem:[%s11 + $0x10] sm:$0xf]
    %v846 = vld [vmem:[%s11 + $0x14] sm:$0xf]
    %v847 = vld [vmem:[%s11 + $0x18] sm:$0xf]
    %v848 = vld [vmem:[%s11 + $0x1c] sm:$0xf]
    %v849 = vld [vmem:[%s11 + $0x20] sm:$0xf]
    %v850 = vld [vmem:[%s11 + $0x24] sm:$0xf]
    %v851 = vld [vmem:[%s11 + $0x28] sm:$0xf]
    %v852 = vld [vmem:[%s11 + $0x2c] sm:$0xf]
    %v853 = vld [vmem:[%s11 + $0x30] sm:$0xf]
    %v854 = vld [vmem:[%s11 + $0x34] sm:$0xf]
    %v855 = vld [vmem:[%s11 + $0x38] sm:$0xf]
    %v856 = vld [vmem:[%s11 + $0x3c] sm:$0xf]
    %v857 = vld [vmem:[%s11 + $0x40] sm:$0xf]
    %v858 = vld [vmem:[%s11 + $0x44] sm:$0xf]
    %v859 = vld [vmem:[%s11 + $0x48] sm:$0xf]
    %v860 = vld [vmem:[%s11 + $0x4c] sm:$0xf]
    %v861 = vld [vmem:[%s11 + $0x50] sm:$0xf]
    %v862 = vld [vmem:[%s11 + $0x54] sm:$0xf]
    %v863 = vld [vmem:[%s11 + $0x58] sm:$0xf]
    %v864 = vld [vmem:[%s11 + $0x5c] sm:$0xf]
    %v865 = vld [vmem:[%s11 + $0x60] sm:$0xf]
    %v866 = vld [vmem:[%s11 + $0x64] sm:$0xf]
    %v867 = vld [vmem:[%s11 + $0x68] sm:$0xf]
    %v868 = vld [vmem:[%s11 + $0x6c] sm:$0xf]
    %v869 = vld [vmem:[%s11 + $0x70] sm:$0xf]
    %v870 = vld [vmem:[%s11 + $0x74] sm:$0xf]
    %v871 = vld [vmem:[%s11 + $0x78] sm:$0xf]
    %v872 = vld [vmem:[%s11 + $0x7c] sm:$0xf]
    %v873 = vld [vmem:[%s12] sm:$0x1]
    %v875 = vlaneseq
    %v876 = vshrl.u32 %v875, 7
    %v877 = vsub.s32 0, %v876
    %v878 = vrot.slane %v873, %v877
    %v912 = vunpack.c.l.b16 %v841
    %v913 = vunpack.c.l.b16 %v842
    %v914 = vunpack.c.l.b16 %v843
    %v915 = vunpack.c.l.b16 %v844
    %v916 = vunpack.c.l.b16 %v845
    %v917 = vunpack.c.l.b16 %v846
    %v918 = vunpack.c.l.b16 %v847
    %v919 = vunpack.c.l.b16 %v848
    %v920 = vunpack.c.l.b16 %v849
    %v921 = vunpack.c.l.b16 %v850
    %v922 = vunpack.c.l.b16 %v851
    %v923 = vunpack.c.l.b16 %v852
    %v924 = vunpack.c.l.b16 %v853
    %v925 = vunpack.c.l.b16 %v854
    %v926 = vunpack.c.l.b16 %v855
    %v927 = vunpack.c.l.b16 %v856
    %v928 = vunpack.c.l.b16 %v857
    %v929 = vunpack.c.l.b16 %v858
    %v930 = vunpack.c.l.b16 %v859
    %v931 = vunpack.c.l.b16 %v860
    %v932 = vunpack.c.l.b16 %v861
    %v933 = vunpack.c.l.b16 %v862
    %v934 = vunpack.c.l.b16 %v863
    %v935 = vunpack.c.l.b16 %v864
    %v936 = vunpack.c.l.b16 %v865
    %v937 = vunpack.c.l.b16 %v866
    %v938 = vunpack.c.l.b16 %v867
    %v939 = vunpack.c.l.b16 %v868
    %v940 = vunpack.c.l.b16 %v869
    %v941 = vunpack.c.l.b16 %v870
    %v942 = vunpack.c.l.b16 %v871
    %v943 = vunpack.c.l.b16 %v872
    %v944 = vpack.c.b16 %v913, %v912
    %v945 = vpack.c.b16 %v915, %v914
    %v946 = vpack.c.b16 %v917, %v916
    %v947 = vpack.c.b16 %v919, %v918
    %v948 = vpack.c.b16 %v921, %v920
    %v949 = vpack.c.b16 %v923, %v922
    %v950 = vpack.c.b16 %v925, %v924
    %v951 = vpack.c.b16 %v927, %v926
    %v952 = vpack.c.b16 %v929, %v928
    %v953 = vpack.c.b16 %v931, %v930
    %v954 = vpack.c.b16 %v933, %v932
    %v955 = vpack.c.b16 %v935, %v934
    %v956 = vpack.c.b16 %v937, %v936
    %v957 = vpack.c.b16 %v939, %v938
    %v958 = vpack.c.b16 %v941, %v940
    %v959 = vpack.c.b16 %v943, %v942
    %976 = vmatprep.subr.bf16.mxu0 0
    %977 = vmatpush1.bf16.msra.mxu0 %v944
    %978 = vmatprep.subr.bf16.mxu0 0
    %979 = vmatpush1.bf16.msra.mxu0 %v945
    %980 = vmatprep.subr.bf16.mxu0 0
    %981 = vmatpush1.bf16.msra.mxu0 %v946
    %982 = vmatprep.subr.bf16.mxu0 0
    %983 = vmatpush1.bf16.msra.mxu0 %v947
    %984 = vmatprep.subr.bf16.mxu0 0
    %985 = vmatpush1.bf16.msra.mxu0 %v948
    %986 = vmatprep.subr.bf16.mxu0 0
    %987 = vmatpush1.bf16.msra.mxu0 %v949
    %988 = vmatprep.subr.bf16.mxu0 0
    %989 = vmatpush1.bf16.msra.mxu0 %v950
    %990 = vmatprep.subr.bf16.mxu0 0
    %991 = vmatpush1.bf16.msra.mxu0 %v951
    %992 = vmatprep.subr.bf16.mxu0 0
    %993 = vmatpush1.bf16.msra.mxu0 %v952
    %994 = vmatprep.subr.bf16.mxu0 0
    %995 = vmatpush1.bf16.msra.mxu0 %v953
    %996 = vmatprep.subr.bf16.mxu0 0
    %997 = vmatpush1.bf16.msra.mxu0 %v954
    %998 = vmatprep.subr.bf16.mxu0 0
    %999 = vmatpush1.bf16.msra.mxu0 %v955
    %1000 = vmatprep.subr.bf16.mxu0 0
    %1001 = vmatpush1.bf16.msra.mxu0 %v956
    %1002 = vmatprep.subr.bf16.mxu0 0
    %1003 = vmatpush1.bf16.msra.mxu0 %v957
    %1004 = vmatprep.subr.bf16.mxu0 0
    %1005 = vmatpush1.bf16.msra.mxu0 %v958
    %1006 = vmatprep.subr.bf16.mxu0 0
    %1007 = vmatpush1.bf16.msra.mxu0 %v959
    %1008 = vmatprep.mubr.bf16.mxu0 %v840
    %1009 = vmatmul.mubr.bf16.gmra.mrb[0].mxu0 %v839
    %v1010 = vpop.f32.mrb[0].mxu0
    %v1011 = vadd.f32 %v878, %v1010
    %v1012 = vpop.f32.mrb[0].mxu0
    %v1013 = vpop.f32.mrb[0].mxu0
    %v1014 = vpop.f32.mrb[0].mxu0
    %1015 = vdwg.mxu0
    %v1016 = vmul.f32 %v147, 12.490895
    %v1017 = vmul.f32 %v1011, 12.450802
    %v1018 = vsub.f32 %v1016, %v1017
    %v1019 = vmax.f32 %v1018, -1.0
    %v1020 = vmin.f32 %v1019, 1.0
    %v1021 = vmul.f32 %v1020, 0.13557275
    %v1022 = vmul.f32 %v147, 0.45467412
    %v1023 = vadd.f32 %v1021, %v1022
    %v1024 = vld [vmem:[%s2] sm:$0xff]
    %v1025 = vmul.f32 %v1024, 0.8746551
    %v1026 = vadd.f32 %v1023, %v1025
    %s1027 = scalar_lea.vmem %s3, 2
    %v1028 = vld [vmem:[%s1027] sm:$0x3]
    %v1030 = vlaneseq
    %v1031 = vshrl.u32 %v1030, 7
    %v1032 = vsub.s32 0, %v1031
    %v1033 = vrot.slane %v1028, %v1032
    %v1034 = vlaneseq
    %v1035 = vshrl.u32 %v1034, 7
    %v1036 = vsub.s32 1, %v1035
    %v1037 = vrot.slane %v1028, %v1036
    %v1040 = vadd.f32 %v139, %v1033
    %v1041 = vadd.f32 %v141, %v1037
    %1043 = vset.pattern.permute.xlu0 0
    %1044 = vperm.xlu0 %1043, %v1026
    %v1045 = vpop.permute.xlu0 %1044
    %v1047 = vmul.f32 %v1045, %v170
    %v1048 = vmul.f32 %v1045, %v174
    %v1049 = vadd.f32 %v1040, %v1047
    %v1050 = vadd.f32 %v1041, %v1048
    %1051 = vset.pattern.permute.xlu0 1
    %1052 = vperm.xlu0 %1051, %v1026
    %v1053 = vpop.permute.xlu0 %1052
    %v1055 = vmul.f32 %v1053, %v186
    %v1056 = vmul.f32 %v1053, %v190
    %v1057 = vadd.f32 %v1049, %v1055
    %v1058 = vadd.f32 %v1050, %v1056
    %1059 = vset.pattern.permute.xlu0 2
    %1060 = vperm.xlu0 %1059, %v1026
    %v1061 = vpop.permute.xlu0 %1060
    %v1063 = vmul.f32 %v1061, %v202
    %v1064 = vmul.f32 %v1061, %v206
    %v1065 = vadd.f32 %v1057, %v1063
    %v1066 = vadd.f32 %v1058, %v1064
    %1067 = vset.pattern.permute.xlu0 3
    %1068 = vperm.xlu0 %1067, %v1026
    %v1069 = vpop.permute.xlu0 %1068
    %v1071 = vmul.f32 %v1069, %v218
    %v1072 = vmul.f32 %v1069, %v222
    %v1073 = vadd.f32 %v1065, %v1071
    %v1074 = vadd.f32 %v1066, %v1072
    %1075 = vset.pattern.permute.xlu0 4
    %1076 = vperm.xlu0 %1075, %v1026
    %v1077 = vpop.permute.xlu0 %1076
    %v1079 = vmul.f32 %v1077, %v234
    %v1080 = vmul.f32 %v1077, %v238
    %v1081 = vadd.f32 %v1073, %v1079
    %v1082 = vadd.f32 %v1074, %v1080
    %1083 = vset.pattern.permute.xlu0 5
    %1084 = vperm.xlu0 %1083, %v1026
    %v1085 = vpop.permute.xlu0 %1084
    %v1087 = vmul.f32 %v1085, %v250
    %v1088 = vmul.f32 %v1085, %v254
    %v1089 = vadd.f32 %v1081, %v1087
    %v1090 = vadd.f32 %v1082, %v1088
    %1091 = vset.pattern.permute.xlu0 6
    %1092 = vperm.xlu0 %1091, %v1026
    %v1093 = vpop.permute.xlu0 %1092
    %v1095 = vmul.f32 %v1093, %v266
    %v1096 = vmul.f32 %v1093, %v270
    %v1097 = vadd.f32 %v1089, %v1095
    %v1098 = vadd.f32 %v1090, %v1096
    %1099 = vset.pattern.permute.xlu0 7
    %1100 = vperm.xlu0 %1099, %v1026
    %v1101 = vpop.permute.xlu0 %1100
    %v1103 = vmul.f32 %v1101, %v282
    %v1104 = vmul.f32 %v1101, %v286
    %v1105 = vadd.f32 %v1097, %v1103
    %v1106 = vadd.f32 %v1098, %v1104
    %v1107 = vmul.f32 %v1105, 1.442695
    %v1108 = vpow.pop %v1107
    %v1109 = vmul.f32 %v1106, 1.442695
    %v1110 = vpow.pop %v1109
    %v1111 = vadd.f32 %v1108, 1.0
    %v1112 = vadd.f32 %v1110, 1.0
    %v1113 = vmul.f32 %v1111, %v1111
    %v1114 = vmul.f32 %v1112, %v1112
    %v1115 = vadd.f32 %v1113, 1.0
    %v1116 = vadd.f32 %v1114, 1.0
    %v1117 = vrcp.pop %v1115
    %v1118 = vrcp.pop %v1116
    %v1119 = vmul.f32 %v1117, 2.0
    %v1120 = vmul.f32 %v1118, 2.0
    %v1121 = vsub.f32 1.0, %v1119
    %v1122 = vsub.f32 1.0, %v1120
    %v1123 = vmul.f32 %v1105, %v1121
    %v1124 = vmul.f32 %v1106, %v1122
    %v1125 = vpack.c.bf16 %v1123, %v1123
    %v1126 = vpack.c.bf16 %v1124, %v1124
    %1127 = vmatprep.subr.bf16.mxu0 %v452
    %1128 = vmatpush1.bf16.msra.mxu0 %v451
    %1129 = vmatprep.subr.bf16.mxu0 %v454
    %1130 = vmatpush1.bf16.msra.mxu0 %v453
    %1131 = vmatprep.subr.bf16.mxu0 %v456
    %1132 = vmatpush1.bf16.msra.mxu0 %v455
    %1133 = vmatprep.subr.bf16.mxu0 %v458
    %1134 = vmatpush1.bf16.msra.mxu0 %v457
    %1135 = vmatprep.subr.bf16.mxu0 %v460
    %1136 = vmatpush1.bf16.msra.mxu0 %v459
    %1137 = vmatprep.subr.bf16.mxu0 %v462
    %1138 = vmatpush1.bf16.msra.mxu0 %v461
    %1139 = vmatprep.subr.bf16.mxu0 %v464
    %1140 = vmatpush1.bf16.msra.mxu0 %v463
    %1141 = vmatprep.subr.bf16.mxu0 %v466
    %1142 = vmatpush1.bf16.msra.mxu0 %v465
    %1143 = vmatprep.subr.bf16.mxu0 %v468
    %1144 = vmatpush1.bf16.msra.mxu0 %v467
    %1145 = vmatprep.subr.bf16.mxu0 %v470
    %1146 = vmatpush1.bf16.msra.mxu0 %v469
    %1147 = vmatprep.subr.bf16.mxu0 %v472
    %1148 = vmatpush1.bf16.msra.mxu0 %v471
    %1149 = vmatprep.subr.bf16.mxu0 %v474
    %1150 = vmatpush1.bf16.msra.mxu0 %v473
    %1151 = vmatprep.subr.bf16.mxu0 %v476
    %1152 = vmatpush1.bf16.msra.mxu0 %v475
    %1153 = vmatprep.subr.bf16.mxu0 %v478
    %1154 = vmatpush1.bf16.msra.mxu0 %v477
    %1155 = vmatprep.subr.bf16.mxu0 %v480
    %1156 = vmatpush1.bf16.msra.mxu0 %v479
    %1157 = vmatprep.subr.bf16.mxu0 %v482
    %1158 = vmatpush1.bf16.msra.mxu0 %v481
    %1159 = vmatprep.mubr.bf16.mxu0 %v1126
    %1160 = vmatmul.mubr.bf16.gmra.mrb[0].mxu0 %v1125
    %v1161 = vpop.f32.mrb[0].mxu0
    %v1162 = vadd.f32 %v348, %v1161
    %v1163 = vpop.f32.mrb[0].mxu0
    %v1164 = vadd.f32 %v352, %v1163
    %v1165 = vpop.f32.mrb[0].mxu0
    %v1166 = vpop.f32.mrb[0].mxu0
    %1167 = vdwg.mxu0
    %v1168 = vmul.f32 %v1162, 1.442695
    %v1169 = vpow.pop %v1168
    %v1170 = vmul.f32 %v1164, 1.442695
    %v1171 = vpow.pop %v1170
    %v1172 = vadd.f32 %v1169, 1.0
    %v1173 = vadd.f32 %v1171, 1.0
    %v1174 = vmul.f32 %v1172, %v1172
    %v1175 = vmul.f32 %v1173, %v1173
    %v1176 = vadd.f32 %v1174, 1.0
    %v1177 = vadd.f32 %v1175, 1.0
    %v1178 = vrcp.pop %v1176
    %v1179 = vrcp.pop %v1177
    %v1180 = vmul.f32 %v1178, 2.0
    %v1181 = vmul.f32 %v1179, 2.0
    %v1182 = vsub.f32 1.0, %v1180
    %v1183 = vsub.f32 1.0, %v1181
    %v1184 = vmul.f32 %v1162, %v1182
    %v1185 = vmul.f32 %v1164, %v1183
    %v1186 = vpack.c.bf16 %v1184, %v1184
    %v1187 = vpack.c.bf16 %v1185, %v1185
    %1188 = vmatprep.subr.bf16.mxu0 %v717
    %1189 = vmatpush1.bf16.msra.mxu0 %v716
    %1190 = vmatprep.subr.bf16.mxu0 %v719
    %1191 = vmatpush1.bf16.msra.mxu0 %v718
    %1192 = vmatprep.subr.bf16.mxu0 %v721
    %1193 = vmatpush1.bf16.msra.mxu0 %v720
    %1194 = vmatprep.subr.bf16.mxu0 %v723
    %1195 = vmatpush1.bf16.msra.mxu0 %v722
    %1196 = vmatprep.subr.bf16.mxu0 %v725
    %1197 = vmatpush1.bf16.msra.mxu0 %v724
    %1198 = vmatprep.subr.bf16.mxu0 %v727
    %1199 = vmatpush1.bf16.msra.mxu0 %v726
    %1200 = vmatprep.subr.bf16.mxu0 %v729
    %1201 = vmatpush1.bf16.msra.mxu0 %v728
    %1202 = vmatprep.subr.bf16.mxu0 %v731
    %1203 = vmatpush1.bf16.msra.mxu0 %v730
    %1204 = vmatprep.subr.bf16.mxu0 %v733
    %1205 = vmatpush1.bf16.msra.mxu0 %v732
    %1206 = vmatprep.subr.bf16.mxu0 %v735
    %1207 = vmatpush1.bf16.msra.mxu0 %v734
    %1208 = vmatprep.subr.bf16.mxu0 %v737
    %1209 = vmatpush1.bf16.msra.mxu0 %v736
    %1210 = vmatprep.subr.bf16.mxu0 %v739
    %1211 = vmatpush1.bf16.msra.mxu0 %v738
    %1212 = vmatprep.subr.bf16.mxu0 %v741
    %1213 = vmatpush1.bf16.msra.mxu0 %v740
    %1214 = vmatprep.subr.bf16.mxu0 %v743
    %1215 = vmatpush1.bf16.msra.mxu0 %v742
    %1216 = vmatprep.subr.bf16.mxu0 %v745
    %1217 = vmatpush1.bf16.msra.mxu0 %v744
    %1218 = vmatprep.subr.bf16.mxu0 %v747
    %1219 = vmatpush1.bf16.msra.mxu0 %v746
    %1220 = vmatprep.mubr.bf16.mxu0 %v1187
    %1221 = vmatmul.mubr.bf16.gmra.mrb[0].mxu0 %v1186
    %v1222 = vpop.f32.mrb[0].mxu0
    %v1223 = vadd.f32 %v613, %v1222
    %v1224 = vpop.f32.mrb[0].mxu0
    %v1225 = vadd.f32 %v617, %v1224
    %v1226 = vpop.f32.mrb[0].mxu0
    %v1227 = vpop.f32.mrb[0].mxu0
    %1228 = vdwg.mxu0
    %v1229 = vmul.f32 %v1223, 1.442695
    %v1230 = vpow.pop %v1229
    %v1231 = vmul.f32 %v1225, 1.442695
    %v1232 = vpow.pop %v1231
    %v1233 = vadd.f32 %v1230, 1.0
    %v1234 = vadd.f32 %v1232, 1.0
    %v1235 = vmul.f32 %v1233, %v1233
    %v1236 = vmul.f32 %v1234, %v1234
    %v1237 = vadd.f32 %v1235, 1.0
    %v1238 = vadd.f32 %v1236, 1.0
    %v1239 = vrcp.pop %v1237
    %v1240 = vrcp.pop %v1238
    %v1241 = vmul.f32 %v1239, 2.0
    %v1242 = vmul.f32 %v1240, 2.0
    %v1243 = vsub.f32 1.0, %v1241
    %v1244 = vsub.f32 1.0, %v1242
    %v1245 = vmul.f32 %v1223, %v1243
    %v1246 = vmul.f32 %v1225, %v1244
    %v1247 = vpack.c.bf16 %v1245, %v1245
    %v1248 = vpack.c.bf16 %v1246, %v1246
    %1249 = vmatprep.subr.bf16.mxu0 0
    %1250 = vmatpush1.bf16.msra.mxu0 %v944
    %1251 = vmatprep.subr.bf16.mxu0 0
    %1252 = vmatpush1.bf16.msra.mxu0 %v945
    %1253 = vmatprep.subr.bf16.mxu0 0
    %1254 = vmatpush1.bf16.msra.mxu0 %v946
    %1255 = vmatprep.subr.bf16.mxu0 0
    %1256 = vmatpush1.bf16.msra.mxu0 %v947
    %1257 = vmatprep.subr.bf16.mxu0 0
    %1258 = vmatpush1.bf16.msra.mxu0 %v948
    %1259 = vmatprep.subr.bf16.mxu0 0
    %1260 = vmatpush1.bf16.msra.mxu0 %v949
    %1261 = vmatprep.subr.bf16.mxu0 0
    %1262 = vmatpush1.bf16.msra.mxu0 %v950
    %1263 = vmatprep.subr.bf16.mxu0 0
    %1264 = vmatpush1.bf16.msra.mxu0 %v951
    %1265 = vmatprep.subr.bf16.mxu0 0
    %1266 = vmatpush1.bf16.msra.mxu0 %v952
    %1267 = vmatprep.subr.bf16.mxu0 0
    %1268 = vmatpush1.bf16.msra.mxu0 %v953
    %1269 = vmatprep.subr.bf16.mxu0 0
    %1270 = vmatpush1.bf16.msra.mxu0 %v954
    %1271 = vmatprep.subr.bf16.mxu0 0
    %1272 = vmatpush1.bf16.msra.mxu0 %v955
    %1273 = vmatprep.subr.bf16.mxu0 0
    %1274 = vmatpush1.bf16.msra.mxu0 %v956
    %1275 = vmatprep.subr.bf16.mxu0 0
    %1276 = vmatpush1.bf16.msra.mxu0 %v957
    %1277 = vmatprep.subr.bf16.mxu0 0
    %1278 = vmatpush1.bf16.msra.mxu0 %v958
    %1279 = vmatprep.subr.bf16.mxu0 0
    %1280 = vmatpush1.bf16.msra.mxu0 %v959
    %1281 = vmatprep.mubr.bf16.mxu0 %v1248
    %1282 = vmatmul.mubr.bf16.gmra.mrb[0].mxu0 %v1247
    %v1283 = vpop.f32.mrb[0].mxu0
    %v1284 = vadd.f32 %v878, %v1283
    %v1285 = vpop.f32.mrb[0].mxu0
    %v1286 = vpop.f32.mrb[0].mxu0
    %v1287 = vpop.f32.mrb[0].mxu0
    %1288 = vdwg.mxu0
    %v1289 = vmul.f32 %v1026, 5.81486
    %v1290 = vmul.f32 %v1284, 5.7282276
    %v1291 = vsub.f32 %v1289, %v1290
    %v1292 = vmax.f32 %v1291, -1.0
    %v1293 = vmin.f32 %v1292, 1.0
    %v1294 = vmul.f32 %v1293, 0.23711175
    %v1295 = vmul.f32 %v1026, 0.4933706
    %v1296 = vadd.f32 %v1294, %v1295
    %s1297 = scalar_lea.vmem %s2, 8
    %v1298 = vld [vmem:[%s1297] sm:$0xff]
    %v1299 = vmul.f32 %v1298, 0.8124822
    %v1300 = vadd.f32 %v1296, %v1299
    %s1301 = scalar_lea.vmem %s3, 4
    %v1302 = vld [vmem:[%s1301] sm:$0x3]
    %v1304 = vlaneseq
    %v1305 = vshrl.u32 %v1304, 7
    %v1306 = vsub.s32 0, %v1305
    %v1307 = vrot.slane %v1302, %v1306
    %v1308 = vlaneseq
    %v1309 = vshrl.u32 %v1308, 7
    %v1310 = vsub.s32 1, %v1309
    %v1311 = vrot.slane %v1302, %v1310
    %v1314 = vadd.f32 %v139, %v1307
    %v1315 = vadd.f32 %v141, %v1311
    %1317 = vset.pattern.permute.xlu0 0
    %1318 = vperm.xlu0 %1317, %v1300
    %v1319 = vpop.permute.xlu0 %1318
    %v1321 = vmul.f32 %v1319, %v170
    %v1322 = vmul.f32 %v1319, %v174
    %v1323 = vadd.f32 %v1314, %v1321
    %v1324 = vadd.f32 %v1315, %v1322
    %1325 = vset.pattern.permute.xlu0 1
    %1326 = vperm.xlu0 %1325, %v1300
    %v1327 = vpop.permute.xlu0 %1326
    %v1329 = vmul.f32 %v1327, %v186
    %v1330 = vmul.f32 %v1327, %v190
    %v1331 = vadd.f32 %v1323, %v1329
    %v1332 = vadd.f32 %v1324, %v1330
    %1333 = vset.pattern.permute.xlu0 2
    %1334 = vperm.xlu0 %1333, %v1300
    %v1335 = vpop.permute.xlu0 %1334
    %v1337 = vmul.f32 %v1335, %v202
    %v1338 = vmul.f32 %v1335, %v206
    %v1339 = vadd.f32 %v1331, %v1337
    %v1340 = vadd.f32 %v1332, %v1338
    %1341 = vset.pattern.permute.xlu0 3
    %1342 = vperm.xlu0 %1341, %v1300
    %v1343 = vpop.permute.xlu0 %1342
    %v1345 = vmul.f32 %v1343, %v218
    %v1346 = vmul.f32 %v1343, %v222
    %v1347 = vadd.f32 %v1339, %v1345
    %v1348 = vadd.f32 %v1340, %v1346
    %1349 = vset.pattern.permute.xlu0 4
    %1350 = vperm.xlu0 %1349, %v1300
    %v1351 = vpop.permute.xlu0 %1350
    %v1353 = vmul.f32 %v1351, %v234
    %v1354 = vmul.f32 %v1351, %v238
    %v1355 = vadd.f32 %v1347, %v1353
    %v1356 = vadd.f32 %v1348, %v1354
    %1357 = vset.pattern.permute.xlu0 5
    %1358 = vperm.xlu0 %1357, %v1300
    %v1359 = vpop.permute.xlu0 %1358
    %v1361 = vmul.f32 %v1359, %v250
    %v1362 = vmul.f32 %v1359, %v254
    %v1363 = vadd.f32 %v1355, %v1361
    %v1364 = vadd.f32 %v1356, %v1362
    %1365 = vset.pattern.permute.xlu0 6
    %1366 = vperm.xlu0 %1365, %v1300
    %v1367 = vpop.permute.xlu0 %1366
    %v1369 = vmul.f32 %v1367, %v266
    %v1370 = vmul.f32 %v1367, %v270
    %v1371 = vadd.f32 %v1363, %v1369
    %v1372 = vadd.f32 %v1364, %v1370
    %1373 = vset.pattern.permute.xlu0 7
    %1374 = vperm.xlu0 %1373, %v1300
    %v1375 = vpop.permute.xlu0 %1374
    %v1377 = vmul.f32 %v1375, %v282
    %v1378 = vmul.f32 %v1375, %v286
    %v1379 = vadd.f32 %v1371, %v1377
    %v1380 = vadd.f32 %v1372, %v1378
    %v1381 = vmul.f32 %v1379, 1.442695
    %v1382 = vpow.pop %v1381
    %v1383 = vmul.f32 %v1380, 1.442695
    %v1384 = vpow.pop %v1383
    %v1385 = vadd.f32 %v1382, 1.0
    %v1386 = vadd.f32 %v1384, 1.0
    %v1387 = vmul.f32 %v1385, %v1385
    %v1388 = vmul.f32 %v1386, %v1386
    %v1389 = vadd.f32 %v1387, 1.0
    %v1390 = vadd.f32 %v1388, 1.0
    %v1391 = vrcp.pop %v1389
    %v1392 = vrcp.pop %v1390
    %v1393 = vmul.f32 %v1391, 2.0
    %v1394 = vmul.f32 %v1392, 2.0
    %v1395 = vsub.f32 1.0, %v1393
    %v1396 = vsub.f32 1.0, %v1394
    %v1397 = vmul.f32 %v1379, %v1395
    %v1398 = vmul.f32 %v1380, %v1396
    %v1399 = vpack.c.bf16 %v1397, %v1397
    %v1400 = vpack.c.bf16 %v1398, %v1398
    %1401 = vmatprep.subr.bf16.mxu0 %v452
    %1402 = vmatpush1.bf16.msra.mxu0 %v451
    %1403 = vmatprep.subr.bf16.mxu0 %v454
    %1404 = vmatpush1.bf16.msra.mxu0 %v453
    %1405 = vmatprep.subr.bf16.mxu0 %v456
    %1406 = vmatpush1.bf16.msra.mxu0 %v455
    %1407 = vmatprep.subr.bf16.mxu0 %v458
    %1408 = vmatpush1.bf16.msra.mxu0 %v457
    %1409 = vmatprep.subr.bf16.mxu0 %v460
    %1410 = vmatpush1.bf16.msra.mxu0 %v459
    %1411 = vmatprep.subr.bf16.mxu0 %v462
    %1412 = vmatpush1.bf16.msra.mxu0 %v461
    %1413 = vmatprep.subr.bf16.mxu0 %v464
    %1414 = vmatpush1.bf16.msra.mxu0 %v463
    %1415 = vmatprep.subr.bf16.mxu0 %v466
    %1416 = vmatpush1.bf16.msra.mxu0 %v465
    %1417 = vmatprep.subr.bf16.mxu0 %v468
    %1418 = vmatpush1.bf16.msra.mxu0 %v467
    %1419 = vmatprep.subr.bf16.mxu0 %v470
    %1420 = vmatpush1.bf16.msra.mxu0 %v469
    %1421 = vmatprep.subr.bf16.mxu0 %v472
    %1422 = vmatpush1.bf16.msra.mxu0 %v471
    %1423 = vmatprep.subr.bf16.mxu0 %v474
    %1424 = vmatpush1.bf16.msra.mxu0 %v473
    %1425 = vmatprep.subr.bf16.mxu0 %v476
    %1426 = vmatpush1.bf16.msra.mxu0 %v475
    %1427 = vmatprep.subr.bf16.mxu0 %v478
    %1428 = vmatpush1.bf16.msra.mxu0 %v477
    %1429 = vmatprep.subr.bf16.mxu0 %v480
    %1430 = vmatpush1.bf16.msra.mxu0 %v479
    %1431 = vmatprep.subr.bf16.mxu0 %v482
    %1432 = vmatpush1.bf16.msra.mxu0 %v481
    %1433 = vmatprep.mubr.bf16.mxu0 %v1400
    %1434 = vmatmul.mubr.bf16.gmra.mrb[0].mxu0 %v1399
    %v1435 = vpop.f32.mrb[0].mxu0
    %v1436 = vadd.f32 %v348, %v1435
    %v1437 = vpop.f32.mrb[0].mxu0
    %v1438 = vadd.f32 %v352, %v1437
    %v1439 = vpop.f32.mrb[0].mxu0
    %v1440 = vpop.f32.mrb[0].mxu0
    %1441 = vdwg.mxu0
    %v1442 = vmul.f32 %v1436, 1.442695
    %v1443 = vpow.pop %v1442
    %v1444 = vmul.f32 %v1438, 1.442695
    %v1445 = vpow.pop %v1444
    %v1446 = vadd.f32 %v1443, 1.0
    %v1447 = vadd.f32 %v1445, 1.0
    %v1448 = vmul.f32 %v1446, %v1446
    %v1449 = vmul.f32 %v1447, %v1447
    %v1450 = vadd.f32 %v1448, 1.0
    %v1451 = vadd.f32 %v1449, 1.0
    %v1452 = vrcp.pop %v1450
    %v1453 = vrcp.pop %v1451
    %v1454 = vmul.f32 %v1452, 2.0
    %v1455 = vmul.f32 %v1453, 2.0
    %v1456 = vsub.f32 1.0, %v1454
    %v1457 = vsub.f32 1.0, %v1455
    %v1458 = vmul.f32 %v1436, %v1456
    %v1459 = vmul.f32 %v1438, %v1457
    %v1460 = vpack.c.bf16 %v1458, %v1458
    %v1461 = vpack.c.bf16 %v1459, %v1459
    %1462 = vmatprep.subr.bf16.mxu0 %v717
    %1463 = vmatpush1.bf16.msra.mxu0 %v716
    %1464 = vmatprep.subr.bf16.mxu0 %v719
    %1465 = vmatpush1.bf16.msra.mxu0 %v718
    %1466 = vmatprep.subr.bf16.mxu0 %v721
    %1467 = vmatpush1.bf16.msra.mxu0 %v720
    %1468 = vmatprep.subr.bf16.mxu0 %v723
    %1469 = vmatpush1.bf16.msra.mxu0 %v722
    %1470 = vmatprep.subr.bf16.mxu0 %v725
    %1471 = vmatpush1.bf16.msra.mxu0 %v724
    %1472 = vmatprep.subr.bf16.mxu0 %v727
    %1473 = vmatpush1.bf16.msra.mxu0 %v726
    %1474 = vmatprep.subr.bf16.mxu0 %v729
    %1475 = vmatpush1.bf16.msra.mxu0 %v728
    %1476 = vmatprep.subr.bf16.mxu0 %v731
    %1477 = vmatpush1.bf16.msra.mxu0 %v730
    %1478 = vmatprep.subr.bf16.mxu0 %v733
    %1479 = vmatpush1.bf16.msra.mxu0 %v732
    %1480 = vmatprep.subr.bf16.mxu0 %v735
    %1481 = vmatpush1.bf16.msra.mxu0 %v734
    %1482 = vmatprep.subr.bf16.mxu0 %v737
    %1483 = vmatpush1.bf16.msra.mxu0 %v736
    %1484 = vmatprep.subr.bf16.mxu0 %v739
    %1485 = vmatpush1.bf16.msra.mxu0 %v738
    %1486 = vmatprep.subr.bf16.mxu0 %v741
    %1487 = vmatpush1.bf16.msra.mxu0 %v740
    %1488 = vmatprep.subr.bf16.mxu0 %v743
    %1489 = vmatpush1.bf16.msra.mxu0 %v742
    %1490 = vmatprep.subr.bf16.mxu0 %v745
    %1491 = vmatpush1.bf16.msra.mxu0 %v744
    %1492 = vmatprep.subr.bf16.mxu0 %v747
    %1493 = vmatpush1.bf16.msra.mxu0 %v746
    %1494 = vmatprep.mubr.bf16.mxu0 %v1461
    %1495 = vmatmul.mubr.bf16.gmra.mrb[0].mxu0 %v1460
    %v1496 = vpop.f32.mrb[0].mxu0
    %v1497 = vadd.f32 %v613, %v1496
    %v1498 = vpop.f32.mrb[0].mxu0
    %v1499 = vadd.f32 %v617, %v1498
    %v1500 = vpop.f32.mrb[0].mxu0
    %v1501 = vpop.f32.mrb[0].mxu0
    %1502 = vdwg.mxu0
    %v1503 = vmul.f32 %v1497, 1.442695
    %v1504 = vpow.pop %v1503
    %v1505 = vmul.f32 %v1499, 1.442695
    %v1506 = vpow.pop %v1505
    %v1507 = vadd.f32 %v1504, 1.0
    %v1508 = vadd.f32 %v1506, 1.0
    %v1509 = vmul.f32 %v1507, %v1507
    %v1510 = vmul.f32 %v1508, %v1508
    %v1511 = vadd.f32 %v1509, 1.0
    %v1512 = vadd.f32 %v1510, 1.0
    %v1513 = vrcp.pop %v1511
    %v1514 = vrcp.pop %v1512
    %v1515 = vmul.f32 %v1513, 2.0
    %v1516 = vmul.f32 %v1514, 2.0
    %v1517 = vsub.f32 1.0, %v1515
    %v1518 = vsub.f32 1.0, %v1516
    %v1519 = vmul.f32 %v1497, %v1517
    %v1520 = vmul.f32 %v1499, %v1518
    %v1521 = vpack.c.bf16 %v1519, %v1519
    %v1522 = vpack.c.bf16 %v1520, %v1520
    %1523 = vmatprep.subr.bf16.mxu0 0
    %1524 = vmatpush1.bf16.msra.mxu0 %v944
    %1525 = vmatprep.subr.bf16.mxu0 0
    %1526 = vmatpush1.bf16.msra.mxu0 %v945
    %1527 = vmatprep.subr.bf16.mxu0 0
    %1528 = vmatpush1.bf16.msra.mxu0 %v946
    %1529 = vmatprep.subr.bf16.mxu0 0
    %1530 = vmatpush1.bf16.msra.mxu0 %v947
    %1531 = vmatprep.subr.bf16.mxu0 0
    %1532 = vmatpush1.bf16.msra.mxu0 %v948
    %1533 = vmatprep.subr.bf16.mxu0 0
    %1534 = vmatpush1.bf16.msra.mxu0 %v949
    %1535 = vmatprep.subr.bf16.mxu0 0
    %1536 = vmatpush1.bf16.msra.mxu0 %v950
    %1537 = vmatprep.subr.bf16.mxu0 0
    %1538 = vmatpush1.bf16.msra.mxu0 %v951
    %1539 = vmatprep.subr.bf16.mxu0 0
    %1540 = vmatpush1.bf16.msra.mxu0 %v952
    %1541 = vmatprep.subr.bf16.mxu0 0
    %1542 = vmatpush1.bf16.msra.mxu0 %v953
    %1543 = vmatprep.subr.bf16.mxu0 0
    %1544 = vmatpush1.bf16.msra.mxu0 %v954
    %1545 = vmatprep.subr.bf16.mxu0 0
    %1546 = vmatpush1.bf16.msra.mxu0 %v955
    %1547 = vmatprep.subr.bf16.mxu0 0
    %1548 = vmatpush1.bf16.msra.mxu0 %v956
    %1549 = vmatprep.subr.bf16.mxu0 0
    %1550 = vmatpush1.bf16.msra.mxu0 %v957
    %1551 = vmatprep.subr.bf16.mxu0 0
    %1552 = vmatpush1.bf16.msra.mxu0 %v958
    %1553 = vmatprep.subr.bf16.mxu0 0
    %1554 = vmatpush1.bf16.msra.mxu0 %v959
    %1555 = vmatprep.mubr.bf16.mxu0 %v1522
    %1556 = vmatmul.mubr.bf16.gmra.mrb[0].mxu0 %v1521
    %v1557 = vpop.f32.mrb[0].mxu0
    %v1558 = vadd.f32 %v878, %v1557
    %v1559 = vpop.f32.mrb[0].mxu0
    %v1560 = vpop.f32.mrb[0].mxu0
    %v1561 = vpop.f32.mrb[0].mxu0
    %1562 = vdwg.mxu0
    %v1563 = vmul.f32 %v1300, 3.1059926
    %v1564 = vmul.f32 %v1558, 2.9406104
    %v1565 = vsub.f32 %v1563, %v1564
    %v1566 = vmax.f32 %v1565, -1.0
    %v1567 = vmin.f32 %v1566, 1.0
    %v1568 = vmul.f32 %v1567, 0.36592743
    %v1569 = vmul.f32 %v1300, 0.49506834
    %v1570 = vadd.f32 %v1568, %v1569
    %s1571 = scalar_lea.vmem %s2, 16
    %v1572 = vld [vmem:[%s1571] sm:$0xff]
    %v1573 = vmul.f32 %v1572, 0.71017826
    %v1574 = vadd.f32 %v1570, %v1573
    %s1575 = scalar_lea.vmem %s3, 6
    %v1576 = vld [vmem:[%s1575] sm:$0x3]
    %v1578 = vlaneseq
    %v1579 = vshrl.u32 %v1578, 7
    %v1580 = vsub.s32 0, %v1579
    %v1581 = vrot.slane %v1576, %v1580
    %v1582 = vlaneseq
    %v1583 = vshrl.u32 %v1582, 7
    %v1584 = vsub.s32 1, %v1583
    %v1585 = vrot.slane %v1576, %v1584
    %v1588 = vadd.f32 %v139, %v1581
    %v1589 = vadd.f32 %v141, %v1585
    %1591 = vset.pattern.permute.xlu0 0
    %1592 = vperm.xlu0 %1591, %v1574
    %v1593 = vpop.permute.xlu0 %1592
    %v1595 = vmul.f32 %v1593, %v170
    %v1596 = vmul.f32 %v1593, %v174
    %v1597 = vadd.f32 %v1588, %v1595
    %v1598 = vadd.f32 %v1589, %v1596
    %1599 = vset.pattern.permute.xlu0 1
    %1600 = vperm.xlu0 %1599, %v1574
    %v1601 = vpop.permute.xlu0 %1600
    %v1603 = vmul.f32 %v1601, %v186
    %v1604 = vmul.f32 %v1601, %v190
    %v1605 = vadd.f32 %v1597, %v1603
    %v1606 = vadd.f32 %v1598, %v1604
    %1607 = vset.pattern.permute.xlu0 2
    %1608 = vperm.xlu0 %1607, %v1574
    %v1609 = vpop.permute.xlu0 %1608
    %v1611 = vmul.f32 %v1609, %v202
    %v1612 = vmul.f32 %v1609, %v206
    %v1613 = vadd.f32 %v1605, %v1611
    %v1614 = vadd.f32 %v1606, %v1612
    %1615 = vset.pattern.permute.xlu0 3
    %1616 = vperm.xlu0 %1615, %v1574
    %v1617 = vpop.permute.xlu0 %1616
    %v1619 = vmul.f32 %v1617, %v218
    %v1620 = vmul.f32 %v1617, %v222
    %v1621 = vadd.f32 %v1613, %v1619
    %v1622 = vadd.f32 %v1614, %v1620
    %1623 = vset.pattern.permute.xlu0 4
    %1624 = vperm.xlu0 %1623, %v1574
    %v1625 = vpop.permute.xlu0 %1624
    %v1627 = vmul.f32 %v1625, %v234
    %v1628 = vmul.f32 %v1625, %v238
    %v1629 = vadd.f32 %v1621, %v1627
    %v1630 = vadd.f32 %v1622, %v1628
    %1631 = vset.pattern.permute.xlu0 5
    %1632 = vperm.xlu0 %1631, %v1574
    %v1633 = vpop.permute.xlu0 %1632
    %v1635 = vmul.f32 %v1633, %v250
    %v1636 = vmul.f32 %v1633, %v254
    %v1637 = vadd.f32 %v1629, %v1635
    %v1638 = vadd.f32 %v1630, %v1636
    %1639 = vset.pattern.permute.xlu0 6
    %1640 = vperm.xlu0 %1639, %v1574
    %v1641 = vpop.permute.xlu0 %1640
    %v1643 = vmul.f32 %v1641, %v266
    %v1644 = vmul.f32 %v1641, %v270
    %v1645 = vadd.f32 %v1637, %v1643
    %v1646 = vadd.f32 %v1638, %v1644
    %1647 = vset.pattern.permute.xlu0 7
    %1648 = vperm.xlu0 %1647, %v1574
    %v1649 = vpop.permute.xlu0 %1648
    %v1651 = vmul.f32 %v1649, %v282
    %v1652 = vmul.f32 %v1649, %v286
    %v1653 = vadd.f32 %v1645, %v1651
    %v1654 = vadd.f32 %v1646, %v1652
    %v1655 = vmul.f32 %v1653, 1.442695
    %v1656 = vpow.pop %v1655
    %v1657 = vmul.f32 %v1654, 1.442695
    %v1658 = vpow.pop %v1657
    %v1659 = vadd.f32 %v1656, 1.0
    %v1660 = vadd.f32 %v1658, 1.0
    %v1661 = vmul.f32 %v1659, %v1659
    %v1662 = vmul.f32 %v1660, %v1660
    %v1663 = vadd.f32 %v1661, 1.0
    %v1664 = vadd.f32 %v1662, 1.0
    %v1665 = vrcp.pop %v1663
    %v1666 = vrcp.pop %v1664
    %v1667 = vmul.f32 %v1665, 2.0
    %v1668 = vmul.f32 %v1666, 2.0
    %v1669 = vsub.f32 1.0, %v1667
    %v1670 = vsub.f32 1.0, %v1668
    %v1671 = vmul.f32 %v1653, %v1669
    %v1672 = vmul.f32 %v1654, %v1670
    %v1673 = vpack.c.bf16 %v1671, %v1671
    %v1674 = vpack.c.bf16 %v1672, %v1672
    %1675 = vmatprep.subr.bf16.mxu0 %v452
    %1676 = vmatpush1.bf16.msra.mxu0 %v451
    %1677 = vmatprep.subr.bf16.mxu0 %v454
    %1678 = vmatpush1.bf16.msra.mxu0 %v453
    %1679 = vmatprep.subr.bf16.mxu0 %v456
    %1680 = vmatpush1.bf16.msra.mxu0 %v455
    %1681 = vmatprep.subr.bf16.mxu0 %v458
    %1682 = vmatpush1.bf16.msra.mxu0 %v457
    %1683 = vmatprep.subr.bf16.mxu0 %v460
    %1684 = vmatpush1.bf16.msra.mxu0 %v459
    %1685 = vmatprep.subr.bf16.mxu0 %v462
    %1686 = vmatpush1.bf16.msra.mxu0 %v461
    %1687 = vmatprep.subr.bf16.mxu0 %v464
    %1688 = vmatpush1.bf16.msra.mxu0 %v463
    %1689 = vmatprep.subr.bf16.mxu0 %v466
    %1690 = vmatpush1.bf16.msra.mxu0 %v465
    %1691 = vmatprep.subr.bf16.mxu0 %v468
    %1692 = vmatpush1.bf16.msra.mxu0 %v467
    %1693 = vmatprep.subr.bf16.mxu0 %v470
    %1694 = vmatpush1.bf16.msra.mxu0 %v469
    %1695 = vmatprep.subr.bf16.mxu0 %v472
    %1696 = vmatpush1.bf16.msra.mxu0 %v471
    %1697 = vmatprep.subr.bf16.mxu0 %v474
    %1698 = vmatpush1.bf16.msra.mxu0 %v473
    %1699 = vmatprep.subr.bf16.mxu0 %v476
    %1700 = vmatpush1.bf16.msra.mxu0 %v475
    %1701 = vmatprep.subr.bf16.mxu0 %v478
    %1702 = vmatpush1.bf16.msra.mxu0 %v477
    %1703 = vmatprep.subr.bf16.mxu0 %v480
    %1704 = vmatpush1.bf16.msra.mxu0 %v479
    %1705 = vmatprep.subr.bf16.mxu0 %v482
    %1706 = vmatpush1.bf16.msra.mxu0 %v481
    %1707 = vmatprep.mubr.bf16.mxu0 %v1674
    %1708 = vmatmul.mubr.bf16.gmra.mrb[0].mxu0 %v1673
    %v1709 = vpop.f32.mrb[0].mxu0
    %v1710 = vadd.f32 %v348, %v1709
    %v1711 = vpop.f32.mrb[0].mxu0
    %v1712 = vadd.f32 %v352, %v1711
    %v1713 = vpop.f32.mrb[0].mxu0
    %v1714 = vpop.f32.mrb[0].mxu0
    %1715 = vdwg.mxu0
    %v1716 = vmul.f32 %v1710, 1.442695
    %v1717 = vpow.pop %v1716
    %v1718 = vmul.f32 %v1712, 1.442695
    %v1719 = vpow.pop %v1718
    %v1720 = vadd.f32 %v1717, 1.0
    %v1721 = vadd.f32 %v1719, 1.0
    %v1722 = vmul.f32 %v1720, %v1720
    %v1723 = vmul.f32 %v1721, %v1721
    %v1724 = vadd.f32 %v1722, 1.0
    %v1725 = vadd.f32 %v1723, 1.0
    %v1726 = vrcp.pop %v1724
    %v1727 = vrcp.pop %v1725
    %v1728 = vmul.f32 %v1726, 2.0
    %v1729 = vmul.f32 %v1727, 2.0
    %v1730 = vsub.f32 1.0, %v1728
    %v1731 = vsub.f32 1.0, %v1729
    %v1732 = vmul.f32 %v1710, %v1730
    %v1733 = vmul.f32 %v1712, %v1731
    %v1734 = vpack.c.bf16 %v1732, %v1732
    %v1735 = vpack.c.bf16 %v1733, %v1733
    %1736 = vmatprep.subr.bf16.mxu0 %v717
    %1737 = vmatpush1.bf16.msra.mxu0 %v716
    %1738 = vmatprep.subr.bf16.mxu0 %v719
    %1739 = vmatpush1.bf16.msra.mxu0 %v718
    %1740 = vmatprep.subr.bf16.mxu0 %v721
    %1741 = vmatpush1.bf16.msra.mxu0 %v720
    %1742 = vmatprep.subr.bf16.mxu0 %v723
    %1743 = vmatpush1.bf16.msra.mxu0 %v722
    %1744 = vmatprep.subr.bf16.mxu0 %v725
    %1745 = vmatpush1.bf16.msra.mxu0 %v724
    %1746 = vmatprep.subr.bf16.mxu0 %v727
    %1747 = vmatpush1.bf16.msra.mxu0 %v726
    %1748 = vmatprep.subr.bf16.mxu0 %v729
    %1749 = vmatpush1.bf16.msra.mxu0 %v728
    %1750 = vmatprep.subr.bf16.mxu0 %v731
    %1751 = vmatpush1.bf16.msra.mxu0 %v730
    %1752 = vmatprep.subr.bf16.mxu0 %v733
    %1753 = vmatpush1.bf16.msra.mxu0 %v732
    %1754 = vmatprep.subr.bf16.mxu0 %v735
    %1755 = vmatpush1.bf16.msra.mxu0 %v734
    %1756 = vmatprep.subr.bf16.mxu0 %v737
    %1757 = vmatpush1.bf16.msra.mxu0 %v736
    %1758 = vmatprep.subr.bf16.mxu0 %v739
    %1759 = vmatpush1.bf16.msra.mxu0 %v738
    %1760 = vmatprep.subr.bf16.mxu0 %v741
    %1761 = vmatpush1.bf16.msra.mxu0 %v740
    %1762 = vmatprep.subr.bf16.mxu0 %v743
    %1763 = vmatpush1.bf16.msra.mxu0 %v742
    %1764 = vmatprep.subr.bf16.mxu0 %v745
    %1765 = vmatpush1.bf16.msra.mxu0 %v744
    %1766 = vmatprep.subr.bf16.mxu0 %v747
    %1767 = vmatpush1.bf16.msra.mxu0 %v746
    %1768 = vmatprep.mubr.bf16.mxu0 %v1735
    %1769 = vmatmul.mubr.bf16.gmra.mrb[0].mxu0 %v1734
    %v1770 = vpop.f32.mrb[0].mxu0
    %v1771 = vadd.f32 %v613, %v1770
    %v1772 = vpop.f32.mrb[0].mxu0
    %v1773 = vadd.f32 %v617, %v1772
    %v1774 = vpop.f32.mrb[0].mxu0
    %v1775 = vpop.f32.mrb[0].mxu0
    %1776 = vdwg.mxu0
    %v1777 = vmul.f32 %v1771, 1.442695
    %v1778 = vpow.pop %v1777
    %v1779 = vmul.f32 %v1773, 1.442695
    %v1780 = vpow.pop %v1779
    %v1781 = vadd.f32 %v1778, 1.0
    %v1782 = vadd.f32 %v1780, 1.0
    %v1783 = vmul.f32 %v1781, %v1781
    %v1784 = vmul.f32 %v1782, %v1782
    %v1785 = vadd.f32 %v1783, 1.0
    %v1786 = vadd.f32 %v1784, 1.0
    %v1787 = vrcp.pop %v1785
    %v1788 = vrcp.pop %v1786
    %v1789 = vmul.f32 %v1787, 2.0
    %v1790 = vmul.f32 %v1788, 2.0
    %v1791 = vsub.f32 1.0, %v1789
    %v1792 = vsub.f32 1.0, %v1790
    %v1793 = vmul.f32 %v1771, %v1791
    %v1794 = vmul.f32 %v1773, %v1792
    %v1795 = vpack.c.bf16 %v1793, %v1793
    %v1796 = vpack.c.bf16 %v1794, %v1794
    %1797 = vmatprep.subr.bf16.mxu0 0
    %1798 = vmatpush1.bf16.msra.mxu0 %v944
    %1799 = vmatprep.subr.bf16.mxu0 0
    %1800 = vmatpush1.bf16.msra.mxu0 %v945
    %1801 = vmatprep.subr.bf16.mxu0 0
    %1802 = vmatpush1.bf16.msra.mxu0 %v946
    %1803 = vmatprep.subr.bf16.mxu0 0
    %1804 = vmatpush1.bf16.msra.mxu0 %v947
    %1805 = vmatprep.subr.bf16.mxu0 0
    %1806 = vmatpush1.bf16.msra.mxu0 %v948
    %1807 = vmatprep.subr.bf16.mxu0 0
    %1808 = vmatpush1.bf16.msra.mxu0 %v949
    %1809 = vmatprep.subr.bf16.mxu0 0
    %1810 = vmatpush1.bf16.msra.mxu0 %v950
    %1811 = vmatprep.subr.bf16.mxu0 0
    %1812 = vmatpush1.bf16.msra.mxu0 %v951
    %1813 = vmatprep.subr.bf16.mxu0 0
    %1814 = vmatpush1.bf16.msra.mxu0 %v952
    %1815 = vmatprep.subr.bf16.mxu0 0
    %1816 = vmatpush1.bf16.msra.mxu0 %v953
    %1817 = vmatprep.subr.bf16.mxu0 0
    %1818 = vmatpush1.bf16.msra.mxu0 %v954
    %1819 = vmatprep.subr.bf16.mxu0 0
    %1820 = vmatpush1.bf16.msra.mxu0 %v955
    %1821 = vmatprep.subr.bf16.mxu0 0
    %1822 = vmatpush1.bf16.msra.mxu0 %v956
    %1823 = vmatprep.subr.bf16.mxu0 0
    %1824 = vmatpush1.bf16.msra.mxu0 %v957
    %1825 = vmatprep.subr.bf16.mxu0 0
    %1826 = vmatpush1.bf16.msra.mxu0 %v958
    %1827 = vmatprep.subr.bf16.mxu0 0
    %1828 = vmatpush1.bf16.msra.mxu0 %v959
    %1829 = vmatprep.mubr.bf16.mxu0 %v1796
    %1830 = vmatmul.mubr.bf16.gmra.mrb[0].mxu0 %v1795
    %v1831 = vpop.f32.mrb[0].mxu0
    %v1832 = vadd.f32 %v878, %v1831
    %v1833 = vpop.f32.mrb[0].mxu0
    %v1834 = vpop.f32.mrb[0].mxu0
    %v1835 = vpop.f32.mrb[0].mxu0
    %1836 = vdwg.mxu0
    %v1837 = vmul.f32 %v1574, 1.903606
    %v1838 = vmul.f32 %v1832, 1.6197889
    %v1839 = vsub.f32 %v1837, %v1838
    %v1840 = vmax.f32 %v1839, -1.0
    %v1841 = vmin.f32 %v1840, 1.0
    %v1842 = vmul.f32 %v1841, 0.52152085
    %v1843 = vmul.f32 %v1574, 0.42925683
    %v1844 = vadd.f32 %v1842, %v1843
    %s1845 = scalar_lea.vmem %s2, 24
    %v1846 = vld [vmem:[%s1845] sm:$0xff]
    %v1847 = vmul.f32 %v1846, 0.55547476
    %v1848 = vadd.f32 %v1844, %v1847
    %s1849 = scalar_lea.vmem %s3, 8
    %v1850 = vld [vmem:[%s1849] sm:$0x3]
    %v1852 = vlaneseq
    %v1853 = vshrl.u32 %v1852, 7
    %v1854 = vsub.s32 0, %v1853
    %v1855 = vrot.slane %v1850, %v1854
    %v1856 = vlaneseq
    %v1857 = vshrl.u32 %v1856, 7
    %v1858 = vsub.s32 1, %v1857
    %v1859 = vrot.slane %v1850, %v1858
    %v1862 = vadd.f32 %v139, %v1855
    %v1863 = vadd.f32 %v141, %v1859
    %1865 = vset.pattern.permute.xlu0 0
    %1866 = vperm.xlu0 %1865, %v1848
    %v1867 = vpop.permute.xlu0 %1866
    %v1869 = vmul.f32 %v1867, %v170
    %v1870 = vmul.f32 %v1867, %v174
    %v1871 = vadd.f32 %v1862, %v1869
    %v1872 = vadd.f32 %v1863, %v1870
    %1873 = vset.pattern.permute.xlu0 1
    %1874 = vperm.xlu0 %1873, %v1848
    %v1875 = vpop.permute.xlu0 %1874
    %v1877 = vmul.f32 %v1875, %v186
    %v1878 = vmul.f32 %v1875, %v190
    %v1879 = vadd.f32 %v1871, %v1877
    %v1880 = vadd.f32 %v1872, %v1878
    %1881 = vset.pattern.permute.xlu0 2
    %1882 = vperm.xlu0 %1881, %v1848
    %v1883 = vpop.permute.xlu0 %1882
    %v1885 = vmul.f32 %v1883, %v202
    %v1886 = vmul.f32 %v1883, %v206
    %v1887 = vadd.f32 %v1879, %v1885
    %v1888 = vadd.f32 %v1880, %v1886
    %1889 = vset.pattern.permute.xlu0 3
    %1890 = vperm.xlu0 %1889, %v1848
    %v1891 = vpop.permute.xlu0 %1890
    %v1893 = vmul.f32 %v1891, %v218
    %v1894 = vmul.f32 %v1891, %v222
    %v1895 = vadd.f32 %v1887, %v1893
    %v1896 = vadd.f32 %v1888, %v1894
    %1897 = vset.pattern.permute.xlu0 4
    %1898 = vperm.xlu0 %1897, %v1848
    %v1899 = vpop.permute.xlu0 %1898
    %v1901 = vmul.f32 %v1899, %v234
    %v1902 = vmul.f32 %v1899, %v238
    %v1903 = vadd.f32 %v1895, %v1901
    %v1904 = vadd.f32 %v1896, %v1902
    %1905 = vset.pattern.permute.xlu0 5
    %1906 = vperm.xlu0 %1905, %v1848
    %v1907 = vpop.permute.xlu0 %1906
    %v1909 = vmul.f32 %v1907, %v250
    %v1910 = vmul.f32 %v1907, %v254
    %v1911 = vadd.f32 %v1903, %v1909
    %v1912 = vadd.f32 %v1904, %v1910
    %1913 = vset.pattern.permute.xlu0 6
    %1914 = vperm.xlu0 %1913, %v1848
    %v1915 = vpop.permute.xlu0 %1914
    %v1917 = vmul.f32 %v1915, %v266
    %v1918 = vmul.f32 %v1915, %v270
    %v1919 = vadd.f32 %v1911, %v1917
    %v1920 = vadd.f32 %v1912, %v1918
    %1921 = vset.pattern.permute.xlu0 7
    %1922 = vperm.xlu0 %1921, %v1848
    %v1923 = vpop.permute.xlu0 %1922
    %v1925 = vmul.f32 %v1923, %v282
    %v1926 = vmul.f32 %v1923, %v286
    %v1927 = vadd.f32 %v1919, %v1925
    %v1928 = vadd.f32 %v1920, %v1926
    %v1929 = vmul.f32 %v1927, 1.442695
    %v1930 = vpow.pop %v1929
    %v1931 = vmul.f32 %v1928, 1.442695
    %v1932 = vpow.pop %v1931
    %v1933 = vadd.f32 %v1930, 1.0
    %v1934 = vadd.f32 %v1932, 1.0
    %v1935 = vmul.f32 %v1933, %v1933
    %v1936 = vmul.f32 %v1934, %v1934
    %v1937 = vadd.f32 %v1935, 1.0
    %v1938 = vadd.f32 %v1936, 1.0
    %v1939 = vrcp.pop %v1937
    %v1940 = vrcp.pop %v1938
    %v1941 = vmul.f32 %v1939, 2.0
    %v1942 = vmul.f32 %v1940, 2.0
    %v1943 = vsub.f32 1.0, %v1941
    %v1944 = vsub.f32 1.0, %v1942
    %v1945 = vmul.f32 %v1927, %v1943
    %v1946 = vmul.f32 %v1928, %v1944
    %v1947 = vpack.c.bf16 %v1945, %v1945
    %v1948 = vpack.c.bf16 %v1946, %v1946
    %1949 = vmatprep.subr.bf16.mxu0 %v452
    %1950 = vmatpush1.bf16.msra.mxu0 %v451
    %1951 = vmatprep.subr.bf16.mxu0 %v454
    %1952 = vmatpush1.bf16.msra.mxu0 %v453
    %1953 = vmatprep.subr.bf16.mxu0 %v456
    %1954 = vmatpush1.bf16.msra.mxu0 %v455
    %1955 = vmatprep.subr.bf16.mxu0 %v458
    %1956 = vmatpush1.bf16.msra.mxu0 %v457
    %1957 = vmatprep.subr.bf16.mxu0 %v460
    %1958 = vmatpush1.bf16.msra.mxu0 %v459
    %1959 = vmatprep.subr.bf16.mxu0 %v462
    %1960 = vmatpush1.bf16.msra.mxu0 %v461
    %1961 = vmatprep.subr.bf16.mxu0 %v464
    %1962 = vmatpush1.bf16.msra.mxu0 %v463
    %1963 = vmatprep.subr.bf16.mxu0 %v466
    %1964 = vmatpush1.bf16.msra.mxu0 %v465
    %1965 = vmatprep.subr.bf16.mxu0 %v468
    %1966 = vmatpush1.bf16.msra.mxu0 %v467
    %1967 = vmatprep.subr.bf16.mxu0 %v470
    %1968 = vmatpush1.bf16.msra.mxu0 %v469
    %1969 = vmatprep.subr.bf16.mxu0 %v472
    %1970 = vmatpush1.bf16.msra.mxu0 %v471
    %1971 = vmatprep.subr.bf16.mxu0 %v474
    %1972 = vmatpush1.bf16.msra.mxu0 %v473
    %1973 = vmatprep.subr.bf16.mxu0 %v476
    %1974 = vmatpush1.bf16.msra.mxu0 %v475
    %1975 = vmatprep.subr.bf16.mxu0 %v478
    %1976 = vmatpush1.bf16.msra.mxu0 %v477
    %1977 = vmatprep.subr.bf16.mxu0 %v480
    %1978 = vmatpush1.bf16.msra.mxu0 %v479
    %1979 = vmatprep.subr.bf16.mxu0 %v482
    %1980 = vmatpush1.bf16.msra.mxu0 %v481
    %1981 = vmatprep.mubr.bf16.mxu0 %v1948
    %1982 = vmatmul.mubr.bf16.gmra.mrb[0].mxu0 %v1947
    %v1983 = vpop.f32.mrb[0].mxu0
    %v1984 = vadd.f32 %v348, %v1983
    %v1985 = vpop.f32.mrb[0].mxu0
    %v1986 = vadd.f32 %v352, %v1985
    %v1987 = vpop.f32.mrb[0].mxu0
    %v1988 = vpop.f32.mrb[0].mxu0
    %1989 = vdwg.mxu0
    %v1990 = vmul.f32 %v1984, 1.442695
    %v1991 = vpow.pop %v1990
    %v1992 = vmul.f32 %v1986, 1.442695
    %v1993 = vpow.pop %v1992
    %v1994 = vadd.f32 %v1991, 1.0
    %v1995 = vadd.f32 %v1993, 1.0
    %v1996 = vmul.f32 %v1994, %v1994
    %v1997 = vmul.f32 %v1995, %v1995
    %v1998 = vadd.f32 %v1996, 1.0
    %v1999 = vadd.f32 %v1997, 1.0
    %v2000 = vrcp.pop %v1998
    %v2001 = vrcp.pop %v1999
    %v2002 = vmul.f32 %v2000, 2.0
    %v2003 = vmul.f32 %v2001, 2.0
    %v2004 = vsub.f32 1.0, %v2002
    %v2005 = vsub.f32 1.0, %v2003
    %v2006 = vmul.f32 %v1984, %v2004
    %v2007 = vmul.f32 %v1986, %v2005
    %v2008 = vpack.c.bf16 %v2006, %v2006
    %v2009 = vpack.c.bf16 %v2007, %v2007
    %2010 = vmatprep.subr.bf16.mxu0 %v717
    %2011 = vmatpush1.bf16.msra.mxu0 %v716
    %2012 = vmatprep.subr.bf16.mxu0 %v719
    %2013 = vmatpush1.bf16.msra.mxu0 %v718
    %2014 = vmatprep.subr.bf16.mxu0 %v721
    %2015 = vmatpush1.bf16.msra.mxu0 %v720
    %2016 = vmatprep.subr.bf16.mxu0 %v723
    %2017 = vmatpush1.bf16.msra.mxu0 %v722
    %2018 = vmatprep.subr.bf16.mxu0 %v725
    %2019 = vmatpush1.bf16.msra.mxu0 %v724
    %2020 = vmatprep.subr.bf16.mxu0 %v727
    %2021 = vmatpush1.bf16.msra.mxu0 %v726
    %2022 = vmatprep.subr.bf16.mxu0 %v729
    %2023 = vmatpush1.bf16.msra.mxu0 %v728
    %2024 = vmatprep.subr.bf16.mxu0 %v731
    %2025 = vmatpush1.bf16.msra.mxu0 %v730
    %2026 = vmatprep.subr.bf16.mxu0 %v733
    %2027 = vmatpush1.bf16.msra.mxu0 %v732
    %2028 = vmatprep.subr.bf16.mxu0 %v735
    %2029 = vmatpush1.bf16.msra.mxu0 %v734
    %2030 = vmatprep.subr.bf16.mxu0 %v737
    %2031 = vmatpush1.bf16.msra.mxu0 %v736
    %2032 = vmatprep.subr.bf16.mxu0 %v739
    %2033 = vmatpush1.bf16.msra.mxu0 %v738
    %2034 = vmatprep.subr.bf16.mxu0 %v741
    %2035 = vmatpush1.bf16.msra.mxu0 %v740
    %2036 = vmatprep.subr.bf16.mxu0 %v743
    %2037 = vmatpush1.bf16.msra.mxu0 %v742
    %2038 = vmatprep.subr.bf16.mxu0 %v745
    %2039 = vmatpush1.bf16.msra.mxu0 %v744
    %2040 = vmatprep.subr.bf16.mxu0 %v747
    %2041 = vmatpush1.bf16.msra.mxu0 %v746
    %2042 = vmatprep.mubr.bf16.mxu0 %v2009
    %2043 = vmatmul.mubr.bf16.gmra.mrb[0].mxu0 %v2008
    %v2044 = vpop.f32.mrb[0].mxu0
    %v2045 = vadd.f32 %v613, %v2044
    %v2046 = vpop.f32.mrb[0].mxu0
    %v2047 = vadd.f32 %v617, %v2046
    %v2048 = vpop.f32.mrb[0].mxu0
    %v2049 = vpop.f32.mrb[0].mxu0
    %2050 = vdwg.mxu0
    %v2051 = vmul.f32 %v2045, 1.442695
    %v2052 = vpow.pop %v2051
    %v2053 = vmul.f32 %v2047, 1.442695
    %v2054 = vpow.pop %v2053
    %v2055 = vadd.f32 %v2052, 1.0
    %v2056 = vadd.f32 %v2054, 1.0
    %v2057 = vmul.f32 %v2055, %v2055
    %v2058 = vmul.f32 %v2056, %v2056
    %v2059 = vadd.f32 %v2057, 1.0
    %v2060 = vadd.f32 %v2058, 1.0
    %v2061 = vrcp.pop %v2059
    %v2062 = vrcp.pop %v2060
    %v2063 = vmul.f32 %v2061, 2.0
    %v2064 = vmul.f32 %v2062, 2.0
    %v2065 = vsub.f32 1.0, %v2063
    %v2066 = vsub.f32 1.0, %v2064
    %v2067 = vmul.f32 %v2045, %v2065
    %v2068 = vmul.f32 %v2047, %v2066
    %v2069 = vpack.c.bf16 %v2067, %v2067
    %v2070 = vpack.c.bf16 %v2068, %v2068
    %2071 = vmatprep.subr.bf16.mxu0 0
    %2072 = vmatpush1.bf16.msra.mxu0 %v944
    %2073 = vmatprep.subr.bf16.mxu0 0
    %2074 = vmatpush1.bf16.msra.mxu0 %v945
    %2075 = vmatprep.subr.bf16.mxu0 0
    %2076 = vmatpush1.bf16.msra.mxu0 %v946
    %2077 = vmatprep.subr.bf16.mxu0 0
    %2078 = vmatpush1.bf16.msra.mxu0 %v947
    %2079 = vmatprep.subr.bf16.mxu0 0
    %2080 = vmatpush1.bf16.msra.mxu0 %v948
    %2081 = vmatprep.subr.bf16.mxu0 0
    %2082 = vmatpush1.bf16.msra.mxu0 %v949
    %2083 = vmatprep.subr.bf16.mxu0 0
    %2084 = vmatpush1.bf16.msra.mxu0 %v950
    %2085 = vmatprep.subr.bf16.mxu0 0
    %2086 = vmatpush1.bf16.msra.mxu0 %v951
    %2087 = vmatprep.subr.bf16.mxu0 0
    %2088 = vmatpush1.bf16.msra.mxu0 %v952
    %2089 = vmatprep.subr.bf16.mxu0 0
    %2090 = vmatpush1.bf16.msra.mxu0 %v953
    %2091 = vmatprep.subr.bf16.mxu0 0
    %2092 = vmatpush1.bf16.msra.mxu0 %v954
    %2093 = vmatprep.subr.bf16.mxu0 0
    %2094 = vmatpush1.bf16.msra.mxu0 %v955
    %2095 = vmatprep.subr.bf16.mxu0 0
    %2096 = vmatpush1.bf16.msra.mxu0 %v956
    %2097 = vmatprep.subr.bf16.mxu0 0
    %2098 = vmatpush1.bf16.msra.mxu0 %v957
    %2099 = vmatprep.subr.bf16.mxu0 0
    %2100 = vmatpush1.bf16.msra.mxu0 %v958
    %2101 = vmatprep.subr.bf16.mxu0 0
    %2102 = vmatpush1.bf16.msra.mxu0 %v959
    %2103 = vmatprep.mubr.bf16.mxu0 %v2070
    %2104 = vmatmul.mubr.bf16.gmra.mrb[0].mxu0 %v2069
    %v2105 = vpop.f32.mrb[0].mxu0
    %v2106 = vadd.f32 %v878, %v2105
    %v2107 = vpop.f32.mrb[0].mxu0
    %v2108 = vpop.f32.mrb[0].mxu0
    %v2109 = vpop.f32.mrb[0].mxu0
    %2110 = vdwg.mxu0
    %v2111 = vmul.f32 %v1848, 1.3386568
    %v2112 = vmul.f32 %v2106, 0.88994485
    %v2113 = vsub.f32 %v2111, %v2112
    %v2114 = vmax.f32 %v2113, -1.0
    %v2115 = vmin.f32 %v2114, 1.0
    %v2116 = vmul.f32 %v2115, 0.73096544
    %v2117 = vmul.f32 %v1848, 0.2608336
    %v2118 = vadd.f32 %v2116, %v2117
    %s2119 = scalar_lea.vmem %s2, 32
    %v2120 = vld [vmem:[%s2119] sm:$0xff]
    %v2121 = vmul.f32 %v2120, 0.33586028
    %v2122 = vadd.f32 %v2118, %v2121
    %s2123 = scalar_lea.vmem %s3, 10
    %v2124 = vld [vmem:[%s2123] sm:$0x3]
    %v2126 = vlaneseq
    %v2127 = vshrl.u32 %v2126, 7
    %v2128 = vsub.s32 0, %v2127
    %v2129 = vrot.slane %v2124, %v2128
    %v2130 = vlaneseq
    %v2131 = vshrl.u32 %v2130, 7
    %v2132 = vsub.s32 1, %v2131
    %v2133 = vrot.slane %v2124, %v2132
    %v2136 = vadd.f32 %v139, %v2129
    %v2137 = vadd.f32 %v141, %v2133
    %2139 = vset.pattern.permute.xlu0 0
    %2140 = vperm.xlu0 %2139, %v2122
    %v2141 = vpop.permute.xlu0 %2140
    %v2143 = vmul.f32 %v2141, %v170
    %v2144 = vmul.f32 %v2141, %v174
    %v2145 = vadd.f32 %v2136, %v2143
    %v2146 = vadd.f32 %v2137, %v2144
    %2147 = vset.pattern.permute.xlu0 1
    %2148 = vperm.xlu0 %2147, %v2122
    %v2149 = vpop.permute.xlu0 %2148
    %v2151 = vmul.f32 %v2149, %v186
    %v2152 = vmul.f32 %v2149, %v190
    %v2153 = vadd.f32 %v2145, %v2151
    %v2154 = vadd.f32 %v2146, %v2152
    %2155 = vset.pattern.permute.xlu0 2
    %2156 = vperm.xlu0 %2155, %v2122
    %v2157 = vpop.permute.xlu0 %2156
    %v2159 = vmul.f32 %v2157, %v202
    %v2160 = vmul.f32 %v2157, %v206
    %v2161 = vadd.f32 %v2153, %v2159
    %v2162 = vadd.f32 %v2154, %v2160
    %2163 = vset.pattern.permute.xlu0 3
    %2164 = vperm.xlu0 %2163, %v2122
    %v2165 = vpop.permute.xlu0 %2164
    %v2167 = vmul.f32 %v2165, %v218
    %v2168 = vmul.f32 %v2165, %v222
    %v2169 = vadd.f32 %v2161, %v2167
    %v2170 = vadd.f32 %v2162, %v2168
    %2171 = vset.pattern.permute.xlu0 4
    %2172 = vperm.xlu0 %2171, %v2122
    %v2173 = vpop.permute.xlu0 %2172
    %v2175 = vmul.f32 %v2173, %v234
    %v2176 = vmul.f32 %v2173, %v238
    %v2177 = vadd.f32 %v2169, %v2175
    %v2178 = vadd.f32 %v2170, %v2176
    %2179 = vset.pattern.permute.xlu0 5
    %2180 = vperm.xlu0 %2179, %v2122
    %v2181 = vpop.permute.xlu0 %2180
    %v2183 = vmul.f32 %v2181, %v250
    %v2184 = vmul.f32 %v2181, %v254
    %v2185 = vadd.f32 %v2177, %v2183
    %v2186 = vadd.f32 %v2178, %v2184
    %2187 = vset.pattern.permute.xlu0 6
    %2188 = vperm.xlu0 %2187, %v2122
    %v2189 = vpop.permute.xlu0 %2188
    %v2191 = vmul.f32 %v2189, %v266
    %v2192 = vmul.f32 %v2189, %v270
    %v2193 = vadd.f32 %v2185, %v2191
    %v2194 = vadd.f32 %v2186, %v2192
    %2195 = vset.pattern.permute.xlu0 7
    %2196 = vperm.xlu0 %2195, %v2122
    %v2197 = vpop.permute.xlu0 %2196
    %v2199 = vmul.f32 %v2197, %v282
    %v2200 = vmul.f32 %v2197, %v286
    %v2201 = vadd.f32 %v2193, %v2199
    %v2202 = vadd.f32 %v2194, %v2200
    %v2203 = vmul.f32 %v2201, 1.442695
    %v2204 = vpow.pop %v2203
    %v2205 = vmul.f32 %v2202, 1.442695
    %v2206 = vpow.pop %v2205
    %v2207 = vadd.f32 %v2204, 1.0
    %v2208 = vadd.f32 %v2206, 1.0
    %v2209 = vmul.f32 %v2207, %v2207
    %v2210 = vmul.f32 %v2208, %v2208
    %v2211 = vadd.f32 %v2209, 1.0
    %v2212 = vadd.f32 %v2210, 1.0
    %v2213 = vrcp.pop %v2211
    %v2214 = vrcp.pop %v2212
    %v2215 = vmul.f32 %v2213, 2.0
    %v2216 = vmul.f32 %v2214, 2.0
    %v2217 = vsub.f32 1.0, %v2215
    %v2218 = vsub.f32 1.0, %v2216
    %v2219 = vmul.f32 %v2201, %v2217
    %v2220 = vmul.f32 %v2202, %v2218
    %v2221 = vpack.c.bf16 %v2219, %v2219
    %v2222 = vpack.c.bf16 %v2220, %v2220
    %2223 = vmatprep.subr.bf16.mxu0 %v452
    %2224 = vmatpush1.bf16.msra.mxu0 %v451
    %2225 = vmatprep.subr.bf16.mxu0 %v454
    %2226 = vmatpush1.bf16.msra.mxu0 %v453
    %2227 = vmatprep.subr.bf16.mxu0 %v456
    %2228 = vmatpush1.bf16.msra.mxu0 %v455
    %2229 = vmatprep.subr.bf16.mxu0 %v458
    %2230 = vmatpush1.bf16.msra.mxu0 %v457
    %2231 = vmatprep.subr.bf16.mxu0 %v460
    %2232 = vmatpush1.bf16.msra.mxu0 %v459
    %2233 = vmatprep.subr.bf16.mxu0 %v462
    %2234 = vmatpush1.bf16.msra.mxu0 %v461
    %2235 = vmatprep.subr.bf16.mxu0 %v464
    %2236 = vmatpush1.bf16.msra.mxu0 %v463
    %2237 = vmatprep.subr.bf16.mxu0 %v466
    %2238 = vmatpush1.bf16.msra.mxu0 %v465
    %2239 = vmatprep.subr.bf16.mxu0 %v468
    %2240 = vmatpush1.bf16.msra.mxu0 %v467
    %2241 = vmatprep.subr.bf16.mxu0 %v470
    %2242 = vmatpush1.bf16.msra.mxu0 %v469
    %2243 = vmatprep.subr.bf16.mxu0 %v472
    %2244 = vmatpush1.bf16.msra.mxu0 %v471
    %2245 = vmatprep.subr.bf16.mxu0 %v474
    %2246 = vmatpush1.bf16.msra.mxu0 %v473
    %2247 = vmatprep.subr.bf16.mxu0 %v476
    %2248 = vmatpush1.bf16.msra.mxu0 %v475
    %2249 = vmatprep.subr.bf16.mxu0 %v478
    %2250 = vmatpush1.bf16.msra.mxu0 %v477
    %2251 = vmatprep.subr.bf16.mxu0 %v480
    %2252 = vmatpush1.bf16.msra.mxu0 %v479
    %2253 = vmatprep.subr.bf16.mxu0 %v482
    %2254 = vmatpush1.bf16.msra.mxu0 %v481
    %2255 = vmatprep.mubr.bf16.mxu0 %v2222
    %2256 = vmatmul.mubr.bf16.gmra.mrb[0].mxu0 %v2221
    %v2257 = vpop.f32.mrb[0].mxu0
    %v2258 = vadd.f32 %v348, %v2257
    %v2259 = vpop.f32.mrb[0].mxu0
    %v2260 = vadd.f32 %v352, %v2259
    %v2261 = vpop.f32.mrb[0].mxu0
    %v2262 = vpop.f32.mrb[0].mxu0
    %2263 = vdwg.mxu0
    %v2264 = vmul.f32 %v2258, 1.442695
    %v2265 = vpow.pop %v2264
    %v2266 = vmul.f32 %v2260, 1.442695
    %v2267 = vpow.pop %v2266
    %v2268 = vadd.f32 %v2265, 1.0
    %v2269 = vadd.f32 %v2267, 1.0
    %v2270 = vmul.f32 %v2268, %v2268
    %v2271 = vmul.f32 %v2269, %v2269
    %v2272 = vadd.f32 %v2270, 1.0
    %v2273 = vadd.f32 %v2271, 1.0
    %v2274 = vrcp.pop %v2272
    %v2275 = vrcp.pop %v2273
    %v2276 = vmul.f32 %v2274, 2.0
    %v2277 = vmul.f32 %v2275, 2.0
    %v2278 = vsub.f32 1.0, %v2276
    %v2279 = vsub.f32 1.0, %v2277
    %v2280 = vmul.f32 %v2258, %v2278
    %v2281 = vmul.f32 %v2260, %v2279
    %v2282 = vpack.c.bf16 %v2280, %v2280
    %v2283 = vpack.c.bf16 %v2281, %v2281
    %2284 = vmatprep.subr.bf16.mxu0 %v717
    %2285 = vmatpush1.bf16.msra.mxu0 %v716
    %2286 = vmatprep.subr.bf16.mxu0 %v719
    %2287 = vmatpush1.bf16.msra.mxu0 %v718
    %2288 = vmatprep.subr.bf16.mxu0 %v721
    %2289 = vmatpush1.bf16.msra.mxu0 %v720
    %2290 = vmatprep.subr.bf16.mxu0 %v723
    %2291 = vmatpush1.bf16.msra.mxu0 %v722
    %2292 = vmatprep.subr.bf16.mxu0 %v725
    %2293 = vmatpush1.bf16.msra.mxu0 %v724
    %2294 = vmatprep.subr.bf16.mxu0 %v727
    %2295 = vmatpush1.bf16.msra.mxu0 %v726
    %2296 = vmatprep.subr.bf16.mxu0 %v729
    %2297 = vmatpush1.bf16.msra.mxu0 %v728
    %2298 = vmatprep.subr.bf16.mxu0 %v731
    %2299 = vmatpush1.bf16.msra.mxu0 %v730
    %2300 = vmatprep.subr.bf16.mxu0 %v733
    %2301 = vmatpush1.bf16.msra.mxu0 %v732
    %2302 = vmatprep.subr.bf16.mxu0 %v735
    %2303 = vmatpush1.bf16.msra.mxu0 %v734
    %2304 = vmatprep.subr.bf16.mxu0 %v737
    %2305 = vmatpush1.bf16.msra.mxu0 %v736
    %2306 = vmatprep.subr.bf16.mxu0 %v739
    %2307 = vmatpush1.bf16.msra.mxu0 %v738
    %2308 = vmatprep.subr.bf16.mxu0 %v741
    %2309 = vmatpush1.bf16.msra.mxu0 %v740
    %2310 = vmatprep.subr.bf16.mxu0 %v743
    %2311 = vmatpush1.bf16.msra.mxu0 %v742
    %2312 = vmatprep.subr.bf16.mxu0 %v745
    %2313 = vmatpush1.bf16.msra.mxu0 %v744
    %2314 = vmatprep.subr.bf16.mxu0 %v747
    %2315 = vmatpush1.bf16.msra.mxu0 %v746
    %2316 = vmatprep.mubr.bf16.mxu0 %v2283
    %2317 = vmatmul.mubr.bf16.gmra.mrb[0].mxu0 %v2282
    %v2318 = vpop.f32.mrb[0].mxu0
    %v2319 = vadd.f32 %v613, %v2318
    %v2320 = vpop.f32.mrb[0].mxu0
    %v2321 = vadd.f32 %v617, %v2320
    %v2322 = vpop.f32.mrb[0].mxu0
    %v2323 = vpop.f32.mrb[0].mxu0
    %2324 = vdwg.mxu0
    %v2325 = vmul.f32 %v2319, 1.442695
    %v2326 = vpow.pop %v2325
    %v2327 = vmul.f32 %v2321, 1.442695
    %v2328 = vpow.pop %v2327
    %v2329 = vadd.f32 %v2326, 1.0
    %v2330 = vadd.f32 %v2328, 1.0
    %v2331 = vmul.f32 %v2329, %v2329
    %v2332 = vmul.f32 %v2330, %v2330
    %v2333 = vadd.f32 %v2331, 1.0
    %v2334 = vadd.f32 %v2332, 1.0
    %v2335 = vrcp.pop %v2333
    %v2336 = vrcp.pop %v2334
    %v2337 = vmul.f32 %v2335, 2.0
    %v2338 = vmul.f32 %v2336, 2.0
    %v2339 = vsub.f32 1.0, %v2337
    %v2340 = vsub.f32 1.0, %v2338
    %v2341 = vmul.f32 %v2319, %v2339
    %v2342 = vmul.f32 %v2321, %v2340
    %v2343 = vpack.c.bf16 %v2341, %v2341
    %v2344 = vpack.c.bf16 %v2342, %v2342
    %2345 = vmatprep.subr.bf16.mxu0 0
    %2346 = vmatpush1.bf16.msra.mxu0 %v944
    %2347 = vmatprep.subr.bf16.mxu0 0
    %2348 = vmatpush1.bf16.msra.mxu0 %v945
    %2349 = vmatprep.subr.bf16.mxu0 0
    %2350 = vmatpush1.bf16.msra.mxu0 %v946
    %2351 = vmatprep.subr.bf16.mxu0 0
    %2352 = vmatpush1.bf16.msra.mxu0 %v947
    %2353 = vmatprep.subr.bf16.mxu0 0
    %2354 = vmatpush1.bf16.msra.mxu0 %v948
    %2355 = vmatprep.subr.bf16.mxu0 0
    %2356 = vmatpush1.bf16.msra.mxu0 %v949
    %2357 = vmatprep.subr.bf16.mxu0 0
    %2358 = vmatpush1.bf16.msra.mxu0 %v950
    %2359 = vmatprep.subr.bf16.mxu0 0
    %2360 = vmatpush1.bf16.msra.mxu0 %v951
    %2361 = vmatprep.subr.bf16.mxu0 0
    %2362 = vmatpush1.bf16.msra.mxu0 %v952
    %2363 = vmatprep.subr.bf16.mxu0 0
    %2364 = vmatpush1.bf16.msra.mxu0 %v953
    %2365 = vmatprep.subr.bf16.mxu0 0
    %2366 = vmatpush1.bf16.msra.mxu0 %v954
    %2367 = vmatprep.subr.bf16.mxu0 0
    %2368 = vmatpush1.bf16.msra.mxu0 %v955
    %2369 = vmatprep.subr.bf16.mxu0 0
    %2370 = vmatpush1.bf16.msra.mxu0 %v956
    %2371 = vmatprep.subr.bf16.mxu0 0
    %2372 = vmatpush1.bf16.msra.mxu0 %v957
    %2373 = vmatprep.subr.bf16.mxu0 0
    %2374 = vmatpush1.bf16.msra.mxu0 %v958
    %2375 = vmatprep.subr.bf16.mxu0 0
    %2376 = vmatpush1.bf16.msra.mxu0 %v959
    %2377 = vmatprep.mubr.bf16.mxu0 %v2344
    %2378 = vmatmul.mubr.bf16.gmra.mrb[0].mxu0 %v2343
    %v2379 = vpop.f32.mrb[0].mxu0
    %v2380 = vadd.f32 %v878, %v2379
    %v2381 = vpop.f32.mrb[0].mxu0
    %v2382 = vpop.f32.mrb[0].mxu0
    %v2383 = vpop.f32.mrb[0].mxu0
    %2384 = vdwg.mxu0
    %v2385 = vmul.f32 %v2122, 1.0801321
    %v2386 = vmul.f32 %v2380, 0.40827113
    %v2387 = vsub.f32 %v2385, %v2386
    %v2388 = vmax.f32 %v2387, -1.0
    %v2389 = vmin.f32 %v2388, 1.0
    %v2390 = vmul.f32 %v2122, 0.0
    %v2391 = vadd.f32 %v2389, %v2390
    %v2392 = vmax.f32 %v2391, -1.0
    %v2393 = vmin.f32 %v2392, 1.0
    %vm2394 = vcmask 64512
    %2395 = vst.msk [vmem:[#allocation7] sm:$0xff] %vm2394, %v2393
    // Predicated region
    $region62: #{tpu_custom_call.1} parent=1 // pred_check
      _
    $region63: #{tpu_custom_call.1} parent=1 // pred_check_branch
      %2397 = sbr.rel (0) target = $region65
    $region64: #{tpu_custom_call.1} parent=1 // pred_region
      %s2399 = ssub.s32 128, 128
      %2400 = vsyncadd [#allocation4], %s2399
      %s2402 = sshll.u32 [#allocation7], 4
      %s2403 = int_to_ptr.vmem [resolvable:$true] %s2402
      %2405 = dma.vmem_to_hbm [thread:$0]  %s2403, 128, %s13, [#allocation4]
    $region65: #{tpu_custom_call.1} parent=1 // pred_fallthru
      _
    // Predicated region
    $region66: #{tpu_custom_call.1} parent=1 // pred_check
      _
    $region67: #{tpu_custom_call.1} parent=1 // pred_check_branch
      %2407 = sbr.rel (0) target = $region69
    $region68: #{tpu_custom_call.1} parent=1 // pred_region
      %2408 = dma.done [#allocation4], 128
    $region69: #{tpu_custom_call.1} parent=1 // pred_fallthru
      _
    %2409 = vsyncpa [#allocation3], 1
    %2410 = vsyncpa [#allocation6], 1
    %2411 = vsyncpa [#allocation4], 1

</llo_original>
